<compile_context>
chip_gen: v7x
topology: tpu7x:2x2x1
jax: 0.10.0
libtpu: 0.0.40
codegen_flags: <defaults>
</compile_context>

<pallas_src>
import functools

import jax
import jax.numpy as jnp
from jax.experimental import pallas as pl
from jax.experimental.pallas import tpu as pltpu

# Unit order inside the stacked parameter arrays.
_PRE, _TR0, _TR1, _SD1, _SC, _SD2, _SU2, _SU3, _LAST = range(9)
_NUM_UNITS = 9
_SIG_BASE = 4 * _NUM_UNITS          # first vecs column of the sigmoid block
_EPS = 1e-5
_NEG = -1.0e30                       # finite "-inf" pad for max-pool


# ----------------------------------------------------------------------------
# Shared math: forward pass on a channels-on-sublanes activation of shape
# (C, G*L) -- G examples stacked along the lane axis.  The parameter objects
# may be VMEM Refs (kernel path: static slices -> lazy small loads right before
# each matmul) or plain arrays (pure-JAX reference path); the indexing code is
# identical for both.
#   w3   : (9, C, 3C)  first k=3 conv of each unit, laid out (Cout, 3*Cin)
#   w4   : (9, C, 4C)  second k=3 conv with the 1x1 shortcut fused in
#   wsig : (2, C, C)   sigmoid-block 1x1 convs
#   vecs : (C, 42)     folded BN scale/shift columns + sigmoid conv biases
# ----------------------------------------------------------------------------
def _forward_math(h, w3, w4, wsig, vecs, *, G, L):
    f32 = jnp.float32
    C = h.shape[0]
    L1, L2 = L // 2, L // 4

    # Hoisted constant pad columns (JAX does not CSE broadcast_in_dim).
    zcol = jnp.zeros((C, 1), f32)
    ncol = jnp.full((C, 1), _NEG, f32)

    def shifted(a, pad_col, pad_val, Lc):
        """Per-example left/right neighbours of a (C, G*Lc) stacked activation."""
        p = jnp.concatenate([pad_col, a[:, :-1]], axis=1)
        n = jnp.concatenate([a[:, 1:], pad_col], axis=1)
        if G > 1:  # mask example boundaries inside the stacked lane axis
            col = jax.lax.broadcasted_iota(jnp.int32, (1, a.shape[1]), 1)
            p = jnp.where(col % Lc == 0, pad_val, p)
            n = jnp.where(col % Lc == Lc - 1, pad_val, n)
        return p, n

    def bnrelu(a, ui, k):
        c = 4 * ui + 2 * k
        return jnp.maximum(a * vecs[:, c:c + 1] + vecs[:, c + 1:c + 2], 0.0)

    def preact(a, ui, Lc):
        # PreActResidualUnit(stride=1): (BN-ReLU-Conv3) x2 + learned 1x1 conv
        # shortcut.  The shortcut is fused into the SECOND conv3: operand
        # [r_prev; r; r_next; a] against the pre-concatenated (C, 4C) weight,
        # so the unit costs exactly two MXU matmuls.
        r = bnrelu(a, ui, 0)
        rp, rn = shifted(r, zcol, 0.0, Lc)
        r = jnp.dot(w3[ui], jnp.concatenate([rp, r, rn], axis=0),
                    preferred_element_type=f32)
        r = bnrelu(r, ui, 1)
        rp, rn = shifted(r, zcol, 0.0, Lc)
        return jnp.dot(w4[ui], jnp.concatenate([rp, r, rn, a], axis=0),
                       preferred_element_type=f32)

    def maxpool(a, Lc):
        # max_pool1d(k=3, s=2, p=1): windowed max on the VPU, then a stride-2
        # lane pick done with static column slices + one concat (no MXU work).
        p, n = shifted(a, ncol, _NEG, Lc)
        m = jnp.maximum(jnp.maximum(p, a), n)
        return jnp.concatenate(
            [m[:, 2 * r:2 * r + 1] for r in range(a.shape[1] // 2)], axis=1)

    def upsample2x(a):
        # F.interpolate(mode='nearest', 2x): repeat every column twice.
        cols = []
        for i in range(a.shape[1]):
            c = a[:, i:i + 1]
            cols.append(c)
            cols.append(c)
        return jnp.concatenate(cols, axis=1)

    h = h.astype(f32)
    hp = preact(h, _PRE, L)                        # pre
    ht = preact(preact(hp, _TR0, L), _TR1, L)      # trunk branch

    s = maxpool(hp, L)                             # soft-mask branch, L -> L/2
    s = preact(s, _SD1, L1)
    shortcut = preact(s, _SC, L1)
    s = maxpool(s, L1)                             # L/2 -> L/4
    s = preact(s, _SD2, L2)
    s = preact(s, _SU2, L2)
    s = upsample2x(s) + shortcut                   # L/4 -> L/2
    s = preact(s, _SU3, L1)
    s = upsample2x(s)                              # L/2 -> L

    # sigmoid block: (BN-ReLU-Conv1x1+bias) x2 -> sigmoid
    for j in range(2):
        c = _SIG_BASE + 3 * j
        s = jnp.maximum(s * vecs[:, c:c + 1] + vecs[:, c + 1:c + 2], 0.0)
        s = jnp.dot(wsig[j], s, preferred_element_type=f32) + vecs[:, c + 2:c + 3]
    s = jax.nn.sigmoid(s)

    # fused gate + (1 + s) * trunk modulation + last unit
    return preact((1.0 + s) * ht, _LAST, L)


# ----------------------------------------------------------------------------
# Pallas kernel + wrapper
# ----------------------------------------------------------------------------
def _attention_kernel(x_ref, w3_ref, w4_ref, wsig_ref, vecs_ref, o_ref, *, G, L):
    # Stack this grid step's G examples along the lane (length) axis: (C, G*L).
    if G == 1:
        h = x_ref[0]
    else:
        h = jnp.concatenate([x_ref[g] for g in range(G)], axis=1)
    out = _forward_math(h, w3_ref, w4_ref, wsig_ref, vecs_ref, G=G, L=L)
    out = out.astype(o_ref.dtype)
    for g in range(G):
        o_ref[g] = out[:, g * L:(g + 1) * L]


def _const_spec(a):
    nd = a.ndim
    return pl.BlockSpec(a.shape, lambda n, _nd=nd: (0,) * _nd)  # grid-invariant


def _tensorcores_per_chip():
    # Megacore-style chips (v4 / v5p / v7x) have 2 TensorCores that a
    # "parallel" grid axis is sharded across; v5e / v6e have 1.
    try:
        kind = jax.devices()[0].device_kind.lower()
    except Exception:
        return 1
    return 2 if ("v7" in kind or "v4" in kind or "v5p" in kind) else 1


def attention_module2(x, params, num_groups=None):
    """x: (N, C, L) float32 -> (N, C, L) float32 (same layout as PyTorch)."""
    N, C, L = x.shape
    assert L % 4 == 0, "soft-mask branch assumes both max-pools halve L exactly"
    if num_groups is None:
        # One grid step per TensorCore: single-TC chips fold the whole batch
        # into one step; multi-TC chips keep one parallel step per core.
        num_groups = max(1, min(N, _tensorcores_per_chip()))
    if N % num_groups != 0:
        num_groups = 1
    G = N // num_groups

    w3, w4, wsig, vecs = (params["w3"], params["w4"],
                          params["wsig"], params["vecs"])
    kernel = functools.partial(_attention_kernel, G=G, L=L)
    return pl.pallas_call(
        kernel,
        out_shape=jax.ShapeDtypeStruct((N, C, L), jnp.float32),
        grid=(num_groups,),
        in_specs=[pl.BlockSpec((G, C, L), lambda n: (n, 0, 0)),
                  _const_spec(w3), _const_spec(w4),
                  _const_spec(wsig), _const_spec(vecs)],
        out_specs=pl.BlockSpec((G, C, L), lambda n: (n, 0, 0)),
        compiler_params=pltpu.CompilerParams(dimension_semantics=("parallel",)),
    )(x, w3, w4, wsig, vecs)


# ----------------------------------------------------------------------------
# Deterministic synthetic parameters (packed layouts for the fused kernel)
# ----------------------------------------------------------------------------
def _bn_fold(key, C):
    k1, k2, k3, k4 = jax.random.split(key, 4)
    gamma = 1.0 + 0.1 * jax.random.normal(k1, (C,))
    beta = 0.1 * jax.random.normal(k2, (C,))
    mean = 0.1 * jax.random.normal(k3, (C,))
    var = 1.0 + 0.1 * jnp.abs(jax.random.normal(k4, (C,)))
    scale = gamma * jax.lax.rsqrt(var + _EPS)
    shift = beta - mean * scale
    return scale.astype(jnp.float32), shift.astype(jnp.float32)


def _conv3_w(key, C):
    # PyTorch Conv1d weight (Cout, Cin, 3) -> (Cout, 3*Cin) matching the
    # stacked [h[l-1]; h[l]; h[l+1]] operand row order.
    w_pt = 0.1 * jax.random.normal(key, (C, C, 3), jnp.float32)
    return jnp.transpose(w_pt, (0, 2, 1)).reshape(C, 3 * C)


def _conv1_w(key, C):
    w_pt = 0.1 * jax.random.normal(key, (C, C, 1), jnp.float32)
    return w_pt[:, :, 0]                                   # (Cout, Cin)


def init_params(key, C):
    keys = jax.random.split(key, _NUM_UNITS + 1)
    w3, w4, cols = [], [], []
    for uk in keys[:_NUM_UNITS]:
        k = jax.random.split(uk, 5)
        s1, b1 = _bn_fold(k[0], C)
        s2, b2 = _bn_fold(k[1], C)
        w3.append(_conv3_w(k[2], C))
        # second conv3 + 1x1 shortcut pre-concatenated -> one (C, 4C) matmul
        w4.append(jnp.concatenate([_conv3_w(k[3], C), _conv1_w(k[4], C)], axis=1))
        cols += [s1, b1, s2, b2]

    ks = jax.random.split(keys[-1], 6)
    sA, hA = _bn_fold(ks[0], C)
    sB, hB = _bn_fold(ks[1], C)
    wA, wB = _conv1_w(ks[2], C), _conv1_w(ks[4], C)
    bA = (0.1 * jax.random.normal(ks[3], (C,))).astype(jnp.float32)
    bB = (0.1 * jax.random.normal(ks[5], (C,))).astype(jnp.float32)
    cols += [sA, hA, bA, sB, hB, bB]

    return dict(w3=jnp.stack(w3),                    # (9, C, 3C)
                w4=jnp.stack(w4),                    # (9, C, 4C)
                wsig=jnp.stack([wA, wB]),            # (2, C, C)
                vecs=jnp.stack(cols, axis=1))        # (C, 42)


# ----------------------------------------------------------------------------
if __name__ == "__main__":
    key = jax.random.PRNGKey(0)
    kx, kp = jax.random.split(key)

    N, C, L = 2, 8, 16                                # (batch, channels, length)
    x = jax.random.normal(kx, (N, C, L), jnp.float32)
    P = init_params(kp, C)

    fwd = jax.jit(attention_module2)
    out = jax.block_until_ready(fwd(x, P))
    assert out.shape == (N, C, L), out.shape
    assert bool(jnp.all(jnp.isfinite(out)))

    # Pure-JAX per-example reference (identical math on un-stacked examples);
    # this also validates the in-kernel example-boundary masking used when the
    # batch is folded into one grid step.
    @jax.jit
    def reference(xb):
        return jnp.stack([
            _forward_math(xb[i], P["w3"], P["w4"], P["wsig"], P["vecs"], G=1, L=L)
            for i in range(xb.shape[0])])

    ref = jax.block_until_ready(reference(x))
    err = float(jnp.max(jnp.abs(out - ref)))
    assert err < 1e-4, f"max |pallas - ref| = {err}"

    print("KERNEL_OK")
</pallas_src>

<mosaic_0001>
module attributes {stable_mosaic.version = 11 : i64} {
  func.func @_attention_kernel(%arg0: i32, %arg1: memref<2x8x16xf32, #tpu.memory_space<vmem>>, %arg2: memref<9x8x24xf32, #tpu.memory_space<vmem>>, %arg3: memref<9x8x32xf32, #tpu.memory_space<vmem>>, %arg4: memref<2x8x8xf32, #tpu.memory_space<vmem>>, %arg5: memref<8x42xf32, #tpu.memory_space<vmem>>, %arg6: memref<2x8x16xf32, #tpu.memory_space<vmem>>) attributes {dimension_semantics = [#tpu.dimension_semantics<parallel>], iteration_bounds = array<i64: 1>, scalar_prefetch = 0 : i64, scratch_operands = 0 : i64, tpu.core_type = #tpu.core_type<tc>, window_params = [{transform_indices = @transform_0, window_bounds = array<i64: 2, 8, 16>}, {pipeline_mode = #tpu.pipeline_mode<synchronous>, transform_indices = @transform_1, window_bounds = array<i64: 9, 8, 24>}, {pipeline_mode = #tpu.pipeline_mode<synchronous>, transform_indices = @transform_2, window_bounds = array<i64: 9, 8, 32>}, {pipeline_mode = #tpu.pipeline_mode<synchronous>, transform_indices = @transform_3, window_bounds = array<i64: 2, 8, 8>}, {pipeline_mode = #tpu.pipeline_mode<synchronous>, transform_indices = @transform_4, window_bounds = array<i64: 8, 42>}, {transform_indices = @transform_5, window_bounds = array<i64: 2, 8, 16>}]} {
    %c0 = arith.constant 0 : index
    %c0_0 = arith.constant 0 : index
    %c0_1 = arith.constant 0 : index
    %0 = vector.load %arg1[%c0, %c0_0, %c0_1] : memref<2x8x16xf32, #tpu.memory_space<vmem>>, vector<1x8x16xf32>
    %1 = vector.shape_cast %0 : vector<1x8x16xf32> to vector<8x16xf32>
    %c1 = arith.constant 1 : index
    %c0_2 = arith.constant 0 : index
    %c0_3 = arith.constant 0 : index
    %2 = vector.load %arg1[%c1, %c0_2, %c0_3] : memref<2x8x16xf32, #tpu.memory_space<vmem>>, vector<1x8x16xf32>
    %3 = vector.shape_cast %2 : vector<1x8x16xf32> to vector<8x16xf32>
    %4 = tpu.concatenate %1, %3 in 1 : vector<8x16xf32>, vector<8x16xf32> -> vector<8x32xf32>
    %cst = arith.constant 0.000000e+00 : f32
    %5 = vector.broadcast %cst : f32 to vector<8x1xf32>
    %cst_4 = arith.constant -1.000000e+30 : f32
    %6 = vector.broadcast %cst_4 : f32 to vector<8x1xf32>
    %c0_5 = arith.constant 0 : index
    %c0_6 = arith.constant 0 : index
    %7 = vector.load %arg5[%c0_5, %c0_6] : memref<8x42xf32, #tpu.memory_space<vmem>>, vector<8x1xf32>
    %8 = vector.broadcast %7 : vector<8x1xf32> to vector<8x32xf32>
    %9 = arith.mulf %4, %8 : vector<8x32xf32>
    %c0_7 = arith.constant 0 : index
    %c1_8 = arith.constant 1 : index
    %10 = vector.load %arg5[%c0_7, %c1_8] : memref<8x42xf32, #tpu.memory_space<vmem>>, vector<8x1xf32>
    %11 = vector.broadcast %10 : vector<8x1xf32> to vector<8x32xf32>
    %12 = arith.addf %9, %11 : vector<8x32xf32>
    %cst_9 = arith.constant 0.000000e+00 : f32
    %13 = vector.broadcast %cst_9 : f32 to vector<8x32xf32>
    %14 = arith.maximumf %12, %13 : vector<8x32xf32>
    %15 = vector.extract_strided_slice %14 {offsets = [0, 0], sizes = [8, 31], strides = [1, 1]} : vector<8x32xf32> to vector<8x31xf32>
    %16 = tpu.concatenate %5, %15 in 1 : vector<8x1xf32>, vector<8x31xf32> -> vector<8x32xf32>
    %17 = vector.extract_strided_slice %14 {offsets = [0, 1], sizes = [8, 31], strides = [1, 1]} : vector<8x32xf32> to vector<8x31xf32>
    %18 = tpu.concatenate %17, %5 in 1 : vector<8x31xf32>, vector<8x1xf32> -> vector<8x32xf32>
    %19 = tpu.iota {dimensions = array<i32: 1>} : vector<1x32xi32>
    %c16_i32 = arith.constant 16 : i32
    %c0_i32 = arith.constant 0 : i32
    %20 = arith.cmpi eq, %c16_i32, %c0_i32 : i32
    %c1_i32 = arith.constant 1 : i32
    %21 = arith.select %20, %c1_i32, %c16_i32 : i32
    %22 = vector.broadcast %21 : i32 to vector<1x32xi32>
    %23 = arith.remsi %19, %22 : vector<1x32xi32>
    %c0_i32_10 = arith.constant 0 : i32
    %24 = vector.broadcast %c0_i32_10 : i32 to vector<1x32xi32>
    %25 = arith.cmpi ne, %23, %24 : vector<1x32xi32>
    %c0_i32_11 = arith.constant 0 : i32
    %26 = vector.broadcast %c0_i32_11 : i32 to vector<1x32xi32>
    %27 = arith.cmpi slt, %23, %26 : vector<1x32xi32>
    %c0_i32_12 = arith.constant 0 : i32
    %28 = arith.cmpi slt, %21, %c0_i32_12 : i32
    %29 = vector.broadcast %28 : i1 to vector<1x32xi1>
    %30 = vector.broadcast %29 : vector<1x32xi1> to vector<1x32xi1>
    %31 = arith.xori %27, %30 : vector<1x32xi1>
    %32 = arith.andi %31, %25 : vector<1x32xi1>
    %33 = vector.broadcast %21 : i32 to vector<1x32xi32>
    %34 = arith.addi %23, %33 : vector<1x32xi32>
    %35 = arith.select %32, %34, %23 : vector<1x32xi1>, vector<1x32xi32>
    %c0_i32_13 = arith.constant 0 : i32
    %36 = vector.broadcast %c0_i32_13 : i32 to vector<1x32xi32>
    %37 = arith.cmpi eq, %35, %36 : vector<1x32xi32>
    %cst_14 = arith.constant 0.000000e+00 : f32
    %38 = vector.shape_cast %37 : vector<1x32xi1> to vector<1x32xi1>
    %39 = vector.broadcast %38 : vector<1x32xi1> to vector<8x32xi1>
    %40 = vector.broadcast %cst_14 : f32 to vector<8x32xf32>
    %41 = arith.select %39, %40, %16 : vector<8x32xi1>, vector<8x32xf32>
    %c16_i32_15 = arith.constant 16 : i32
    %c0_i32_16 = arith.constant 0 : i32
    %42 = arith.cmpi eq, %c16_i32_15, %c0_i32_16 : i32
    %c1_i32_17 = arith.constant 1 : i32
    %43 = arith.select %42, %c1_i32_17, %c16_i32_15 : i32
    %44 = vector.broadcast %43 : i32 to vector<1x32xi32>
    %45 = arith.remsi %19, %44 : vector<1x32xi32>
    %c0_i32_18 = arith.constant 0 : i32
    %46 = vector.broadcast %c0_i32_18 : i32 to vector<1x32xi32>
    %47 = arith.cmpi ne, %45, %46 : vector<1x32xi32>
    %c0_i32_19 = arith.constant 0 : i32
    %48 = vector.broadcast %c0_i32_19 : i32 to vector<1x32xi32>
    %49 = arith.cmpi slt, %45, %48 : vector<1x32xi32>
    %c0_i32_20 = arith.constant 0 : i32
    %50 = arith.cmpi slt, %43, %c0_i32_20 : i32
    %51 = vector.broadcast %50 : i1 to vector<1x32xi1>
    %52 = vector.broadcast %51 : vector<1x32xi1> to vector<1x32xi1>
    %53 = arith.xori %49, %52 : vector<1x32xi1>
    %54 = arith.andi %53, %47 : vector<1x32xi1>
    %55 = vector.broadcast %43 : i32 to vector<1x32xi32>
    %56 = arith.addi %45, %55 : vector<1x32xi32>
    %57 = arith.select %54, %56, %45 : vector<1x32xi1>, vector<1x32xi32>
    %c15_i32 = arith.constant 15 : i32
    %58 = vector.broadcast %c15_i32 : i32 to vector<1x32xi32>
    %59 = arith.cmpi eq, %57, %58 : vector<1x32xi32>
    %cst_21 = arith.constant 0.000000e+00 : f32
    %60 = vector.shape_cast %59 : vector<1x32xi1> to vector<1x32xi1>
    %61 = vector.broadcast %60 : vector<1x32xi1> to vector<8x32xi1>
    %62 = vector.broadcast %cst_21 : f32 to vector<8x32xf32>
    %63 = arith.select %61, %62, %18 : vector<8x32xi1>, vector<8x32xf32>
    %c0_22 = arith.constant 0 : index
    %c0_23 = arith.constant 0 : index
    %c0_24 = arith.constant 0 : index
    %64 = vector.load %arg2[%c0_22, %c0_23, %c0_24] : memref<9x8x24xf32, #tpu.memory_space<vmem>>, vector<1x8x24xf32>
    %65 = vector.shape_cast %64 : vector<1x8x24xf32> to vector<8x24xf32>
    %66 = tpu.concatenate %41, %14, %63 in 0 : vector<8x32xf32>, vector<8x32xf32>, vector<8x32xf32> -> vector<24x32xf32>
    %cst_25 = arith.constant dense<0.000000e+00> : vector<8x32xf32>
    %67 = tpu.matmul %65, %66, %cst_25 {dimension_numbers = #tpu.dot_dimension_numbers<[1], [0], [0], [1], [0, 0, 1, 1], [], []>} : vector<8x24xf32>, vector<24x32xf32>, vector<8x32xf32> -> vector<8x32xf32>
    %c0_26 = arith.constant 0 : index
    %c2 = arith.constant 2 : index
    %68 = vector.load %arg5[%c0_26, %c2] : memref<8x42xf32, #tpu.memory_space<vmem>>, vector<8x1xf32>
    %69 = vector.broadcast %68 : vector<8x1xf32> to vector<8x32xf32>
    %70 = arith.mulf %67, %69 : vector<8x32xf32>
    %c0_27 = arith.constant 0 : index
    %c3 = arith.constant 3 : index
    %71 = vector.load %arg5[%c0_27, %c3] : memref<8x42xf32, #tpu.memory_space<vmem>>, vector<8x1xf32>
    %72 = vector.broadcast %71 : vector<8x1xf32> to vector<8x32xf32>
    %73 = arith.addf %70, %72 : vector<8x32xf32>
    %cst_28 = arith.constant 0.000000e+00 : f32
    %74 = vector.broadcast %cst_28 : f32 to vector<8x32xf32>
    %75 = arith.maximumf %73, %74 : vector<8x32xf32>
    %76 = vector.extract_strided_slice %75 {offsets = [0, 0], sizes = [8, 31], strides = [1, 1]} : vector<8x32xf32> to vector<8x31xf32>
    %77 = tpu.concatenate %5, %76 in 1 : vector<8x1xf32>, vector<8x31xf32> -> vector<8x32xf32>
    %78 = vector.extract_strided_slice %75 {offsets = [0, 1], sizes = [8, 31], strides = [1, 1]} : vector<8x32xf32> to vector<8x31xf32>
    %79 = tpu.concatenate %78, %5 in 1 : vector<8x31xf32>, vector<8x1xf32> -> vector<8x32xf32>
    %80 = tpu.iota {dimensions = array<i32: 1>} : vector<1x32xi32>
    %c16_i32_29 = arith.constant 16 : i32
    %c0_i32_30 = arith.constant 0 : i32
    %81 = arith.cmpi eq, %c16_i32_29, %c0_i32_30 : i32
    %c1_i32_31 = arith.constant 1 : i32
    %82 = arith.select %81, %c1_i32_31, %c16_i32_29 : i32
    %83 = vector.broadcast %82 : i32 to vector<1x32xi32>
    %84 = arith.remsi %80, %83 : vector<1x32xi32>
    %c0_i32_32 = arith.constant 0 : i32
    %85 = vector.broadcast %c0_i32_32 : i32 to vector<1x32xi32>
    %86 = arith.cmpi ne, %84, %85 : vector<1x32xi32>
    %c0_i32_33 = arith.constant 0 : i32
    %87 = vector.broadcast %c0_i32_33 : i32 to vector<1x32xi32>
    %88 = arith.cmpi slt, %84, %87 : vector<1x32xi32>
    %c0_i32_34 = arith.constant 0 : i32
    %89 = arith.cmpi slt, %82, %c0_i32_34 : i32
    %90 = vector.broadcast %89 : i1 to vector<1x32xi1>
    %91 = vector.broadcast %90 : vector<1x32xi1> to vector<1x32xi1>
    %92 = arith.xori %88, %91 : vector<1x32xi1>
    %93 = arith.andi %92, %86 : vector<1x32xi1>
    %94 = vector.broadcast %82 : i32 to vector<1x32xi32>
    %95 = arith.addi %84, %94 : vector<1x32xi32>
    %96 = arith.select %93, %95, %84 : vector<1x32xi1>, vector<1x32xi32>
    %c0_i32_35 = arith.constant 0 : i32
    %97 = vector.broadcast %c0_i32_35 : i32 to vector<1x32xi32>
    %98 = arith.cmpi eq, %96, %97 : vector<1x32xi32>
    %cst_36 = arith.constant 0.000000e+00 : f32
    %99 = vector.shape_cast %98 : vector<1x32xi1> to vector<1x32xi1>
    %100 = vector.broadcast %99 : vector<1x32xi1> to vector<8x32xi1>
    %101 = vector.broadcast %cst_36 : f32 to vector<8x32xf32>
    %102 = arith.select %100, %101, %77 : vector<8x32xi1>, vector<8x32xf32>
    %c16_i32_37 = arith.constant 16 : i32
    %c0_i32_38 = arith.constant 0 : i32
    %103 = arith.cmpi eq, %c16_i32_37, %c0_i32_38 : i32
    %c1_i32_39 = arith.constant 1 : i32
    %104 = arith.select %103, %c1_i32_39, %c16_i32_37 : i32
    %105 = vector.broadcast %104 : i32 to vector<1x32xi32>
    %106 = arith.remsi %80, %105 : vector<1x32xi32>
    %c0_i32_40 = arith.constant 0 : i32
    %107 = vector.broadcast %c0_i32_40 : i32 to vector<1x32xi32>
    %108 = arith.cmpi ne, %106, %107 : vector<1x32xi32>
    %c0_i32_41 = arith.constant 0 : i32
    %109 = vector.broadcast %c0_i32_41 : i32 to vector<1x32xi32>
    %110 = arith.cmpi slt, %106, %109 : vector<1x32xi32>
    %c0_i32_42 = arith.constant 0 : i32
    %111 = arith.cmpi slt, %104, %c0_i32_42 : i32
    %112 = vector.broadcast %111 : i1 to vector<1x32xi1>
    %113 = vector.broadcast %112 : vector<1x32xi1> to vector<1x32xi1>
    %114 = arith.xori %110, %113 : vector<1x32xi1>
    %115 = arith.andi %114, %108 : vector<1x32xi1>
    %116 = vector.broadcast %104 : i32 to vector<1x32xi32>
    %117 = arith.addi %106, %116 : vector<1x32xi32>
    %118 = arith.select %115, %117, %106 : vector<1x32xi1>, vector<1x32xi32>
    %c15_i32_43 = arith.constant 15 : i32
    %119 = vector.broadcast %c15_i32_43 : i32 to vector<1x32xi32>
    %120 = arith.cmpi eq, %118, %119 : vector<1x32xi32>
    %cst_44 = arith.constant 0.000000e+00 : f32
    %121 = vector.shape_cast %120 : vector<1x32xi1> to vector<1x32xi1>
    %122 = vector.broadcast %121 : vector<1x32xi1> to vector<8x32xi1>
    %123 = vector.broadcast %cst_44 : f32 to vector<8x32xf32>
    %124 = arith.select %122, %123, %79 : vector<8x32xi1>, vector<8x32xf32>
    %c0_45 = arith.constant 0 : index
    %c0_46 = arith.constant 0 : index
    %c0_47 = arith.constant 0 : index
    %125 = vector.load %arg3[%c0_45, %c0_46, %c0_47] : memref<9x8x32xf32, #tpu.memory_space<vmem>>, vector<1x8x32xf32>
    %126 = vector.shape_cast %125 : vector<1x8x32xf32> to vector<8x32xf32>
    %127 = tpu.concatenate %102, %75, %124, %4 in 0 : vector<8x32xf32>, vector<8x32xf32>, vector<8x32xf32>, vector<8x32xf32> -> vector<32x32xf32>
    %cst_48 = arith.constant dense<0.000000e+00> : vector<8x32xf32>
    %128 = tpu.matmul %126, %127, %cst_48 {dimension_numbers = #tpu.dot_dimension_numbers<[1], [0], [0], [1], [0, 0, 1, 1], [], []>} : vector<8x32xf32>, vector<32x32xf32>, vector<8x32xf32> -> vector<8x32xf32>
    %c0_49 = arith.constant 0 : index
    %c4 = arith.constant 4 : index
    %129 = vector.load %arg5[%c0_49, %c4] : memref<8x42xf32, #tpu.memory_space<vmem>>, vector<8x1xf32>
    %130 = vector.broadcast %129 : vector<8x1xf32> to vector<8x32xf32>
    %131 = arith.mulf %128, %130 : vector<8x32xf32>
    %c0_50 = arith.constant 0 : index
    %c5 = arith.constant 5 : index
    %132 = vector.load %arg5[%c0_50, %c5] : memref<8x42xf32, #tpu.memory_space<vmem>>, vector<8x1xf32>
    %133 = vector.broadcast %132 : vector<8x1xf32> to vector<8x32xf32>
    %134 = arith.addf %131, %133 : vector<8x32xf32>
    %cst_51 = arith.constant 0.000000e+00 : f32
    %135 = vector.broadcast %cst_51 : f32 to vector<8x32xf32>
    %136 = arith.maximumf %134, %135 : vector<8x32xf32>
    %137 = vector.extract_strided_slice %136 {offsets = [0, 0], sizes = [8, 31], strides = [1, 1]} : vector<8x32xf32> to vector<8x31xf32>
    %138 = tpu.concatenate %5, %137 in 1 : vector<8x1xf32>, vector<8x31xf32> -> vector<8x32xf32>
    %139 = vector.extract_strided_slice %136 {offsets = [0, 1], sizes = [8, 31], strides = [1, 1]} : vector<8x32xf32> to vector<8x31xf32>
    %140 = tpu.concatenate %139, %5 in 1 : vector<8x31xf32>, vector<8x1xf32> -> vector<8x32xf32>
    %141 = tpu.iota {dimensions = array<i32: 1>} : vector<1x32xi32>
    %c16_i32_52 = arith.constant 16 : i32
    %c0_i32_53 = arith.constant 0 : i32
    %142 = arith.cmpi eq, %c16_i32_52, %c0_i32_53 : i32
    %c1_i32_54 = arith.constant 1 : i32
    %143 = arith.select %142, %c1_i32_54, %c16_i32_52 : i32
    %144 = vector.broadcast %143 : i32 to vector<1x32xi32>
    %145 = arith.remsi %141, %144 : vector<1x32xi32>
    %c0_i32_55 = arith.constant 0 : i32
    %146 = vector.broadcast %c0_i32_55 : i32 to vector<1x32xi32>
    %147 = arith.cmpi ne, %145, %146 : vector<1x32xi32>
    %c0_i32_56 = arith.constant 0 : i32
    %148 = vector.broadcast %c0_i32_56 : i32 to vector<1x32xi32>
    %149 = arith.cmpi slt, %145, %148 : vector<1x32xi32>
    %c0_i32_57 = arith.constant 0 : i32
    %150 = arith.cmpi slt, %143, %c0_i32_57 : i32
    %151 = vector.broadcast %150 : i1 to vector<1x32xi1>
    %152 = vector.broadcast %151 : vector<1x32xi1> to vector<1x32xi1>
    %153 = arith.xori %149, %152 : vector<1x32xi1>
    %154 = arith.andi %153, %147 : vector<1x32xi1>
    %155 = vector.broadcast %143 : i32 to vector<1x32xi32>
    %156 = arith.addi %145, %155 : vector<1x32xi32>
    %157 = arith.select %154, %156, %145 : vector<1x32xi1>, vector<1x32xi32>
    %c0_i32_58 = arith.constant 0 : i32
    %158 = vector.broadcast %c0_i32_58 : i32 to vector<1x32xi32>
    %159 = arith.cmpi eq, %157, %158 : vector<1x32xi32>
    %cst_59 = arith.constant 0.000000e+00 : f32
    %160 = vector.shape_cast %159 : vector<1x32xi1> to vector<1x32xi1>
    %161 = vector.broadcast %160 : vector<1x32xi1> to vector<8x32xi1>
    %162 = vector.broadcast %cst_59 : f32 to vector<8x32xf32>
    %163 = arith.select %161, %162, %138 : vector<8x32xi1>, vector<8x32xf32>
    %c16_i32_60 = arith.constant 16 : i32
    %c0_i32_61 = arith.constant 0 : i32
    %164 = arith.cmpi eq, %c16_i32_60, %c0_i32_61 : i32
    %c1_i32_62 = arith.constant 1 : i32
    %165 = arith.select %164, %c1_i32_62, %c16_i32_60 : i32
    %166 = vector.broadcast %165 : i32 to vector<1x32xi32>
    %167 = arith.remsi %141, %166 : vector<1x32xi32>
    %c0_i32_63 = arith.constant 0 : i32
    %168 = vector.broadcast %c0_i32_63 : i32 to vector<1x32xi32>
    %169 = arith.cmpi ne, %167, %168 : vector<1x32xi32>
    %c0_i32_64 = arith.constant 0 : i32
    %170 = vector.broadcast %c0_i32_64 : i32 to vector<1x32xi32>
    %171 = arith.cmpi slt, %167, %170 : vector<1x32xi32>
    %c0_i32_65 = arith.constant 0 : i32
    %172 = arith.cmpi slt, %165, %c0_i32_65 : i32
    %173 = vector.broadcast %172 : i1 to vector<1x32xi1>
    %174 = vector.broadcast %173 : vector<1x32xi1> to vector<1x32xi1>
    %175 = arith.xori %171, %174 : vector<1x32xi1>
    %176 = arith.andi %175, %169 : vector<1x32xi1>
    %177 = vector.broadcast %165 : i32 to vector<1x32xi32>
    %178 = arith.addi %167, %177 : vector<1x32xi32>
    %179 = arith.select %176, %178, %167 : vector<1x32xi1>, vector<1x32xi32>
    %c15_i32_66 = arith.constant 15 : i32
    %180 = vector.broadcast %c15_i32_66 : i32 to vector<1x32xi32>
    %181 = arith.cmpi eq, %179, %180 : vector<1x32xi32>
    %cst_67 = arith.constant 0.000000e+00 : f32
    %182 = vector.shape_cast %181 : vector<1x32xi1> to vector<1x32xi1>
    %183 = vector.broadcast %182 : vector<1x32xi1> to vector<8x32xi1>
    %184 = vector.broadcast %cst_67 : f32 to vector<8x32xf32>
    %185 = arith.select %183, %184, %140 : vector<8x32xi1>, vector<8x32xf32>
    %c1_68 = arith.constant 1 : index
    %c0_69 = arith.constant 0 : index
    %c0_70 = arith.constant 0 : index
    %186 = vector.load %arg2[%c1_68, %c0_69, %c0_70] : memref<9x8x24xf32, #tpu.memory_space<vmem>>, vector<1x8x24xf32>
    %187 = vector.shape_cast %186 : vector<1x8x24xf32> to vector<8x24xf32>
    %188 = tpu.concatenate %163, %136, %185 in 0 : vector<8x32xf32>, vector<8x32xf32>, vector<8x32xf32> -> vector<24x32xf32>
    %cst_71 = arith.constant dense<0.000000e+00> : vector<8x32xf32>
    %189 = tpu.matmul %187, %188, %cst_71 {dimension_numbers = #tpu.dot_dimension_numbers<[1], [0], [0], [1], [0, 0, 1, 1], [], []>} : vector<8x24xf32>, vector<24x32xf32>, vector<8x32xf32> -> vector<8x32xf32>
    %c0_72 = arith.constant 0 : index
    %c6 = arith.constant 6 : index
    %190 = vector.load %arg5[%c0_72, %c6] : memref<8x42xf32, #tpu.memory_space<vmem>>, vector<8x1xf32>
    %191 = vector.broadcast %190 : vector<8x1xf32> to vector<8x32xf32>
    %192 = arith.mulf %189, %191 : vector<8x32xf32>
    %c0_73 = arith.constant 0 : index
    %c7 = arith.constant 7 : index
    %193 = vector.load %arg5[%c0_73, %c7] : memref<8x42xf32, #tpu.memory_space<vmem>>, vector<8x1xf32>
    %194 = vector.broadcast %193 : vector<8x1xf32> to vector<8x32xf32>
    %195 = arith.addf %192, %194 : vector<8x32xf32>
    %cst_74 = arith.constant 0.000000e+00 : f32
    %196 = vector.broadcast %cst_74 : f32 to vector<8x32xf32>
    %197 = arith.maximumf %195, %196 : vector<8x32xf32>
    %198 = vector.extract_strided_slice %197 {offsets = [0, 0], sizes = [8, 31], strides = [1, 1]} : vector<8x32xf32> to vector<8x31xf32>
    %199 = tpu.concatenate %5, %198 in 1 : vector<8x1xf32>, vector<8x31xf32> -> vector<8x32xf32>
    %200 = vector.extract_strided_slice %197 {offsets = [0, 1], sizes = [8, 31], strides = [1, 1]} : vector<8x32xf32> to vector<8x31xf32>
    %201 = tpu.concatenate %200, %5 in 1 : vector<8x31xf32>, vector<8x1xf32> -> vector<8x32xf32>
    %202 = tpu.iota {dimensions = array<i32: 1>} : vector<1x32xi32>
    %c16_i32_75 = arith.constant 16 : i32
    %c0_i32_76 = arith.constant 0 : i32
    %203 = arith.cmpi eq, %c16_i32_75, %c0_i32_76 : i32
    %c1_i32_77 = arith.constant 1 : i32
    %204 = arith.select %203, %c1_i32_77, %c16_i32_75 : i32
    %205 = vector.broadcast %204 : i32 to vector<1x32xi32>
    %206 = arith.remsi %202, %205 : vector<1x32xi32>
    %c0_i32_78 = arith.constant 0 : i32
    %207 = vector.broadcast %c0_i32_78 : i32 to vector<1x32xi32>
    %208 = arith.cmpi ne, %206, %207 : vector<1x32xi32>
    %c0_i32_79 = arith.constant 0 : i32
    %209 = vector.broadcast %c0_i32_79 : i32 to vector<1x32xi32>
    %210 = arith.cmpi slt, %206, %209 : vector<1x32xi32>
    %c0_i32_80 = arith.constant 0 : i32
    %211 = arith.cmpi slt, %204, %c0_i32_80 : i32
    %212 = vector.broadcast %211 : i1 to vector<1x32xi1>
    %213 = vector.broadcast %212 : vector<1x32xi1> to vector<1x32xi1>
    %214 = arith.xori %210, %213 : vector<1x32xi1>
    %215 = arith.andi %214, %208 : vector<1x32xi1>
    %216 = vector.broadcast %204 : i32 to vector<1x32xi32>
    %217 = arith.addi %206, %216 : vector<1x32xi32>
    %218 = arith.select %215, %217, %206 : vector<1x32xi1>, vector<1x32xi32>
    %c0_i32_81 = arith.constant 0 : i32
    %219 = vector.broadcast %c0_i32_81 : i32 to vector<1x32xi32>
    %220 = arith.cmpi eq, %218, %219 : vector<1x32xi32>
    %cst_82 = arith.constant 0.000000e+00 : f32
    %221 = vector.shape_cast %220 : vector<1x32xi1> to vector<1x32xi1>
    %222 = vector.broadcast %221 : vector<1x32xi1> to vector<8x32xi1>
    %223 = vector.broadcast %cst_82 : f32 to vector<8x32xf32>
    %224 = arith.select %222, %223, %199 : vector<8x32xi1>, vector<8x32xf32>
    %c16_i32_83 = arith.constant 16 : i32
    %c0_i32_84 = arith.constant 0 : i32
    %225 = arith.cmpi eq, %c16_i32_83, %c0_i32_84 : i32
    %c1_i32_85 = arith.constant 1 : i32
    %226 = arith.select %225, %c1_i32_85, %c16_i32_83 : i32
    %227 = vector.broadcast %226 : i32 to vector<1x32xi32>
    %228 = arith.remsi %202, %227 : vector<1x32xi32>
    %c0_i32_86 = arith.constant 0 : i32
    %229 = vector.broadcast %c0_i32_86 : i32 to vector<1x32xi32>
    %230 = arith.cmpi ne, %228, %229 : vector<1x32xi32>
    %c0_i32_87 = arith.constant 0 : i32
    %231 = vector.broadcast %c0_i32_87 : i32 to vector<1x32xi32>
    %232 = arith.cmpi slt, %228, %231 : vector<1x32xi32>
    %c0_i32_88 = arith.constant 0 : i32
    %233 = arith.cmpi slt, %226, %c0_i32_88 : i32
    %234 = vector.broadcast %233 : i1 to vector<1x32xi1>
    %235 = vector.broadcast %234 : vector<1x32xi1> to vector<1x32xi1>
    %236 = arith.xori %232, %235 : vector<1x32xi1>
    %237 = arith.andi %236, %230 : vector<1x32xi1>
    %238 = vector.broadcast %226 : i32 to vector<1x32xi32>
    %239 = arith.addi %228, %238 : vector<1x32xi32>
    %240 = arith.select %237, %239, %228 : vector<1x32xi1>, vector<1x32xi32>
    %c15_i32_89 = arith.constant 15 : i32
    %241 = vector.broadcast %c15_i32_89 : i32 to vector<1x32xi32>
    %242 = arith.cmpi eq, %240, %241 : vector<1x32xi32>
    %cst_90 = arith.constant 0.000000e+00 : f32
    %243 = vector.shape_cast %242 : vector<1x32xi1> to vector<1x32xi1>
    %244 = vector.broadcast %243 : vector<1x32xi1> to vector<8x32xi1>
    %245 = vector.broadcast %cst_90 : f32 to vector<8x32xf32>
    %246 = arith.select %244, %245, %201 : vector<8x32xi1>, vector<8x32xf32>
    %c1_91 = arith.constant 1 : index
    %c0_92 = arith.constant 0 : index
    %c0_93 = arith.constant 0 : index
    %247 = vector.load %arg3[%c1_91, %c0_92, %c0_93] : memref<9x8x32xf32, #tpu.memory_space<vmem>>, vector<1x8x32xf32>
    %248 = vector.shape_cast %247 : vector<1x8x32xf32> to vector<8x32xf32>
    %249 = tpu.concatenate %224, %197, %246, %128 in 0 : vector<8x32xf32>, vector<8x32xf32>, vector<8x32xf32>, vector<8x32xf32> -> vector<32x32xf32>
    %cst_94 = arith.constant dense<0.000000e+00> : vector<8x32xf32>
    %250 = tpu.matmul %248, %249, %cst_94 {dimension_numbers = #tpu.dot_dimension_numbers<[1], [0], [0], [1], [0, 0, 1, 1], [], []>} : vector<8x32xf32>, vector<32x32xf32>, vector<8x32xf32> -> vector<8x32xf32>
    %c0_95 = arith.constant 0 : index
    %c8 = arith.constant 8 : index
    %251 = vector.load %arg5[%c0_95, %c8] : memref<8x42xf32, #tpu.memory_space<vmem>>, vector<8x1xf32>
    %252 = vector.broadcast %251 : vector<8x1xf32> to vector<8x32xf32>
    %253 = arith.mulf %250, %252 : vector<8x32xf32>
    %c0_96 = arith.constant 0 : index
    %c9 = arith.constant 9 : index
    %254 = vector.load %arg5[%c0_96, %c9] : memref<8x42xf32, #tpu.memory_space<vmem>>, vector<8x1xf32>
    %255 = vector.broadcast %254 : vector<8x1xf32> to vector<8x32xf32>
    %256 = arith.addf %253, %255 : vector<8x32xf32>
    %cst_97 = arith.constant 0.000000e+00 : f32
    %257 = vector.broadcast %cst_97 : f32 to vector<8x32xf32>
    %258 = arith.maximumf %256, %257 : vector<8x32xf32>
    %259 = vector.extract_strided_slice %258 {offsets = [0, 0], sizes = [8, 31], strides = [1, 1]} : vector<8x32xf32> to vector<8x31xf32>
    %260 = tpu.concatenate %5, %259 in 1 : vector<8x1xf32>, vector<8x31xf32> -> vector<8x32xf32>
    %261 = vector.extract_strided_slice %258 {offsets = [0, 1], sizes = [8, 31], strides = [1, 1]} : vector<8x32xf32> to vector<8x31xf32>
    %262 = tpu.concatenate %261, %5 in 1 : vector<8x31xf32>, vector<8x1xf32> -> vector<8x32xf32>
    %263 = tpu.iota {dimensions = array<i32: 1>} : vector<1x32xi32>
    %c16_i32_98 = arith.constant 16 : i32
    %c0_i32_99 = arith.constant 0 : i32
    %264 = arith.cmpi eq, %c16_i32_98, %c0_i32_99 : i32
    %c1_i32_100 = arith.constant 1 : i32
    %265 = arith.select %264, %c1_i32_100, %c16_i32_98 : i32
    %266 = vector.broadcast %265 : i32 to vector<1x32xi32>
    %267 = arith.remsi %263, %266 : vector<1x32xi32>
    %c0_i32_101 = arith.constant 0 : i32
    %268 = vector.broadcast %c0_i32_101 : i32 to vector<1x32xi32>
    %269 = arith.cmpi ne, %267, %268 : vector<1x32xi32>
    %c0_i32_102 = arith.constant 0 : i32
    %270 = vector.broadcast %c0_i32_102 : i32 to vector<1x32xi32>
    %271 = arith.cmpi slt, %267, %270 : vector<1x32xi32>
    %c0_i32_103 = arith.constant 0 : i32
    %272 = arith.cmpi slt, %265, %c0_i32_103 : i32
    %273 = vector.broadcast %272 : i1 to vector<1x32xi1>
    %274 = vector.broadcast %273 : vector<1x32xi1> to vector<1x32xi1>
    %275 = arith.xori %271, %274 : vector<1x32xi1>
    %276 = arith.andi %275, %269 : vector<1x32xi1>
    %277 = vector.broadcast %265 : i32 to vector<1x32xi32>
    %278 = arith.addi %267, %277 : vector<1x32xi32>
    %279 = arith.select %276, %278, %267 : vector<1x32xi1>, vector<1x32xi32>
    %c0_i32_104 = arith.constant 0 : i32
    %280 = vector.broadcast %c0_i32_104 : i32 to vector<1x32xi32>
    %281 = arith.cmpi eq, %279, %280 : vector<1x32xi32>
    %cst_105 = arith.constant 0.000000e+00 : f32
    %282 = vector.shape_cast %281 : vector<1x32xi1> to vector<1x32xi1>
    %283 = vector.broadcast %282 : vector<1x32xi1> to vector<8x32xi1>
    %284 = vector.broadcast %cst_105 : f32 to vector<8x32xf32>
    %285 = arith.select %283, %284, %260 : vector<8x32xi1>, vector<8x32xf32>
    %c16_i32_106 = arith.constant 16 : i32
    %c0_i32_107 = arith.constant 0 : i32
    %286 = arith.cmpi eq, %c16_i32_106, %c0_i32_107 : i32
    %c1_i32_108 = arith.constant 1 : i32
    %287 = arith.select %286, %c1_i32_108, %c16_i32_106 : i32
    %288 = vector.broadcast %287 : i32 to vector<1x32xi32>
    %289 = arith.remsi %263, %288 : vector<1x32xi32>
    %c0_i32_109 = arith.constant 0 : i32
    %290 = vector.broadcast %c0_i32_109 : i32 to vector<1x32xi32>
    %291 = arith.cmpi ne, %289, %290 : vector<1x32xi32>
    %c0_i32_110 = arith.constant 0 : i32
    %292 = vector.broadcast %c0_i32_110 : i32 to vector<1x32xi32>
    %293 = arith.cmpi slt, %289, %292 : vector<1x32xi32>
    %c0_i32_111 = arith.constant 0 : i32
    %294 = arith.cmpi slt, %287, %c0_i32_111 : i32
    %295 = vector.broadcast %294 : i1 to vector<1x32xi1>
    %296 = vector.broadcast %295 : vector<1x32xi1> to vector<1x32xi1>
    %297 = arith.xori %293, %296 : vector<1x32xi1>
    %298 = arith.andi %297, %291 : vector<1x32xi1>
    %299 = vector.broadcast %287 : i32 to vector<1x32xi32>
    %300 = arith.addi %289, %299 : vector<1x32xi32>
    %301 = arith.select %298, %300, %289 : vector<1x32xi1>, vector<1x32xi32>
    %c15_i32_112 = arith.constant 15 : i32
    %302 = vector.broadcast %c15_i32_112 : i32 to vector<1x32xi32>
    %303 = arith.cmpi eq, %301, %302 : vector<1x32xi32>
    %cst_113 = arith.constant 0.000000e+00 : f32
    %304 = vector.shape_cast %303 : vector<1x32xi1> to vector<1x32xi1>
    %305 = vector.broadcast %304 : vector<1x32xi1> to vector<8x32xi1>
    %306 = vector.broadcast %cst_113 : f32 to vector<8x32xf32>
    %307 = arith.select %305, %306, %262 : vector<8x32xi1>, vector<8x32xf32>
    %c2_114 = arith.constant 2 : index
    %c0_115 = arith.constant 0 : index
    %c0_116 = arith.constant 0 : index
    %308 = vector.load %arg2[%c2_114, %c0_115, %c0_116] : memref<9x8x24xf32, #tpu.memory_space<vmem>>, vector<1x8x24xf32>
    %309 = vector.shape_cast %308 : vector<1x8x24xf32> to vector<8x24xf32>
    %310 = tpu.concatenate %285, %258, %307 in 0 : vector<8x32xf32>, vector<8x32xf32>, vector<8x32xf32> -> vector<24x32xf32>
    %cst_117 = arith.constant dense<0.000000e+00> : vector<8x32xf32>
    %311 = tpu.matmul %309, %310, %cst_117 {dimension_numbers = #tpu.dot_dimension_numbers<[1], [0], [0], [1], [0, 0, 1, 1], [], []>} : vector<8x24xf32>, vector<24x32xf32>, vector<8x32xf32> -> vector<8x32xf32>
    %c0_118 = arith.constant 0 : index
    %c10 = arith.constant 10 : index
    %312 = vector.load %arg5[%c0_118, %c10] : memref<8x42xf32, #tpu.memory_space<vmem>>, vector<8x1xf32>
    %313 = vector.broadcast %312 : vector<8x1xf32> to vector<8x32xf32>
    %314 = arith.mulf %311, %313 : vector<8x32xf32>
    %c0_119 = arith.constant 0 : index
    %c11 = arith.constant 11 : index
    %315 = vector.load %arg5[%c0_119, %c11] : memref<8x42xf32, #tpu.memory_space<vmem>>, vector<8x1xf32>
    %316 = vector.broadcast %315 : vector<8x1xf32> to vector<8x32xf32>
    %317 = arith.addf %314, %316 : vector<8x32xf32>
    %cst_120 = arith.constant 0.000000e+00 : f32
    %318 = vector.broadcast %cst_120 : f32 to vector<8x32xf32>
    %319 = arith.maximumf %317, %318 : vector<8x32xf32>
    %320 = vector.extract_strided_slice %319 {offsets = [0, 0], sizes = [8, 31], strides = [1, 1]} : vector<8x32xf32> to vector<8x31xf32>
    %321 = tpu.concatenate %5, %320 in 1 : vector<8x1xf32>, vector<8x31xf32> -> vector<8x32xf32>
    %322 = vector.extract_strided_slice %319 {offsets = [0, 1], sizes = [8, 31], strides = [1, 1]} : vector<8x32xf32> to vector<8x31xf32>
    %323 = tpu.concatenate %322, %5 in 1 : vector<8x31xf32>, vector<8x1xf32> -> vector<8x32xf32>
    %324 = tpu.iota {dimensions = array<i32: 1>} : vector<1x32xi32>
    %c16_i32_121 = arith.constant 16 : i32
    %c0_i32_122 = arith.constant 0 : i32
    %325 = arith.cmpi eq, %c16_i32_121, %c0_i32_122 : i32
    %c1_i32_123 = arith.constant 1 : i32
    %326 = arith.select %325, %c1_i32_123, %c16_i32_121 : i32
    %327 = vector.broadcast %326 : i32 to vector<1x32xi32>
    %328 = arith.remsi %324, %327 : vector<1x32xi32>
    %c0_i32_124 = arith.constant 0 : i32
    %329 = vector.broadcast %c0_i32_124 : i32 to vector<1x32xi32>
    %330 = arith.cmpi ne, %328, %329 : vector<1x32xi32>
    %c0_i32_125 = arith.constant 0 : i32
    %331 = vector.broadcast %c0_i32_125 : i32 to vector<1x32xi32>
    %332 = arith.cmpi slt, %328, %331 : vector<1x32xi32>
    %c0_i32_126 = arith.constant 0 : i32
    %333 = arith.cmpi slt, %326, %c0_i32_126 : i32
    %334 = vector.broadcast %333 : i1 to vector<1x32xi1>
    %335 = vector.broadcast %334 : vector<1x32xi1> to vector<1x32xi1>
    %336 = arith.xori %332, %335 : vector<1x32xi1>
    %337 = arith.andi %336, %330 : vector<1x32xi1>
    %338 = vector.broadcast %326 : i32 to vector<1x32xi32>
    %339 = arith.addi %328, %338 : vector<1x32xi32>
    %340 = arith.select %337, %339, %328 : vector<1x32xi1>, vector<1x32xi32>
    %c0_i32_127 = arith.constant 0 : i32
    %341 = vector.broadcast %c0_i32_127 : i32 to vector<1x32xi32>
    %342 = arith.cmpi eq, %340, %341 : vector<1x32xi32>
    %cst_128 = arith.constant 0.000000e+00 : f32
    %343 = vector.shape_cast %342 : vector<1x32xi1> to vector<1x32xi1>
    %344 = vector.broadcast %343 : vector<1x32xi1> to vector<8x32xi1>
    %345 = vector.broadcast %cst_128 : f32 to vector<8x32xf32>
    %346 = arith.select %344, %345, %321 : vector<8x32xi1>, vector<8x32xf32>
    %c16_i32_129 = arith.constant 16 : i32
    %c0_i32_130 = arith.constant 0 : i32
    %347 = arith.cmpi eq, %c16_i32_129, %c0_i32_130 : i32
    %c1_i32_131 = arith.constant 1 : i32
    %348 = arith.select %347, %c1_i32_131, %c16_i32_129 : i32
    %349 = vector.broadcast %348 : i32 to vector<1x32xi32>
    %350 = arith.remsi %324, %349 : vector<1x32xi32>
    %c0_i32_132 = arith.constant 0 : i32
    %351 = vector.broadcast %c0_i32_132 : i32 to vector<1x32xi32>
    %352 = arith.cmpi ne, %350, %351 : vector<1x32xi32>
    %c0_i32_133 = arith.constant 0 : i32
    %353 = vector.broadcast %c0_i32_133 : i32 to vector<1x32xi32>
    %354 = arith.cmpi slt, %350, %353 : vector<1x32xi32>
    %c0_i32_134 = arith.constant 0 : i32
    %355 = arith.cmpi slt, %348, %c0_i32_134 : i32
    %356 = vector.broadcast %355 : i1 to vector<1x32xi1>
    %357 = vector.broadcast %356 : vector<1x32xi1> to vector<1x32xi1>
    %358 = arith.xori %354, %357 : vector<1x32xi1>
    %359 = arith.andi %358, %352 : vector<1x32xi1>
    %360 = vector.broadcast %348 : i32 to vector<1x32xi32>
    %361 = arith.addi %350, %360 : vector<1x32xi32>
    %362 = arith.select %359, %361, %350 : vector<1x32xi1>, vector<1x32xi32>
    %c15_i32_135 = arith.constant 15 : i32
    %363 = vector.broadcast %c15_i32_135 : i32 to vector<1x32xi32>
    %364 = arith.cmpi eq, %362, %363 : vector<1x32xi32>
    %cst_136 = arith.constant 0.000000e+00 : f32
    %365 = vector.shape_cast %364 : vector<1x32xi1> to vector<1x32xi1>
    %366 = vector.broadcast %365 : vector<1x32xi1> to vector<8x32xi1>
    %367 = vector.broadcast %cst_136 : f32 to vector<8x32xf32>
    %368 = arith.select %366, %367, %323 : vector<8x32xi1>, vector<8x32xf32>
    %c2_137 = arith.constant 2 : index
    %c0_138 = arith.constant 0 : index
    %c0_139 = arith.constant 0 : index
    %369 = vector.load %arg3[%c2_137, %c0_138, %c0_139] : memref<9x8x32xf32, #tpu.memory_space<vmem>>, vector<1x8x32xf32>
    %370 = vector.shape_cast %369 : vector<1x8x32xf32> to vector<8x32xf32>
    %371 = tpu.concatenate %346, %319, %368, %250 in 0 : vector<8x32xf32>, vector<8x32xf32>, vector<8x32xf32>, vector<8x32xf32> -> vector<32x32xf32>
    %cst_140 = arith.constant dense<0.000000e+00> : vector<8x32xf32>
    %372 = tpu.matmul %370, %371, %cst_140 {dimension_numbers = #tpu.dot_dimension_numbers<[1], [0], [0], [1], [0, 0, 1, 1], [], []>} : vector<8x32xf32>, vector<32x32xf32>, vector<8x32xf32> -> vector<8x32xf32>
    %373 = vector.extract_strided_slice %128 {offsets = [0, 0], sizes = [8, 31], strides = [1, 1]} : vector<8x32xf32> to vector<8x31xf32>
    %374 = tpu.concatenate %6, %373 in 1 : vector<8x1xf32>, vector<8x31xf32> -> vector<8x32xf32>
    %375 = vector.extract_strided_slice %128 {offsets = [0, 1], sizes = [8, 31], strides = [1, 1]} : vector<8x32xf32> to vector<8x31xf32>
    %376 = tpu.concatenate %375, %6 in 1 : vector<8x31xf32>, vector<8x1xf32> -> vector<8x32xf32>
    %377 = tpu.iota {dimensions = array<i32: 1>} : vector<1x32xi32>
    %c16_i32_141 = arith.constant 16 : i32
    %c0_i32_142 = arith.constant 0 : i32
    %378 = arith.cmpi eq, %c16_i32_141, %c0_i32_142 : i32
    %c1_i32_143 = arith.constant 1 : i32
    %379 = arith.select %378, %c1_i32_143, %c16_i32_141 : i32
    %380 = vector.broadcast %379 : i32 to vector<1x32xi32>
    %381 = arith.remsi %377, %380 : vector<1x32xi32>
    %c0_i32_144 = arith.constant 0 : i32
    %382 = vector.broadcast %c0_i32_144 : i32 to vector<1x32xi32>
    %383 = arith.cmpi ne, %381, %382 : vector<1x32xi32>
    %c0_i32_145 = arith.constant 0 : i32
    %384 = vector.broadcast %c0_i32_145 : i32 to vector<1x32xi32>
    %385 = arith.cmpi slt, %381, %384 : vector<1x32xi32>
    %c0_i32_146 = arith.constant 0 : i32
    %386 = arith.cmpi slt, %379, %c0_i32_146 : i32
    %387 = vector.broadcast %386 : i1 to vector<1x32xi1>
    %388 = vector.broadcast %387 : vector<1x32xi1> to vector<1x32xi1>
    %389 = arith.xori %385, %388 : vector<1x32xi1>
    %390 = arith.andi %389, %383 : vector<1x32xi1>
    %391 = vector.broadcast %379 : i32 to vector<1x32xi32>
    %392 = arith.addi %381, %391 : vector<1x32xi32>
    %393 = arith.select %390, %392, %381 : vector<1x32xi1>, vector<1x32xi32>
    %c0_i32_147 = arith.constant 0 : i32
    %394 = vector.broadcast %c0_i32_147 : i32 to vector<1x32xi32>
    %395 = arith.cmpi eq, %393, %394 : vector<1x32xi32>
    %cst_148 = arith.constant -1.000000e+30 : f32
    %396 = vector.shape_cast %395 : vector<1x32xi1> to vector<1x32xi1>
    %397 = vector.broadcast %396 : vector<1x32xi1> to vector<8x32xi1>
    %398 = vector.broadcast %cst_148 : f32 to vector<8x32xf32>
    %399 = arith.select %397, %398, %374 : vector<8x32xi1>, vector<8x32xf32>
    %c16_i32_149 = arith.constant 16 : i32
    %c0_i32_150 = arith.constant 0 : i32
    %400 = arith.cmpi eq, %c16_i32_149, %c0_i32_150 : i32
    %c1_i32_151 = arith.constant 1 : i32
    %401 = arith.select %400, %c1_i32_151, %c16_i32_149 : i32
    %402 = vector.broadcast %401 : i32 to vector<1x32xi32>
    %403 = arith.remsi %377, %402 : vector<1x32xi32>
    %c0_i32_152 = arith.constant 0 : i32
    %404 = vector.broadcast %c0_i32_152 : i32 to vector<1x32xi32>
    %405 = arith.cmpi ne, %403, %404 : vector<1x32xi32>
    %c0_i32_153 = arith.constant 0 : i32
    %406 = vector.broadcast %c0_i32_153 : i32 to vector<1x32xi32>
    %407 = arith.cmpi slt, %403, %406 : vector<1x32xi32>
    %c0_i32_154 = arith.constant 0 : i32
    %408 = arith.cmpi slt, %401, %c0_i32_154 : i32
    %409 = vector.broadcast %408 : i1 to vector<1x32xi1>
    %410 = vector.broadcast %409 : vector<1x32xi1> to vector<1x32xi1>
    %411 = arith.xori %407, %410 : vector<1x32xi1>
    %412 = arith.andi %411, %405 : vector<1x32xi1>
    %413 = vector.broadcast %401 : i32 to vector<1x32xi32>
    %414 = arith.addi %403, %413 : vector<1x32xi32>
    %415 = arith.select %412, %414, %403 : vector<1x32xi1>, vector<1x32xi32>
    %c15_i32_155 = arith.constant 15 : i32
    %416 = vector.broadcast %c15_i32_155 : i32 to vector<1x32xi32>
    %417 = arith.cmpi eq, %415, %416 : vector<1x32xi32>
    %cst_156 = arith.constant -1.000000e+30 : f32
    %418 = vector.shape_cast %417 : vector<1x32xi1> to vector<1x32xi1>
    %419 = vector.broadcast %418 : vector<1x32xi1> to vector<8x32xi1>
    %420 = vector.broadcast %cst_156 : f32 to vector<8x32xf32>
    %421 = arith.select %419, %420, %376 : vector<8x32xi1>, vector<8x32xf32>
    %422 = arith.maximumf %399, %128 : vector<8x32xf32>
    %423 = arith.maximumf %422, %421 : vector<8x32xf32>
    %424 = vector.extract_strided_slice %423 {offsets = [0, 0], sizes = [8, 1], strides = [1, 1]} : vector<8x32xf32> to vector<8x1xf32>
    %425 = vector.extract_strided_slice %423 {offsets = [0, 2], sizes = [8, 1], strides = [1, 1]} : vector<8x32xf32> to vector<8x1xf32>
    %426 = vector.extract_strided_slice %423 {offsets = [0, 4], sizes = [8, 1], strides = [1, 1]} : vector<8x32xf32> to vector<8x1xf32>
    %427 = vector.extract_strided_slice %423 {offsets = [0, 6], sizes = [8, 1], strides = [1, 1]} : vector<8x32xf32> to vector<8x1xf32>
    %428 = vector.extract_strided_slice %423 {offsets = [0, 8], sizes = [8, 1], strides = [1, 1]} : vector<8x32xf32> to vector<8x1xf32>
    %429 = vector.extract_strided_slice %423 {offsets = [0, 10], sizes = [8, 1], strides = [1, 1]} : vector<8x32xf32> to vector<8x1xf32>
    %430 = vector.extract_strided_slice %423 {offsets = [0, 12], sizes = [8, 1], strides = [1, 1]} : vector<8x32xf32> to vector<8x1xf32>
    %431 = vector.extract_strided_slice %423 {offsets = [0, 14], sizes = [8, 1], strides = [1, 1]} : vector<8x32xf32> to vector<8x1xf32>
    %432 = vector.extract_strided_slice %423 {offsets = [0, 16], sizes = [8, 1], strides = [1, 1]} : vector<8x32xf32> to vector<8x1xf32>
    %433 = vector.extract_strided_slice %423 {offsets = [0, 18], sizes = [8, 1], strides = [1, 1]} : vector<8x32xf32> to vector<8x1xf32>
    %434 = vector.extract_strided_slice %423 {offsets = [0, 20], sizes = [8, 1], strides = [1, 1]} : vector<8x32xf32> to vector<8x1xf32>
    %435 = vector.extract_strided_slice %423 {offsets = [0, 22], sizes = [8, 1], strides = [1, 1]} : vector<8x32xf32> to vector<8x1xf32>
    %436 = vector.extract_strided_slice %423 {offsets = [0, 24], sizes = [8, 1], strides = [1, 1]} : vector<8x32xf32> to vector<8x1xf32>
    %437 = vector.extract_strided_slice %423 {offsets = [0, 26], sizes = [8, 1], strides = [1, 1]} : vector<8x32xf32> to vector<8x1xf32>
    %438 = vector.extract_strided_slice %423 {offsets = [0, 28], sizes = [8, 1], strides = [1, 1]} : vector<8x32xf32> to vector<8x1xf32>
    %439 = vector.extract_strided_slice %423 {offsets = [0, 30], sizes = [8, 1], strides = [1, 1]} : vector<8x32xf32> to vector<8x1xf32>
    %440 = tpu.concatenate %424, %425, %426, %427, %428, %429, %430, %431, %432, %433, %434, %435, %436, %437, %438, %439 in 1 : vector<8x1xf32>, vector<8x1xf32>, vector<8x1xf32>, vector<8x1xf32>, vector<8x1xf32>, vector<8x1xf32>, vector<8x1xf32>, vector<8x1xf32>, vector<8x1xf32>, vector<8x1xf32>, vector<8x1xf32>, vector<8x1xf32>, vector<8x1xf32>, vector<8x1xf32>, vector<8x1xf32>, vector<8x1xf32> -> vector<8x16xf32>
    %c0_157 = arith.constant 0 : index
    %c12 = arith.constant 12 : index
    %441 = vector.load %arg5[%c0_157, %c12] : memref<8x42xf32, #tpu.memory_space<vmem>>, vector<8x1xf32>
    %442 = vector.broadcast %441 : vector<8x1xf32> to vector<8x16xf32>
    %443 = arith.mulf %440, %442 : vector<8x16xf32>
    %c0_158 = arith.constant 0 : index
    %c13 = arith.constant 13 : index
    %444 = vector.load %arg5[%c0_158, %c13] : memref<8x42xf32, #tpu.memory_space<vmem>>, vector<8x1xf32>
    %445 = vector.broadcast %444 : vector<8x1xf32> to vector<8x16xf32>
    %446 = arith.addf %443, %445 : vector<8x16xf32>
    %cst_159 = arith.constant 0.000000e+00 : f32
    %447 = vector.broadcast %cst_159 : f32 to vector<8x16xf32>
    %448 = arith.maximumf %446, %447 : vector<8x16xf32>
    %449 = vector.extract_strided_slice %448 {offsets = [0, 0], sizes = [8, 15], strides = [1, 1]} : vector<8x16xf32> to vector<8x15xf32>
    %450 = tpu.concatenate %5, %449 in 1 : vector<8x1xf32>, vector<8x15xf32> -> vector<8x16xf32>
    %451 = vector.extract_strided_slice %448 {offsets = [0, 1], sizes = [8, 15], strides = [1, 1]} : vector<8x16xf32> to vector<8x15xf32>
    %452 = tpu.concatenate %451, %5 in 1 : vector<8x15xf32>, vector<8x1xf32> -> vector<8x16xf32>
    %453 = tpu.iota {dimensions = array<i32: 1>} : vector<1x16xi32>
    %c8_i32 = arith.constant 8 : i32
    %c0_i32_160 = arith.constant 0 : i32
    %454 = arith.cmpi eq, %c8_i32, %c0_i32_160 : i32
    %c1_i32_161 = arith.constant 1 : i32
    %455 = arith.select %454, %c1_i32_161, %c8_i32 : i32
    %456 = vector.broadcast %455 : i32 to vector<1x16xi32>
    %457 = arith.remsi %453, %456 : vector<1x16xi32>
    %c0_i32_162 = arith.constant 0 : i32
    %458 = vector.broadcast %c0_i32_162 : i32 to vector<1x16xi32>
    %459 = arith.cmpi ne, %457, %458 : vector<1x16xi32>
    %c0_i32_163 = arith.constant 0 : i32
    %460 = vector.broadcast %c0_i32_163 : i32 to vector<1x16xi32>
    %461 = arith.cmpi slt, %457, %460 : vector<1x16xi32>
    %c0_i32_164 = arith.constant 0 : i32
    %462 = arith.cmpi slt, %455, %c0_i32_164 : i32
    %463 = vector.broadcast %462 : i1 to vector<1x16xi1>
    %464 = vector.broadcast %463 : vector<1x16xi1> to vector<1x16xi1>
    %465 = arith.xori %461, %464 : vector<1x16xi1>
    %466 = arith.andi %465, %459 : vector<1x16xi1>
    %467 = vector.broadcast %455 : i32 to vector<1x16xi32>
    %468 = arith.addi %457, %467 : vector<1x16xi32>
    %469 = arith.select %466, %468, %457 : vector<1x16xi1>, vector<1x16xi32>
    %c0_i32_165 = arith.constant 0 : i32
    %470 = vector.broadcast %c0_i32_165 : i32 to vector<1x16xi32>
    %471 = arith.cmpi eq, %469, %470 : vector<1x16xi32>
    %cst_166 = arith.constant 0.000000e+00 : f32
    %472 = vector.shape_cast %471 : vector<1x16xi1> to vector<1x16xi1>
    %473 = vector.broadcast %472 : vector<1x16xi1> to vector<8x16xi1>
    %474 = vector.broadcast %cst_166 : f32 to vector<8x16xf32>
    %475 = arith.select %473, %474, %450 : vector<8x16xi1>, vector<8x16xf32>
    %c8_i32_167 = arith.constant 8 : i32
    %c0_i32_168 = arith.constant 0 : i32
    %476 = arith.cmpi eq, %c8_i32_167, %c0_i32_168 : i32
    %c1_i32_169 = arith.constant 1 : i32
    %477 = arith.select %476, %c1_i32_169, %c8_i32_167 : i32
    %478 = vector.broadcast %477 : i32 to vector<1x16xi32>
    %479 = arith.remsi %453, %478 : vector<1x16xi32>
    %c0_i32_170 = arith.constant 0 : i32
    %480 = vector.broadcast %c0_i32_170 : i32 to vector<1x16xi32>
    %481 = arith.cmpi ne, %479, %480 : vector<1x16xi32>
    %c0_i32_171 = arith.constant 0 : i32
    %482 = vector.broadcast %c0_i32_171 : i32 to vector<1x16xi32>
    %483 = arith.cmpi slt, %479, %482 : vector<1x16xi32>
    %c0_i32_172 = arith.constant 0 : i32
    %484 = arith.cmpi slt, %477, %c0_i32_172 : i32
    %485 = vector.broadcast %484 : i1 to vector<1x16xi1>
    %486 = vector.broadcast %485 : vector<1x16xi1> to vector<1x16xi1>
    %487 = arith.xori %483, %486 : vector<1x16xi1>
    %488 = arith.andi %487, %481 : vector<1x16xi1>
    %489 = vector.broadcast %477 : i32 to vector<1x16xi32>
    %490 = arith.addi %479, %489 : vector<1x16xi32>
    %491 = arith.select %488, %490, %479 : vector<1x16xi1>, vector<1x16xi32>
    %c7_i32 = arith.constant 7 : i32
    %492 = vector.broadcast %c7_i32 : i32 to vector<1x16xi32>
    %493 = arith.cmpi eq, %491, %492 : vector<1x16xi32>
    %cst_173 = arith.constant 0.000000e+00 : f32
    %494 = vector.shape_cast %493 : vector<1x16xi1> to vector<1x16xi1>
    %495 = vector.broadcast %494 : vector<1x16xi1> to vector<8x16xi1>
    %496 = vector.broadcast %cst_173 : f32 to vector<8x16xf32>
    %497 = arith.select %495, %496, %452 : vector<8x16xi1>, vector<8x16xf32>
    %c3_174 = arith.constant 3 : index
    %c0_175 = arith.constant 0 : index
    %c0_176 = arith.constant 0 : index
    %498 = vector.load %arg2[%c3_174, %c0_175, %c0_176] : memref<9x8x24xf32, #tpu.memory_space<vmem>>, vector<1x8x24xf32>
    %499 = vector.shape_cast %498 : vector<1x8x24xf32> to vector<8x24xf32>
    %500 = tpu.concatenate %475, %448, %497 in 0 : vector<8x16xf32>, vector<8x16xf32>, vector<8x16xf32> -> vector<24x16xf32>
    %cst_177 = arith.constant dense<0.000000e+00> : vector<8x16xf32>
    %501 = tpu.matmul %499, %500, %cst_177 {dimension_numbers = #tpu.dot_dimension_numbers<[1], [0], [0], [1], [0, 0, 1, 1], [], []>} : vector<8x24xf32>, vector<24x16xf32>, vector<8x16xf32> -> vector<8x16xf32>
    %c0_178 = arith.constant 0 : index
    %c14 = arith.constant 14 : index
    %502 = vector.load %arg5[%c0_178, %c14] : memref<8x42xf32, #tpu.memory_space<vmem>>, vector<8x1xf32>
    %503 = vector.broadcast %502 : vector<8x1xf32> to vector<8x16xf32>
    %504 = arith.mulf %501, %503 : vector<8x16xf32>
    %c0_179 = arith.constant 0 : index
    %c15 = arith.constant 15 : index
    %505 = vector.load %arg5[%c0_179, %c15] : memref<8x42xf32, #tpu.memory_space<vmem>>, vector<8x1xf32>
    %506 = vector.broadcast %505 : vector<8x1xf32> to vector<8x16xf32>
    %507 = arith.addf %504, %506 : vector<8x16xf32>
    %cst_180 = arith.constant 0.000000e+00 : f32
    %508 = vector.broadcast %cst_180 : f32 to vector<8x16xf32>
    %509 = arith.maximumf %507, %508 : vector<8x16xf32>
    %510 = vector.extract_strided_slice %509 {offsets = [0, 0], sizes = [8, 15], strides = [1, 1]} : vector<8x16xf32> to vector<8x15xf32>
    %511 = tpu.concatenate %5, %510 in 1 : vector<8x1xf32>, vector<8x15xf32> -> vector<8x16xf32>
    %512 = vector.extract_strided_slice %509 {offsets = [0, 1], sizes = [8, 15], strides = [1, 1]} : vector<8x16xf32> to vector<8x15xf32>
    %513 = tpu.concatenate %512, %5 in 1 : vector<8x15xf32>, vector<8x1xf32> -> vector<8x16xf32>
    %514 = tpu.iota {dimensions = array<i32: 1>} : vector<1x16xi32>
    %c8_i32_181 = arith.constant 8 : i32
    %c0_i32_182 = arith.constant 0 : i32
    %515 = arith.cmpi eq, %c8_i32_181, %c0_i32_182 : i32
    %c1_i32_183 = arith.constant 1 : i32
    %516 = arith.select %515, %c1_i32_183, %c8_i32_181 : i32
    %517 = vector.broadcast %516 : i32 to vector<1x16xi32>
    %518 = arith.remsi %514, %517 : vector<1x16xi32>
    %c0_i32_184 = arith.constant 0 : i32
    %519 = vector.broadcast %c0_i32_184 : i32 to vector<1x16xi32>
    %520 = arith.cmpi ne, %518, %519 : vector<1x16xi32>
    %c0_i32_185 = arith.constant 0 : i32
    %521 = vector.broadcast %c0_i32_185 : i32 to vector<1x16xi32>
    %522 = arith.cmpi slt, %518, %521 : vector<1x16xi32>
    %c0_i32_186 = arith.constant 0 : i32
    %523 = arith.cmpi slt, %516, %c0_i32_186 : i32
    %524 = vector.broadcast %523 : i1 to vector<1x16xi1>
    %525 = vector.broadcast %524 : vector<1x16xi1> to vector<1x16xi1>
    %526 = arith.xori %522, %525 : vector<1x16xi1>
    %527 = arith.andi %526, %520 : vector<1x16xi1>
    %528 = vector.broadcast %516 : i32 to vector<1x16xi32>
    %529 = arith.addi %518, %528 : vector<1x16xi32>
    %530 = arith.select %527, %529, %518 : vector<1x16xi1>, vector<1x16xi32>
    %c0_i32_187 = arith.constant 0 : i32
    %531 = vector.broadcast %c0_i32_187 : i32 to vector<1x16xi32>
    %532 = arith.cmpi eq, %530, %531 : vector<1x16xi32>
    %cst_188 = arith.constant 0.000000e+00 : f32
    %533 = vector.shape_cast %532 : vector<1x16xi1> to vector<1x16xi1>
    %534 = vector.broadcast %533 : vector<1x16xi1> to vector<8x16xi1>
    %535 = vector.broadcast %cst_188 : f32 to vector<8x16xf32>
    %536 = arith.select %534, %535, %511 : vector<8x16xi1>, vector<8x16xf32>
    %c8_i32_189 = arith.constant 8 : i32
    %c0_i32_190 = arith.constant 0 : i32
    %537 = arith.cmpi eq, %c8_i32_189, %c0_i32_190 : i32
    %c1_i32_191 = arith.constant 1 : i32
    %538 = arith.select %537, %c1_i32_191, %c8_i32_189 : i32
    %539 = vector.broadcast %538 : i32 to vector<1x16xi32>
    %540 = arith.remsi %514, %539 : vector<1x16xi32>
    %c0_i32_192 = arith.constant 0 : i32
    %541 = vector.broadcast %c0_i32_192 : i32 to vector<1x16xi32>
    %542 = arith.cmpi ne, %540, %541 : vector<1x16xi32>
    %c0_i32_193 = arith.constant 0 : i32
    %543 = vector.broadcast %c0_i32_193 : i32 to vector<1x16xi32>
    %544 = arith.cmpi slt, %540, %543 : vector<1x16xi32>
    %c0_i32_194 = arith.constant 0 : i32
    %545 = arith.cmpi slt, %538, %c0_i32_194 : i32
    %546 = vector.broadcast %545 : i1 to vector<1x16xi1>
    %547 = vector.broadcast %546 : vector<1x16xi1> to vector<1x16xi1>
    %548 = arith.xori %544, %547 : vector<1x16xi1>
    %549 = arith.andi %548, %542 : vector<1x16xi1>
    %550 = vector.broadcast %538 : i32 to vector<1x16xi32>
    %551 = arith.addi %540, %550 : vector<1x16xi32>
    %552 = arith.select %549, %551, %540 : vector<1x16xi1>, vector<1x16xi32>
    %c7_i32_195 = arith.constant 7 : i32
    %553 = vector.broadcast %c7_i32_195 : i32 to vector<1x16xi32>
    %554 = arith.cmpi eq, %552, %553 : vector<1x16xi32>
    %cst_196 = arith.constant 0.000000e+00 : f32
    %555 = vector.shape_cast %554 : vector<1x16xi1> to vector<1x16xi1>
    %556 = vector.broadcast %555 : vector<1x16xi1> to vector<8x16xi1>
    %557 = vector.broadcast %cst_196 : f32 to vector<8x16xf32>
    %558 = arith.select %556, %557, %513 : vector<8x16xi1>, vector<8x16xf32>
    %c3_197 = arith.constant 3 : index
    %c0_198 = arith.constant 0 : index
    %c0_199 = arith.constant 0 : index
    %559 = vector.load %arg3[%c3_197, %c0_198, %c0_199] : memref<9x8x32xf32, #tpu.memory_space<vmem>>, vector<1x8x32xf32>
    %560 = vector.shape_cast %559 : vector<1x8x32xf32> to vector<8x32xf32>
    %561 = tpu.concatenate %536, %509, %558, %440 in 0 : vector<8x16xf32>, vector<8x16xf32>, vector<8x16xf32>, vector<8x16xf32> -> vector<32x16xf32>
    %cst_200 = arith.constant dense<0.000000e+00> : vector<8x16xf32>
    %562 = tpu.matmul %560, %561, %cst_200 {dimension_numbers = #tpu.dot_dimension_numbers<[1], [0], [0], [1], [0, 0, 1, 1], [], []>} : vector<8x32xf32>, vector<32x16xf32>, vector<8x16xf32> -> vector<8x16xf32>
    %c0_201 = arith.constant 0 : index
    %c16 = arith.constant 16 : index
    %563 = vector.load %arg5[%c0_201, %c16] : memref<8x42xf32, #tpu.memory_space<vmem>>, vector<8x1xf32>
    %564 = vector.broadcast %563 : vector<8x1xf32> to vector<8x16xf32>
    %565 = arith.mulf %562, %564 : vector<8x16xf32>
    %c0_202 = arith.constant 0 : index
    %c17 = arith.constant 17 : index
    %566 = vector.load %arg5[%c0_202, %c17] : memref<8x42xf32, #tpu.memory_space<vmem>>, vector<8x1xf32>
    %567 = vector.broadcast %566 : vector<8x1xf32> to vector<8x16xf32>
    %568 = arith.addf %565, %567 : vector<8x16xf32>
    %cst_203 = arith.constant 0.000000e+00 : f32
    %569 = vector.broadcast %cst_203 : f32 to vector<8x16xf32>
    %570 = arith.maximumf %568, %569 : vector<8x16xf32>
    %571 = vector.extract_strided_slice %570 {offsets = [0, 0], sizes = [8, 15], strides = [1, 1]} : vector<8x16xf32> to vector<8x15xf32>
    %572 = tpu.concatenate %5, %571 in 1 : vector<8x1xf32>, vector<8x15xf32> -> vector<8x16xf32>
    %573 = vector.extract_strided_slice %570 {offsets = [0, 1], sizes = [8, 15], strides = [1, 1]} : vector<8x16xf32> to vector<8x15xf32>
    %574 = tpu.concatenate %573, %5 in 1 : vector<8x15xf32>, vector<8x1xf32> -> vector<8x16xf32>
    %575 = tpu.iota {dimensions = array<i32: 1>} : vector<1x16xi32>
    %c8_i32_204 = arith.constant 8 : i32
    %c0_i32_205 = arith.constant 0 : i32
    %576 = arith.cmpi eq, %c8_i32_204, %c0_i32_205 : i32
    %c1_i32_206 = arith.constant 1 : i32
    %577 = arith.select %576, %c1_i32_206, %c8_i32_204 : i32
    %578 = vector.broadcast %577 : i32 to vector<1x16xi32>
    %579 = arith.remsi %575, %578 : vector<1x16xi32>
    %c0_i32_207 = arith.constant 0 : i32
    %580 = vector.broadcast %c0_i32_207 : i32 to vector<1x16xi32>
    %581 = arith.cmpi ne, %579, %580 : vector<1x16xi32>
    %c0_i32_208 = arith.constant 0 : i32
    %582 = vector.broadcast %c0_i32_208 : i32 to vector<1x16xi32>
    %583 = arith.cmpi slt, %579, %582 : vector<1x16xi32>
    %c0_i32_209 = arith.constant 0 : i32
    %584 = arith.cmpi slt, %577, %c0_i32_209 : i32
    %585 = vector.broadcast %584 : i1 to vector<1x16xi1>
    %586 = vector.broadcast %585 : vector<1x16xi1> to vector<1x16xi1>
    %587 = arith.xori %583, %586 : vector<1x16xi1>
    %588 = arith.andi %587, %581 : vector<1x16xi1>
    %589 = vector.broadcast %577 : i32 to vector<1x16xi32>
    %590 = arith.addi %579, %589 : vector<1x16xi32>
    %591 = arith.select %588, %590, %579 : vector<1x16xi1>, vector<1x16xi32>
    %c0_i32_210 = arith.constant 0 : i32
    %592 = vector.broadcast %c0_i32_210 : i32 to vector<1x16xi32>
    %593 = arith.cmpi eq, %591, %592 : vector<1x16xi32>
    %cst_211 = arith.constant 0.000000e+00 : f32
    %594 = vector.shape_cast %593 : vector<1x16xi1> to vector<1x16xi1>
    %595 = vector.broadcast %594 : vector<1x16xi1> to vector<8x16xi1>
    %596 = vector.broadcast %cst_211 : f32 to vector<8x16xf32>
    %597 = arith.select %595, %596, %572 : vector<8x16xi1>, vector<8x16xf32>
    %c8_i32_212 = arith.constant 8 : i32
    %c0_i32_213 = arith.constant 0 : i32
    %598 = arith.cmpi eq, %c8_i32_212, %c0_i32_213 : i32
    %c1_i32_214 = arith.constant 1 : i32
    %599 = arith.select %598, %c1_i32_214, %c8_i32_212 : i32
    %600 = vector.broadcast %599 : i32 to vector<1x16xi32>
    %601 = arith.remsi %575, %600 : vector<1x16xi32>
    %c0_i32_215 = arith.constant 0 : i32
    %602 = vector.broadcast %c0_i32_215 : i32 to vector<1x16xi32>
    %603 = arith.cmpi ne, %601, %602 : vector<1x16xi32>
    %c0_i32_216 = arith.constant 0 : i32
    %604 = vector.broadcast %c0_i32_216 : i32 to vector<1x16xi32>
    %605 = arith.cmpi slt, %601, %604 : vector<1x16xi32>
    %c0_i32_217 = arith.constant 0 : i32
    %606 = arith.cmpi slt, %599, %c0_i32_217 : i32
    %607 = vector.broadcast %606 : i1 to vector<1x16xi1>
    %608 = vector.broadcast %607 : vector<1x16xi1> to vector<1x16xi1>
    %609 = arith.xori %605, %608 : vector<1x16xi1>
    %610 = arith.andi %609, %603 : vector<1x16xi1>
    %611 = vector.broadcast %599 : i32 to vector<1x16xi32>
    %612 = arith.addi %601, %611 : vector<1x16xi32>
    %613 = arith.select %610, %612, %601 : vector<1x16xi1>, vector<1x16xi32>
    %c7_i32_218 = arith.constant 7 : i32
    %614 = vector.broadcast %c7_i32_218 : i32 to vector<1x16xi32>
    %615 = arith.cmpi eq, %613, %614 : vector<1x16xi32>
    %cst_219 = arith.constant 0.000000e+00 : f32
    %616 = vector.shape_cast %615 : vector<1x16xi1> to vector<1x16xi1>
    %617 = vector.broadcast %616 : vector<1x16xi1> to vector<8x16xi1>
    %618 = vector.broadcast %cst_219 : f32 to vector<8x16xf32>
    %619 = arith.select %617, %618, %574 : vector<8x16xi1>, vector<8x16xf32>
    %c4_220 = arith.constant 4 : index
    %c0_221 = arith.constant 0 : index
    %c0_222 = arith.constant 0 : index
    %620 = vector.load %arg2[%c4_220, %c0_221, %c0_222] : memref<9x8x24xf32, #tpu.memory_space<vmem>>, vector<1x8x24xf32>
    %621 = vector.shape_cast %620 : vector<1x8x24xf32> to vector<8x24xf32>
    %622 = tpu.concatenate %597, %570, %619 in 0 : vector<8x16xf32>, vector<8x16xf32>, vector<8x16xf32> -> vector<24x16xf32>
    %cst_223 = arith.constant dense<0.000000e+00> : vector<8x16xf32>
    %623 = tpu.matmul %621, %622, %cst_223 {dimension_numbers = #tpu.dot_dimension_numbers<[1], [0], [0], [1], [0, 0, 1, 1], [], []>} : vector<8x24xf32>, vector<24x16xf32>, vector<8x16xf32> -> vector<8x16xf32>
    %c0_224 = arith.constant 0 : index
    %c18 = arith.constant 18 : index
    %624 = vector.load %arg5[%c0_224, %c18] : memref<8x42xf32, #tpu.memory_space<vmem>>, vector<8x1xf32>
    %625 = vector.broadcast %624 : vector<8x1xf32> to vector<8x16xf32>
    %626 = arith.mulf %623, %625 : vector<8x16xf32>
    %c0_225 = arith.constant 0 : index
    %c19 = arith.constant 19 : index
    %627 = vector.load %arg5[%c0_225, %c19] : memref<8x42xf32, #tpu.memory_space<vmem>>, vector<8x1xf32>
    %628 = vector.broadcast %627 : vector<8x1xf32> to vector<8x16xf32>
    %629 = arith.addf %626, %628 : vector<8x16xf32>
    %cst_226 = arith.constant 0.000000e+00 : f32
    %630 = vector.broadcast %cst_226 : f32 to vector<8x16xf32>
    %631 = arith.maximumf %629, %630 : vector<8x16xf32>
    %632 = vector.extract_strided_slice %631 {offsets = [0, 0], sizes = [8, 15], strides = [1, 1]} : vector<8x16xf32> to vector<8x15xf32>
    %633 = tpu.concatenate %5, %632 in 1 : vector<8x1xf32>, vector<8x15xf32> -> vector<8x16xf32>
    %634 = vector.extract_strided_slice %631 {offsets = [0, 1], sizes = [8, 15], strides = [1, 1]} : vector<8x16xf32> to vector<8x15xf32>
    %635 = tpu.concatenate %634, %5 in 1 : vector<8x15xf32>, vector<8x1xf32> -> vector<8x16xf32>
    %636 = tpu.iota {dimensions = array<i32: 1>} : vector<1x16xi32>
    %c8_i32_227 = arith.constant 8 : i32
    %c0_i32_228 = arith.constant 0 : i32
    %637 = arith.cmpi eq, %c8_i32_227, %c0_i32_228 : i32
    %c1_i32_229 = arith.constant 1 : i32
    %638 = arith.select %637, %c1_i32_229, %c8_i32_227 : i32
    %639 = vector.broadcast %638 : i32 to vector<1x16xi32>
    %640 = arith.remsi %636, %639 : vector<1x16xi32>
    %c0_i32_230 = arith.constant 0 : i32
    %641 = vector.broadcast %c0_i32_230 : i32 to vector<1x16xi32>
    %642 = arith.cmpi ne, %640, %641 : vector<1x16xi32>
    %c0_i32_231 = arith.constant 0 : i32
    %643 = vector.broadcast %c0_i32_231 : i32 to vector<1x16xi32>
    %644 = arith.cmpi slt, %640, %643 : vector<1x16xi32>
    %c0_i32_232 = arith.constant 0 : i32
    %645 = arith.cmpi slt, %638, %c0_i32_232 : i32
    %646 = vector.broadcast %645 : i1 to vector<1x16xi1>
    %647 = vector.broadcast %646 : vector<1x16xi1> to vector<1x16xi1>
    %648 = arith.xori %644, %647 : vector<1x16xi1>
    %649 = arith.andi %648, %642 : vector<1x16xi1>
    %650 = vector.broadcast %638 : i32 to vector<1x16xi32>
    %651 = arith.addi %640, %650 : vector<1x16xi32>
    %652 = arith.select %649, %651, %640 : vector<1x16xi1>, vector<1x16xi32>
    %c0_i32_233 = arith.constant 0 : i32
    %653 = vector.broadcast %c0_i32_233 : i32 to vector<1x16xi32>
    %654 = arith.cmpi eq, %652, %653 : vector<1x16xi32>
    %cst_234 = arith.constant 0.000000e+00 : f32
    %655 = vector.shape_cast %654 : vector<1x16xi1> to vector<1x16xi1>
    %656 = vector.broadcast %655 : vector<1x16xi1> to vector<8x16xi1>
    %657 = vector.broadcast %cst_234 : f32 to vector<8x16xf32>
    %658 = arith.select %656, %657, %633 : vector<8x16xi1>, vector<8x16xf32>
    %c8_i32_235 = arith.constant 8 : i32
    %c0_i32_236 = arith.constant 0 : i32
    %659 = arith.cmpi eq, %c8_i32_235, %c0_i32_236 : i32
    %c1_i32_237 = arith.constant 1 : i32
    %660 = arith.select %659, %c1_i32_237, %c8_i32_235 : i32
    %661 = vector.broadcast %660 : i32 to vector<1x16xi32>
    %662 = arith.remsi %636, %661 : vector<1x16xi32>
    %c0_i32_238 = arith.constant 0 : i32
    %663 = vector.broadcast %c0_i32_238 : i32 to vector<1x16xi32>
    %664 = arith.cmpi ne, %662, %663 : vector<1x16xi32>
    %c0_i32_239 = arith.constant 0 : i32
    %665 = vector.broadcast %c0_i32_239 : i32 to vector<1x16xi32>
    %666 = arith.cmpi slt, %662, %665 : vector<1x16xi32>
    %c0_i32_240 = arith.constant 0 : i32
    %667 = arith.cmpi slt, %660, %c0_i32_240 : i32
    %668 = vector.broadcast %667 : i1 to vector<1x16xi1>
    %669 = vector.broadcast %668 : vector<1x16xi1> to vector<1x16xi1>
    %670 = arith.xori %666, %669 : vector<1x16xi1>
    %671 = arith.andi %670, %664 : vector<1x16xi1>
    %672 = vector.broadcast %660 : i32 to vector<1x16xi32>
    %673 = arith.addi %662, %672 : vector<1x16xi32>
    %674 = arith.select %671, %673, %662 : vector<1x16xi1>, vector<1x16xi32>
    %c7_i32_241 = arith.constant 7 : i32
    %675 = vector.broadcast %c7_i32_241 : i32 to vector<1x16xi32>
    %676 = arith.cmpi eq, %674, %675 : vector<1x16xi32>
    %cst_242 = arith.constant 0.000000e+00 : f32
    %677 = vector.shape_cast %676 : vector<1x16xi1> to vector<1x16xi1>
    %678 = vector.broadcast %677 : vector<1x16xi1> to vector<8x16xi1>
    %679 = vector.broadcast %cst_242 : f32 to vector<8x16xf32>
    %680 = arith.select %678, %679, %635 : vector<8x16xi1>, vector<8x16xf32>
    %c4_243 = arith.constant 4 : index
    %c0_244 = arith.constant 0 : index
    %c0_245 = arith.constant 0 : index
    %681 = vector.load %arg3[%c4_243, %c0_244, %c0_245] : memref<9x8x32xf32, #tpu.memory_space<vmem>>, vector<1x8x32xf32>
    %682 = vector.shape_cast %681 : vector<1x8x32xf32> to vector<8x32xf32>
    %683 = tpu.concatenate %658, %631, %680, %562 in 0 : vector<8x16xf32>, vector<8x16xf32>, vector<8x16xf32>, vector<8x16xf32> -> vector<32x16xf32>
    %cst_246 = arith.constant dense<0.000000e+00> : vector<8x16xf32>
    %684 = tpu.matmul %682, %683, %cst_246 {dimension_numbers = #tpu.dot_dimension_numbers<[1], [0], [0], [1], [0, 0, 1, 1], [], []>} : vector<8x32xf32>, vector<32x16xf32>, vector<8x16xf32> -> vector<8x16xf32>
    %685 = vector.extract_strided_slice %562 {offsets = [0, 0], sizes = [8, 15], strides = [1, 1]} : vector<8x16xf32> to vector<8x15xf32>
    %686 = tpu.concatenate %6, %685 in 1 : vector<8x1xf32>, vector<8x15xf32> -> vector<8x16xf32>
    %687 = vector.extract_strided_slice %562 {offsets = [0, 1], sizes = [8, 15], strides = [1, 1]} : vector<8x16xf32> to vector<8x15xf32>
    %688 = tpu.concatenate %687, %6 in 1 : vector<8x15xf32>, vector<8x1xf32> -> vector<8x16xf32>
    %689 = tpu.iota {dimensions = array<i32: 1>} : vector<1x16xi32>
    %c8_i32_247 = arith.constant 8 : i32
    %c0_i32_248 = arith.constant 0 : i32
    %690 = arith.cmpi eq, %c8_i32_247, %c0_i32_248 : i32
    %c1_i32_249 = arith.constant 1 : i32
    %691 = arith.select %690, %c1_i32_249, %c8_i32_247 : i32
    %692 = vector.broadcast %691 : i32 to vector<1x16xi32>
    %693 = arith.remsi %689, %692 : vector<1x16xi32>
    %c0_i32_250 = arith.constant 0 : i32
    %694 = vector.broadcast %c0_i32_250 : i32 to vector<1x16xi32>
    %695 = arith.cmpi ne, %693, %694 : vector<1x16xi32>
    %c0_i32_251 = arith.constant 0 : i32
    %696 = vector.broadcast %c0_i32_251 : i32 to vector<1x16xi32>
    %697 = arith.cmpi slt, %693, %696 : vector<1x16xi32>
    %c0_i32_252 = arith.constant 0 : i32
    %698 = arith.cmpi slt, %691, %c0_i32_252 : i32
    %699 = vector.broadcast %698 : i1 to vector<1x16xi1>
    %700 = vector.broadcast %699 : vector<1x16xi1> to vector<1x16xi1>
    %701 = arith.xori %697, %700 : vector<1x16xi1>
    %702 = arith.andi %701, %695 : vector<1x16xi1>
    %703 = vector.broadcast %691 : i32 to vector<1x16xi32>
    %704 = arith.addi %693, %703 : vector<1x16xi32>
    %705 = arith.select %702, %704, %693 : vector<1x16xi1>, vector<1x16xi32>
    %c0_i32_253 = arith.constant 0 : i32
    %706 = vector.broadcast %c0_i32_253 : i32 to vector<1x16xi32>
    %707 = arith.cmpi eq, %705, %706 : vector<1x16xi32>
    %cst_254 = arith.constant -1.000000e+30 : f32
    %708 = vector.shape_cast %707 : vector<1x16xi1> to vector<1x16xi1>
    %709 = vector.broadcast %708 : vector<1x16xi1> to vector<8x16xi1>
    %710 = vector.broadcast %cst_254 : f32 to vector<8x16xf32>
    %711 = arith.select %709, %710, %686 : vector<8x16xi1>, vector<8x16xf32>
    %c8_i32_255 = arith.constant 8 : i32
    %c0_i32_256 = arith.constant 0 : i32
    %712 = arith.cmpi eq, %c8_i32_255, %c0_i32_256 : i32
    %c1_i32_257 = arith.constant 1 : i32
    %713 = arith.select %712, %c1_i32_257, %c8_i32_255 : i32
    %714 = vector.broadcast %713 : i32 to vector<1x16xi32>
    %715 = arith.remsi %689, %714 : vector<1x16xi32>
    %c0_i32_258 = arith.constant 0 : i32
    %716 = vector.broadcast %c0_i32_258 : i32 to vector<1x16xi32>
    %717 = arith.cmpi ne, %715, %716 : vector<1x16xi32>
    %c0_i32_259 = arith.constant 0 : i32
    %718 = vector.broadcast %c0_i32_259 : i32 to vector<1x16xi32>
    %719 = arith.cmpi slt, %715, %718 : vector<1x16xi32>
    %c0_i32_260 = arith.constant 0 : i32
    %720 = arith.cmpi slt, %713, %c0_i32_260 : i32
    %721 = vector.broadcast %720 : i1 to vector<1x16xi1>
    %722 = vector.broadcast %721 : vector<1x16xi1> to vector<1x16xi1>
    %723 = arith.xori %719, %722 : vector<1x16xi1>
    %724 = arith.andi %723, %717 : vector<1x16xi1>
    %725 = vector.broadcast %713 : i32 to vector<1x16xi32>
    %726 = arith.addi %715, %725 : vector<1x16xi32>
    %727 = arith.select %724, %726, %715 : vector<1x16xi1>, vector<1x16xi32>
    %c7_i32_261 = arith.constant 7 : i32
    %728 = vector.broadcast %c7_i32_261 : i32 to vector<1x16xi32>
    %729 = arith.cmpi eq, %727, %728 : vector<1x16xi32>
    %cst_262 = arith.constant -1.000000e+30 : f32
    %730 = vector.shape_cast %729 : vector<1x16xi1> to vector<1x16xi1>
    %731 = vector.broadcast %730 : vector<1x16xi1> to vector<8x16xi1>
    %732 = vector.broadcast %cst_262 : f32 to vector<8x16xf32>
    %733 = arith.select %731, %732, %688 : vector<8x16xi1>, vector<8x16xf32>
    %734 = arith.maximumf %711, %562 : vector<8x16xf32>
    %735 = arith.maximumf %734, %733 : vector<8x16xf32>
    %736 = vector.extract_strided_slice %735 {offsets = [0, 0], sizes = [8, 1], strides = [1, 1]} : vector<8x16xf32> to vector<8x1xf32>
    %737 = vector.extract_strided_slice %735 {offsets = [0, 2], sizes = [8, 1], strides = [1, 1]} : vector<8x16xf32> to vector<8x1xf32>
    %738 = vector.extract_strided_slice %735 {offsets = [0, 4], sizes = [8, 1], strides = [1, 1]} : vector<8x16xf32> to vector<8x1xf32>
    %739 = vector.extract_strided_slice %735 {offsets = [0, 6], sizes = [8, 1], strides = [1, 1]} : vector<8x16xf32> to vector<8x1xf32>
    %740 = vector.extract_strided_slice %735 {offsets = [0, 8], sizes = [8, 1], strides = [1, 1]} : vector<8x16xf32> to vector<8x1xf32>
    %741 = vector.extract_strided_slice %735 {offsets = [0, 10], sizes = [8, 1], strides = [1, 1]} : vector<8x16xf32> to vector<8x1xf32>
    %742 = vector.extract_strided_slice %735 {offsets = [0, 12], sizes = [8, 1], strides = [1, 1]} : vector<8x16xf32> to vector<8x1xf32>
    %743 = vector.extract_strided_slice %735 {offsets = [0, 14], sizes = [8, 1], strides = [1, 1]} : vector<8x16xf32> to vector<8x1xf32>
    %744 = tpu.concatenate %736, %737, %738, %739, %740, %741, %742, %743 in 1 : vector<8x1xf32>, vector<8x1xf32>, vector<8x1xf32>, vector<8x1xf32>, vector<8x1xf32>, vector<8x1xf32>, vector<8x1xf32>, vector<8x1xf32> -> vector<8x8xf32>
    %c0_263 = arith.constant 0 : index
    %c20 = arith.constant 20 : index
    %745 = vector.load %arg5[%c0_263, %c20] : memref<8x42xf32, #tpu.memory_space<vmem>>, vector<8x1xf32>
    %746 = vector.broadcast %745 : vector<8x1xf32> to vector<8x8xf32>
    %747 = arith.mulf %744, %746 : vector<8x8xf32>
    %c0_264 = arith.constant 0 : index
    %c21 = arith.constant 21 : index
    %748 = vector.load %arg5[%c0_264, %c21] : memref<8x42xf32, #tpu.memory_space<vmem>>, vector<8x1xf32>
    %749 = vector.broadcast %748 : vector<8x1xf32> to vector<8x8xf32>
    %750 = arith.addf %747, %749 : vector<8x8xf32>
    %cst_265 = arith.constant 0.000000e+00 : f32
    %751 = vector.broadcast %cst_265 : f32 to vector<8x8xf32>
    %752 = arith.maximumf %750, %751 : vector<8x8xf32>
    %753 = vector.extract_strided_slice %752 {offsets = [0, 0], sizes = [8, 7], strides = [1, 1]} : vector<8x8xf32> to vector<8x7xf32>
    %754 = tpu.concatenate %5, %753 in 1 : vector<8x1xf32>, vector<8x7xf32> -> vector<8x8xf32>
    %755 = vector.extract_strided_slice %752 {offsets = [0, 1], sizes = [8, 7], strides = [1, 1]} : vector<8x8xf32> to vector<8x7xf32>
    %756 = tpu.concatenate %755, %5 in 1 : vector<8x7xf32>, vector<8x1xf32> -> vector<8x8xf32>
    %757 = tpu.iota {dimensions = array<i32: 1>} : vector<1x8xi32>
    %c4_i32 = arith.constant 4 : i32
    %c0_i32_266 = arith.constant 0 : i32
    %758 = arith.cmpi eq, %c4_i32, %c0_i32_266 : i32
    %c1_i32_267 = arith.constant 1 : i32
    %759 = arith.select %758, %c1_i32_267, %c4_i32 : i32
    %760 = vector.broadcast %759 : i32 to vector<1x8xi32>
    %761 = arith.remsi %757, %760 : vector<1x8xi32>
    %c0_i32_268 = arith.constant 0 : i32
    %762 = vector.broadcast %c0_i32_268 : i32 to vector<1x8xi32>
    %763 = arith.cmpi ne, %761, %762 : vector<1x8xi32>
    %c0_i32_269 = arith.constant 0 : i32
    %764 = vector.broadcast %c0_i32_269 : i32 to vector<1x8xi32>
    %765 = arith.cmpi slt, %761, %764 : vector<1x8xi32>
    %c0_i32_270 = arith.constant 0 : i32
    %766 = arith.cmpi slt, %759, %c0_i32_270 : i32
    %767 = vector.broadcast %766 : i1 to vector<1x8xi1>
    %768 = vector.broadcast %767 : vector<1x8xi1> to vector<1x8xi1>
    %769 = arith.xori %765, %768 : vector<1x8xi1>
    %770 = arith.andi %769, %763 : vector<1x8xi1>
    %771 = vector.broadcast %759 : i32 to vector<1x8xi32>
    %772 = arith.addi %761, %771 : vector<1x8xi32>
    %773 = arith.select %770, %772, %761 : vector<1x8xi1>, vector<1x8xi32>
    %c0_i32_271 = arith.constant 0 : i32
    %774 = vector.broadcast %c0_i32_271 : i32 to vector<1x8xi32>
    %775 = arith.cmpi eq, %773, %774 : vector<1x8xi32>
    %cst_272 = arith.constant 0.000000e+00 : f32
    %776 = vector.shape_cast %775 : vector<1x8xi1> to vector<1x8xi1>
    %777 = vector.broadcast %776 : vector<1x8xi1> to vector<8x8xi1>
    %778 = vector.broadcast %cst_272 : f32 to vector<8x8xf32>
    %779 = arith.select %777, %778, %754 : vector<8x8xi1>, vector<8x8xf32>
    %c4_i32_273 = arith.constant 4 : i32
    %c0_i32_274 = arith.constant 0 : i32
    %780 = arith.cmpi eq, %c4_i32_273, %c0_i32_274 : i32
    %c1_i32_275 = arith.constant 1 : i32
    %781 = arith.select %780, %c1_i32_275, %c4_i32_273 : i32
    %782 = vector.broadcast %781 : i32 to vector<1x8xi32>
    %783 = arith.remsi %757, %782 : vector<1x8xi32>
    %c0_i32_276 = arith.constant 0 : i32
    %784 = vector.broadcast %c0_i32_276 : i32 to vector<1x8xi32>
    %785 = arith.cmpi ne, %783, %784 : vector<1x8xi32>
    %c0_i32_277 = arith.constant 0 : i32
    %786 = vector.broadcast %c0_i32_277 : i32 to vector<1x8xi32>
    %787 = arith.cmpi slt, %783, %786 : vector<1x8xi32>
    %c0_i32_278 = arith.constant 0 : i32
    %788 = arith.cmpi slt, %781, %c0_i32_278 : i32
    %789 = vector.broadcast %788 : i1 to vector<1x8xi1>
    %790 = vector.broadcast %789 : vector<1x8xi1> to vector<1x8xi1>
    %791 = arith.xori %787, %790 : vector<1x8xi1>
    %792 = arith.andi %791, %785 : vector<1x8xi1>
    %793 = vector.broadcast %781 : i32 to vector<1x8xi32>
    %794 = arith.addi %783, %793 : vector<1x8xi32>
    %795 = arith.select %792, %794, %783 : vector<1x8xi1>, vector<1x8xi32>
    %c3_i32 = arith.constant 3 : i32
    %796 = vector.broadcast %c3_i32 : i32 to vector<1x8xi32>
    %797 = arith.cmpi eq, %795, %796 : vector<1x8xi32>
    %cst_279 = arith.constant 0.000000e+00 : f32
    %798 = vector.shape_cast %797 : vector<1x8xi1> to vector<1x8xi1>
    %799 = vector.broadcast %798 : vector<1x8xi1> to vector<8x8xi1>
    %800 = vector.broadcast %cst_279 : f32 to vector<8x8xf32>
    %801 = arith.select %799, %800, %756 : vector<8x8xi1>, vector<8x8xf32>
    %c5_280 = arith.constant 5 : index
    %c0_281 = arith.constant 0 : index
    %c0_282 = arith.constant 0 : index
    %802 = vector.load %arg2[%c5_280, %c0_281, %c0_282] : memref<9x8x24xf32, #tpu.memory_space<vmem>>, vector<1x8x24xf32>
    %803 = vector.shape_cast %802 : vector<1x8x24xf32> to vector<8x24xf32>
    %804 = tpu.concatenate %779, %752, %801 in 0 : vector<8x8xf32>, vector<8x8xf32>, vector<8x8xf32> -> vector<24x8xf32>
    %cst_283 = arith.constant dense<0.000000e+00> : vector<8x8xf32>
    %805 = tpu.matmul %803, %804, %cst_283 {dimension_numbers = #tpu.dot_dimension_numbers<[1], [0], [0], [1], [0, 0, 1, 1], [], []>} : vector<8x24xf32>, vector<24x8xf32>, vector<8x8xf32> -> vector<8x8xf32>
    %c0_284 = arith.constant 0 : index
    %c22 = arith.constant 22 : index
    %806 = vector.load %arg5[%c0_284, %c22] : memref<8x42xf32, #tpu.memory_space<vmem>>, vector<8x1xf32>
    %807 = vector.broadcast %806 : vector<8x1xf32> to vector<8x8xf32>
    %808 = arith.mulf %805, %807 : vector<8x8xf32>
    %c0_285 = arith.constant 0 : index
    %c23 = arith.constant 23 : index
    %809 = vector.load %arg5[%c0_285, %c23] : memref<8x42xf32, #tpu.memory_space<vmem>>, vector<8x1xf32>
    %810 = vector.broadcast %809 : vector<8x1xf32> to vector<8x8xf32>
    %811 = arith.addf %808, %810 : vector<8x8xf32>
    %cst_286 = arith.constant 0.000000e+00 : f32
    %812 = vector.broadcast %cst_286 : f32 to vector<8x8xf32>
    %813 = arith.maximumf %811, %812 : vector<8x8xf32>
    %814 = vector.extract_strided_slice %813 {offsets = [0, 0], sizes = [8, 7], strides = [1, 1]} : vector<8x8xf32> to vector<8x7xf32>
    %815 = tpu.concatenate %5, %814 in 1 : vector<8x1xf32>, vector<8x7xf32> -> vector<8x8xf32>
    %816 = vector.extract_strided_slice %813 {offsets = [0, 1], sizes = [8, 7], strides = [1, 1]} : vector<8x8xf32> to vector<8x7xf32>
    %817 = tpu.concatenate %816, %5 in 1 : vector<8x7xf32>, vector<8x1xf32> -> vector<8x8xf32>
    %818 = tpu.iota {dimensions = array<i32: 1>} : vector<1x8xi32>
    %c4_i32_287 = arith.constant 4 : i32
    %c0_i32_288 = arith.constant 0 : i32
    %819 = arith.cmpi eq, %c4_i32_287, %c0_i32_288 : i32
    %c1_i32_289 = arith.constant 1 : i32
    %820 = arith.select %819, %c1_i32_289, %c4_i32_287 : i32
    %821 = vector.broadcast %820 : i32 to vector<1x8xi32>
    %822 = arith.remsi %818, %821 : vector<1x8xi32>
    %c0_i32_290 = arith.constant 0 : i32
    %823 = vector.broadcast %c0_i32_290 : i32 to vector<1x8xi32>
    %824 = arith.cmpi ne, %822, %823 : vector<1x8xi32>
    %c0_i32_291 = arith.constant 0 : i32
    %825 = vector.broadcast %c0_i32_291 : i32 to vector<1x8xi32>
    %826 = arith.cmpi slt, %822, %825 : vector<1x8xi32>
    %c0_i32_292 = arith.constant 0 : i32
    %827 = arith.cmpi slt, %820, %c0_i32_292 : i32
    %828 = vector.broadcast %827 : i1 to vector<1x8xi1>
    %829 = vector.broadcast %828 : vector<1x8xi1> to vector<1x8xi1>
    %830 = arith.xori %826, %829 : vector<1x8xi1>
    %831 = arith.andi %830, %824 : vector<1x8xi1>
    %832 = vector.broadcast %820 : i32 to vector<1x8xi32>
    %833 = arith.addi %822, %832 : vector<1x8xi32>
    %834 = arith.select %831, %833, %822 : vector<1x8xi1>, vector<1x8xi32>
    %c0_i32_293 = arith.constant 0 : i32
    %835 = vector.broadcast %c0_i32_293 : i32 to vector<1x8xi32>
    %836 = arith.cmpi eq, %834, %835 : vector<1x8xi32>
    %cst_294 = arith.constant 0.000000e+00 : f32
    %837 = vector.shape_cast %836 : vector<1x8xi1> to vector<1x8xi1>
    %838 = vector.broadcast %837 : vector<1x8xi1> to vector<8x8xi1>
    %839 = vector.broadcast %cst_294 : f32 to vector<8x8xf32>
    %840 = arith.select %838, %839, %815 : vector<8x8xi1>, vector<8x8xf32>
    %c4_i32_295 = arith.constant 4 : i32
    %c0_i32_296 = arith.constant 0 : i32
    %841 = arith.cmpi eq, %c4_i32_295, %c0_i32_296 : i32
    %c1_i32_297 = arith.constant 1 : i32
    %842 = arith.select %841, %c1_i32_297, %c4_i32_295 : i32
    %843 = vector.broadcast %842 : i32 to vector<1x8xi32>
    %844 = arith.remsi %818, %843 : vector<1x8xi32>
    %c0_i32_298 = arith.constant 0 : i32
    %845 = vector.broadcast %c0_i32_298 : i32 to vector<1x8xi32>
    %846 = arith.cmpi ne, %844, %845 : vector<1x8xi32>
    %c0_i32_299 = arith.constant 0 : i32
    %847 = vector.broadcast %c0_i32_299 : i32 to vector<1x8xi32>
    %848 = arith.cmpi slt, %844, %847 : vector<1x8xi32>
    %c0_i32_300 = arith.constant 0 : i32
    %849 = arith.cmpi slt, %842, %c0_i32_300 : i32
    %850 = vector.broadcast %849 : i1 to vector<1x8xi1>
    %851 = vector.broadcast %850 : vector<1x8xi1> to vector<1x8xi1>
    %852 = arith.xori %848, %851 : vector<1x8xi1>
    %853 = arith.andi %852, %846 : vector<1x8xi1>
    %854 = vector.broadcast %842 : i32 to vector<1x8xi32>
    %855 = arith.addi %844, %854 : vector<1x8xi32>
    %856 = arith.select %853, %855, %844 : vector<1x8xi1>, vector<1x8xi32>
    %c3_i32_301 = arith.constant 3 : i32
    %857 = vector.broadcast %c3_i32_301 : i32 to vector<1x8xi32>
    %858 = arith.cmpi eq, %856, %857 : vector<1x8xi32>
    %cst_302 = arith.constant 0.000000e+00 : f32
    %859 = vector.shape_cast %858 : vector<1x8xi1> to vector<1x8xi1>
    %860 = vector.broadcast %859 : vector<1x8xi1> to vector<8x8xi1>
    %861 = vector.broadcast %cst_302 : f32 to vector<8x8xf32>
    %862 = arith.select %860, %861, %817 : vector<8x8xi1>, vector<8x8xf32>
    %c5_303 = arith.constant 5 : index
    %c0_304 = arith.constant 0 : index
    %c0_305 = arith.constant 0 : index
    %863 = vector.load %arg3[%c5_303, %c0_304, %c0_305] : memref<9x8x32xf32, #tpu.memory_space<vmem>>, vector<1x8x32xf32>
    %864 = vector.shape_cast %863 : vector<1x8x32xf32> to vector<8x32xf32>
    %865 = tpu.concatenate %840, %813, %862, %744 in 0 : vector<8x8xf32>, vector<8x8xf32>, vector<8x8xf32>, vector<8x8xf32> -> vector<32x8xf32>
    %cst_306 = arith.constant dense<0.000000e+00> : vector<8x8xf32>
    %866 = tpu.matmul %864, %865, %cst_306 {dimension_numbers = #tpu.dot_dimension_numbers<[1], [0], [0], [1], [0, 0, 1, 1], [], []>} : vector<8x32xf32>, vector<32x8xf32>, vector<8x8xf32> -> vector<8x8xf32>
    %c0_307 = arith.constant 0 : index
    %c24 = arith.constant 24 : index
    %867 = vector.load %arg5[%c0_307, %c24] : memref<8x42xf32, #tpu.memory_space<vmem>>, vector<8x1xf32>
    %868 = vector.broadcast %867 : vector<8x1xf32> to vector<8x8xf32>
    %869 = arith.mulf %866, %868 : vector<8x8xf32>
    %c0_308 = arith.constant 0 : index
    %c25 = arith.constant 25 : index
    %870 = vector.load %arg5[%c0_308, %c25] : memref<8x42xf32, #tpu.memory_space<vmem>>, vector<8x1xf32>
    %871 = vector.broadcast %870 : vector<8x1xf32> to vector<8x8xf32>
    %872 = arith.addf %869, %871 : vector<8x8xf32>
    %cst_309 = arith.constant 0.000000e+00 : f32
    %873 = vector.broadcast %cst_309 : f32 to vector<8x8xf32>
    %874 = arith.maximumf %872, %873 : vector<8x8xf32>
    %875 = vector.extract_strided_slice %874 {offsets = [0, 0], sizes = [8, 7], strides = [1, 1]} : vector<8x8xf32> to vector<8x7xf32>
    %876 = tpu.concatenate %5, %875 in 1 : vector<8x1xf32>, vector<8x7xf32> -> vector<8x8xf32>
    %877 = vector.extract_strided_slice %874 {offsets = [0, 1], sizes = [8, 7], strides = [1, 1]} : vector<8x8xf32> to vector<8x7xf32>
    %878 = tpu.concatenate %877, %5 in 1 : vector<8x7xf32>, vector<8x1xf32> -> vector<8x8xf32>
    %879 = tpu.iota {dimensions = array<i32: 1>} : vector<1x8xi32>
    %c4_i32_310 = arith.constant 4 : i32
    %c0_i32_311 = arith.constant 0 : i32
    %880 = arith.cmpi eq, %c4_i32_310, %c0_i32_311 : i32
    %c1_i32_312 = arith.constant 1 : i32
    %881 = arith.select %880, %c1_i32_312, %c4_i32_310 : i32
    %882 = vector.broadcast %881 : i32 to vector<1x8xi32>
    %883 = arith.remsi %879, %882 : vector<1x8xi32>
    %c0_i32_313 = arith.constant 0 : i32
    %884 = vector.broadcast %c0_i32_313 : i32 to vector<1x8xi32>
    %885 = arith.cmpi ne, %883, %884 : vector<1x8xi32>
    %c0_i32_314 = arith.constant 0 : i32
    %886 = vector.broadcast %c0_i32_314 : i32 to vector<1x8xi32>
    %887 = arith.cmpi slt, %883, %886 : vector<1x8xi32>
    %c0_i32_315 = arith.constant 0 : i32
    %888 = arith.cmpi slt, %881, %c0_i32_315 : i32
    %889 = vector.broadcast %888 : i1 to vector<1x8xi1>
    %890 = vector.broadcast %889 : vector<1x8xi1> to vector<1x8xi1>
    %891 = arith.xori %887, %890 : vector<1x8xi1>
    %892 = arith.andi %891, %885 : vector<1x8xi1>
    %893 = vector.broadcast %881 : i32 to vector<1x8xi32>
    %894 = arith.addi %883, %893 : vector<1x8xi32>
    %895 = arith.select %892, %894, %883 : vector<1x8xi1>, vector<1x8xi32>
    %c0_i32_316 = arith.constant 0 : i32
    %896 = vector.broadcast %c0_i32_316 : i32 to vector<1x8xi32>
    %897 = arith.cmpi eq, %895, %896 : vector<1x8xi32>
    %cst_317 = arith.constant 0.000000e+00 : f32
    %898 = vector.shape_cast %897 : vector<1x8xi1> to vector<1x8xi1>
    %899 = vector.broadcast %898 : vector<1x8xi1> to vector<8x8xi1>
    %900 = vector.broadcast %cst_317 : f32 to vector<8x8xf32>
    %901 = arith.select %899, %900, %876 : vector<8x8xi1>, vector<8x8xf32>
    %c4_i32_318 = arith.constant 4 : i32
    %c0_i32_319 = arith.constant 0 : i32
    %902 = arith.cmpi eq, %c4_i32_318, %c0_i32_319 : i32
    %c1_i32_320 = arith.constant 1 : i32
    %903 = arith.select %902, %c1_i32_320, %c4_i32_318 : i32
    %904 = vector.broadcast %903 : i32 to vector<1x8xi32>
    %905 = arith.remsi %879, %904 : vector<1x8xi32>
    %c0_i32_321 = arith.constant 0 : i32
    %906 = vector.broadcast %c0_i32_321 : i32 to vector<1x8xi32>
    %907 = arith.cmpi ne, %905, %906 : vector<1x8xi32>
    %c0_i32_322 = arith.constant 0 : i32
    %908 = vector.broadcast %c0_i32_322 : i32 to vector<1x8xi32>
    %909 = arith.cmpi slt, %905, %908 : vector<1x8xi32>
    %c0_i32_323 = arith.constant 0 : i32
    %910 = arith.cmpi slt, %903, %c0_i32_323 : i32
    %911 = vector.broadcast %910 : i1 to vector<1x8xi1>
    %912 = vector.broadcast %911 : vector<1x8xi1> to vector<1x8xi1>
    %913 = arith.xori %909, %912 : vector<1x8xi1>
    %914 = arith.andi %913, %907 : vector<1x8xi1>
    %915 = vector.broadcast %903 : i32 to vector<1x8xi32>
    %916 = arith.addi %905, %915 : vector<1x8xi32>
    %917 = arith.select %914, %916, %905 : vector<1x8xi1>, vector<1x8xi32>
    %c3_i32_324 = arith.constant 3 : i32
    %918 = vector.broadcast %c3_i32_324 : i32 to vector<1x8xi32>
    %919 = arith.cmpi eq, %917, %918 : vector<1x8xi32>
    %cst_325 = arith.constant 0.000000e+00 : f32
    %920 = vector.shape_cast %919 : vector<1x8xi1> to vector<1x8xi1>
    %921 = vector.broadcast %920 : vector<1x8xi1> to vector<8x8xi1>
    %922 = vector.broadcast %cst_325 : f32 to vector<8x8xf32>
    %923 = arith.select %921, %922, %878 : vector<8x8xi1>, vector<8x8xf32>
    %c6_326 = arith.constant 6 : index
    %c0_327 = arith.constant 0 : index
    %c0_328 = arith.constant 0 : index
    %924 = vector.load %arg2[%c6_326, %c0_327, %c0_328] : memref<9x8x24xf32, #tpu.memory_space<vmem>>, vector<1x8x24xf32>
    %925 = vector.shape_cast %924 : vector<1x8x24xf32> to vector<8x24xf32>
    %926 = tpu.concatenate %901, %874, %923 in 0 : vector<8x8xf32>, vector<8x8xf32>, vector<8x8xf32> -> vector<24x8xf32>
    %cst_329 = arith.constant dense<0.000000e+00> : vector<8x8xf32>
    %927 = tpu.matmul %925, %926, %cst_329 {dimension_numbers = #tpu.dot_dimension_numbers<[1], [0], [0], [1], [0, 0, 1, 1], [], []>} : vector<8x24xf32>, vector<24x8xf32>, vector<8x8xf32> -> vector<8x8xf32>
    %c0_330 = arith.constant 0 : index
    %c26 = arith.constant 26 : index
    %928 = vector.load %arg5[%c0_330, %c26] : memref<8x42xf32, #tpu.memory_space<vmem>>, vector<8x1xf32>
    %929 = vector.broadcast %928 : vector<8x1xf32> to vector<8x8xf32>
    %930 = arith.mulf %927, %929 : vector<8x8xf32>
    %c0_331 = arith.constant 0 : index
    %c27 = arith.constant 27 : index
    %931 = vector.load %arg5[%c0_331, %c27] : memref<8x42xf32, #tpu.memory_space<vmem>>, vector<8x1xf32>
    %932 = vector.broadcast %931 : vector<8x1xf32> to vector<8x8xf32>
    %933 = arith.addf %930, %932 : vector<8x8xf32>
    %cst_332 = arith.constant 0.000000e+00 : f32
    %934 = vector.broadcast %cst_332 : f32 to vector<8x8xf32>
    %935 = arith.maximumf %933, %934 : vector<8x8xf32>
    %936 = vector.extract_strided_slice %935 {offsets = [0, 0], sizes = [8, 7], strides = [1, 1]} : vector<8x8xf32> to vector<8x7xf32>
    %937 = tpu.concatenate %5, %936 in 1 : vector<8x1xf32>, vector<8x7xf32> -> vector<8x8xf32>
    %938 = vector.extract_strided_slice %935 {offsets = [0, 1], sizes = [8, 7], strides = [1, 1]} : vector<8x8xf32> to vector<8x7xf32>
    %939 = tpu.concatenate %938, %5 in 1 : vector<8x7xf32>, vector<8x1xf32> -> vector<8x8xf32>
    %940 = tpu.iota {dimensions = array<i32: 1>} : vector<1x8xi32>
    %c4_i32_333 = arith.constant 4 : i32
    %c0_i32_334 = arith.constant 0 : i32
    %941 = arith.cmpi eq, %c4_i32_333, %c0_i32_334 : i32
    %c1_i32_335 = arith.constant 1 : i32
    %942 = arith.select %941, %c1_i32_335, %c4_i32_333 : i32
    %943 = vector.broadcast %942 : i32 to vector<1x8xi32>
    %944 = arith.remsi %940, %943 : vector<1x8xi32>
    %c0_i32_336 = arith.constant 0 : i32
    %945 = vector.broadcast %c0_i32_336 : i32 to vector<1x8xi32>
    %946 = arith.cmpi ne, %944, %945 : vector<1x8xi32>
    %c0_i32_337 = arith.constant 0 : i32
    %947 = vector.broadcast %c0_i32_337 : i32 to vector<1x8xi32>
    %948 = arith.cmpi slt, %944, %947 : vector<1x8xi32>
    %c0_i32_338 = arith.constant 0 : i32
    %949 = arith.cmpi slt, %942, %c0_i32_338 : i32
    %950 = vector.broadcast %949 : i1 to vector<1x8xi1>
    %951 = vector.broadcast %950 : vector<1x8xi1> to vector<1x8xi1>
    %952 = arith.xori %948, %951 : vector<1x8xi1>
    %953 = arith.andi %952, %946 : vector<1x8xi1>
    %954 = vector.broadcast %942 : i32 to vector<1x8xi32>
    %955 = arith.addi %944, %954 : vector<1x8xi32>
    %956 = arith.select %953, %955, %944 : vector<1x8xi1>, vector<1x8xi32>
    %c0_i32_339 = arith.constant 0 : i32
    %957 = vector.broadcast %c0_i32_339 : i32 to vector<1x8xi32>
    %958 = arith.cmpi eq, %956, %957 : vector<1x8xi32>
    %cst_340 = arith.constant 0.000000e+00 : f32
    %959 = vector.shape_cast %958 : vector<1x8xi1> to vector<1x8xi1>
    %960 = vector.broadcast %959 : vector<1x8xi1> to vector<8x8xi1>
    %961 = vector.broadcast %cst_340 : f32 to vector<8x8xf32>
    %962 = arith.select %960, %961, %937 : vector<8x8xi1>, vector<8x8xf32>
    %c4_i32_341 = arith.constant 4 : i32
    %c0_i32_342 = arith.constant 0 : i32
    %963 = arith.cmpi eq, %c4_i32_341, %c0_i32_342 : i32
    %c1_i32_343 = arith.constant 1 : i32
    %964 = arith.select %963, %c1_i32_343, %c4_i32_341 : i32
    %965 = vector.broadcast %964 : i32 to vector<1x8xi32>
    %966 = arith.remsi %940, %965 : vector<1x8xi32>
    %c0_i32_344 = arith.constant 0 : i32
    %967 = vector.broadcast %c0_i32_344 : i32 to vector<1x8xi32>
    %968 = arith.cmpi ne, %966, %967 : vector<1x8xi32>
    %c0_i32_345 = arith.constant 0 : i32
    %969 = vector.broadcast %c0_i32_345 : i32 to vector<1x8xi32>
    %970 = arith.cmpi slt, %966, %969 : vector<1x8xi32>
    %c0_i32_346 = arith.constant 0 : i32
    %971 = arith.cmpi slt, %964, %c0_i32_346 : i32
    %972 = vector.broadcast %971 : i1 to vector<1x8xi1>
    %973 = vector.broadcast %972 : vector<1x8xi1> to vector<1x8xi1>
    %974 = arith.xori %970, %973 : vector<1x8xi1>
    %975 = arith.andi %974, %968 : vector<1x8xi1>
    %976 = vector.broadcast %964 : i32 to vector<1x8xi32>
    %977 = arith.addi %966, %976 : vector<1x8xi32>
    %978 = arith.select %975, %977, %966 : vector<1x8xi1>, vector<1x8xi32>
    %c3_i32_347 = arith.constant 3 : i32
    %979 = vector.broadcast %c3_i32_347 : i32 to vector<1x8xi32>
    %980 = arith.cmpi eq, %978, %979 : vector<1x8xi32>
    %cst_348 = arith.constant 0.000000e+00 : f32
    %981 = vector.shape_cast %980 : vector<1x8xi1> to vector<1x8xi1>
    %982 = vector.broadcast %981 : vector<1x8xi1> to vector<8x8xi1>
    %983 = vector.broadcast %cst_348 : f32 to vector<8x8xf32>
    %984 = arith.select %982, %983, %939 : vector<8x8xi1>, vector<8x8xf32>
    %c6_349 = arith.constant 6 : index
    %c0_350 = arith.constant 0 : index
    %c0_351 = arith.constant 0 : index
    %985 = vector.load %arg3[%c6_349, %c0_350, %c0_351] : memref<9x8x32xf32, #tpu.memory_space<vmem>>, vector<1x8x32xf32>
    %986 = vector.shape_cast %985 : vector<1x8x32xf32> to vector<8x32xf32>
    %987 = tpu.concatenate %962, %935, %984, %866 in 0 : vector<8x8xf32>, vector<8x8xf32>, vector<8x8xf32>, vector<8x8xf32> -> vector<32x8xf32>
    %cst_352 = arith.constant dense<0.000000e+00> : vector<8x8xf32>
    %988 = tpu.matmul %986, %987, %cst_352 {dimension_numbers = #tpu.dot_dimension_numbers<[1], [0], [0], [1], [0, 0, 1, 1], [], []>} : vector<8x32xf32>, vector<32x8xf32>, vector<8x8xf32> -> vector<8x8xf32>
    %989 = vector.extract_strided_slice %988 {offsets = [0, 0], sizes = [8, 1], strides = [1, 1]} : vector<8x8xf32> to vector<8x1xf32>
    %990 = vector.extract_strided_slice %988 {offsets = [0, 1], sizes = [8, 1], strides = [1, 1]} : vector<8x8xf32> to vector<8x1xf32>
    %991 = vector.extract_strided_slice %988 {offsets = [0, 2], sizes = [8, 1], strides = [1, 1]} : vector<8x8xf32> to vector<8x1xf32>
    %992 = vector.extract_strided_slice %988 {offsets = [0, 3], sizes = [8, 1], strides = [1, 1]} : vector<8x8xf32> to vector<8x1xf32>
    %993 = vector.extract_strided_slice %988 {offsets = [0, 4], sizes = [8, 1], strides = [1, 1]} : vector<8x8xf32> to vector<8x1xf32>
    %994 = vector.extract_strided_slice %988 {offsets = [0, 5], sizes = [8, 1], strides = [1, 1]} : vector<8x8xf32> to vector<8x1xf32>
    %995 = vector.extract_strided_slice %988 {offsets = [0, 6], sizes = [8, 1], strides = [1, 1]} : vector<8x8xf32> to vector<8x1xf32>
    %996 = vector.extract_strided_slice %988 {offsets = [0, 7], sizes = [8, 1], strides = [1, 1]} : vector<8x8xf32> to vector<8x1xf32>
    %997 = tpu.concatenate %989, %989, %990, %990, %991, %991, %992, %992, %993, %993, %994, %994, %995, %995, %996, %996 in 1 : vector<8x1xf32>, vector<8x1xf32>, vector<8x1xf32>, vector<8x1xf32>, vector<8x1xf32>, vector<8x1xf32>, vector<8x1xf32>, vector<8x1xf32>, vector<8x1xf32>, vector<8x1xf32>, vector<8x1xf32>, vector<8x1xf32>, vector<8x1xf32>, vector<8x1xf32>, vector<8x1xf32>, vector<8x1xf32> -> vector<8x16xf32>
    %998 = arith.addf %997, %684 : vector<8x16xf32>
    %c0_353 = arith.constant 0 : index
    %c28 = arith.constant 28 : index
    %999 = vector.load %arg5[%c0_353, %c28] : memref<8x42xf32, #tpu.memory_space<vmem>>, vector<8x1xf32>
    %1000 = vector.broadcast %999 : vector<8x1xf32> to vector<8x16xf32>
    %1001 = arith.mulf %998, %1000 : vector<8x16xf32>
    %c0_354 = arith.constant 0 : index
    %c29 = arith.constant 29 : index
    %1002 = vector.load %arg5[%c0_354, %c29] : memref<8x42xf32, #tpu.memory_space<vmem>>, vector<8x1xf32>
    %1003 = vector.broadcast %1002 : vector<8x1xf32> to vector<8x16xf32>
    %1004 = arith.addf %1001, %1003 : vector<8x16xf32>
    %cst_355 = arith.constant 0.000000e+00 : f32
    %1005 = vector.broadcast %cst_355 : f32 to vector<8x16xf32>
    %1006 = arith.maximumf %1004, %1005 : vector<8x16xf32>
    %1007 = vector.extract_strided_slice %1006 {offsets = [0, 0], sizes = [8, 15], strides = [1, 1]} : vector<8x16xf32> to vector<8x15xf32>
    %1008 = tpu.concatenate %5, %1007 in 1 : vector<8x1xf32>, vector<8x15xf32> -> vector<8x16xf32>
    %1009 = vector.extract_strided_slice %1006 {offsets = [0, 1], sizes = [8, 15], strides = [1, 1]} : vector<8x16xf32> to vector<8x15xf32>
    %1010 = tpu.concatenate %1009, %5 in 1 : vector<8x15xf32>, vector<8x1xf32> -> vector<8x16xf32>
    %1011 = tpu.iota {dimensions = array<i32: 1>} : vector<1x16xi32>
    %c8_i32_356 = arith.constant 8 : i32
    %c0_i32_357 = arith.constant 0 : i32
    %1012 = arith.cmpi eq, %c8_i32_356, %c0_i32_357 : i32
    %c1_i32_358 = arith.constant 1 : i32
    %1013 = arith.select %1012, %c1_i32_358, %c8_i32_356 : i32
    %1014 = vector.broadcast %1013 : i32 to vector<1x16xi32>
    %1015 = arith.remsi %1011, %1014 : vector<1x16xi32>
    %c0_i32_359 = arith.constant 0 : i32
    %1016 = vector.broadcast %c0_i32_359 : i32 to vector<1x16xi32>
    %1017 = arith.cmpi ne, %1015, %1016 : vector<1x16xi32>
    %c0_i32_360 = arith.constant 0 : i32
    %1018 = vector.broadcast %c0_i32_360 : i32 to vector<1x16xi32>
    %1019 = arith.cmpi slt, %1015, %1018 : vector<1x16xi32>
    %c0_i32_361 = arith.constant 0 : i32
    %1020 = arith.cmpi slt, %1013, %c0_i32_361 : i32
    %1021 = vector.broadcast %1020 : i1 to vector<1x16xi1>
    %1022 = vector.broadcast %1021 : vector<1x16xi1> to vector<1x16xi1>
    %1023 = arith.xori %1019, %1022 : vector<1x16xi1>
    %1024 = arith.andi %1023, %1017 : vector<1x16xi1>
    %1025 = vector.broadcast %1013 : i32 to vector<1x16xi32>
    %1026 = arith.addi %1015, %1025 : vector<1x16xi32>
    %1027 = arith.select %1024, %1026, %1015 : vector<1x16xi1>, vector<1x16xi32>
    %c0_i32_362 = arith.constant 0 : i32
    %1028 = vector.broadcast %c0_i32_362 : i32 to vector<1x16xi32>
    %1029 = arith.cmpi eq, %1027, %1028 : vector<1x16xi32>
    %cst_363 = arith.constant 0.000000e+00 : f32
    %1030 = vector.shape_cast %1029 : vector<1x16xi1> to vector<1x16xi1>
    %1031 = vector.broadcast %1030 : vector<1x16xi1> to vector<8x16xi1>
    %1032 = vector.broadcast %cst_363 : f32 to vector<8x16xf32>
    %1033 = arith.select %1031, %1032, %1008 : vector<8x16xi1>, vector<8x16xf32>
    %c8_i32_364 = arith.constant 8 : i32
    %c0_i32_365 = arith.constant 0 : i32
    %1034 = arith.cmpi eq, %c8_i32_364, %c0_i32_365 : i32
    %c1_i32_366 = arith.constant 1 : i32
    %1035 = arith.select %1034, %c1_i32_366, %c8_i32_364 : i32
    %1036 = vector.broadcast %1035 : i32 to vector<1x16xi32>
    %1037 = arith.remsi %1011, %1036 : vector<1x16xi32>
    %c0_i32_367 = arith.constant 0 : i32
    %1038 = vector.broadcast %c0_i32_367 : i32 to vector<1x16xi32>
    %1039 = arith.cmpi ne, %1037, %1038 : vector<1x16xi32>
    %c0_i32_368 = arith.constant 0 : i32
    %1040 = vector.broadcast %c0_i32_368 : i32 to vector<1x16xi32>
    %1041 = arith.cmpi slt, %1037, %1040 : vector<1x16xi32>
    %c0_i32_369 = arith.constant 0 : i32
    %1042 = arith.cmpi slt, %1035, %c0_i32_369 : i32
    %1043 = vector.broadcast %1042 : i1 to vector<1x16xi1>
    %1044 = vector.broadcast %1043 : vector<1x16xi1> to vector<1x16xi1>
    %1045 = arith.xori %1041, %1044 : vector<1x16xi1>
    %1046 = arith.andi %1045, %1039 : vector<1x16xi1>
    %1047 = vector.broadcast %1035 : i32 to vector<1x16xi32>
    %1048 = arith.addi %1037, %1047 : vector<1x16xi32>
    %1049 = arith.select %1046, %1048, %1037 : vector<1x16xi1>, vector<1x16xi32>
    %c7_i32_370 = arith.constant 7 : i32
    %1050 = vector.broadcast %c7_i32_370 : i32 to vector<1x16xi32>
    %1051 = arith.cmpi eq, %1049, %1050 : vector<1x16xi32>
    %cst_371 = arith.constant 0.000000e+00 : f32
    %1052 = vector.shape_cast %1051 : vector<1x16xi1> to vector<1x16xi1>
    %1053 = vector.broadcast %1052 : vector<1x16xi1> to vector<8x16xi1>
    %1054 = vector.broadcast %cst_371 : f32 to vector<8x16xf32>
    %1055 = arith.select %1053, %1054, %1010 : vector<8x16xi1>, vector<8x16xf32>
    %c7_372 = arith.constant 7 : index
    %c0_373 = arith.constant 0 : index
    %c0_374 = arith.constant 0 : index
    %1056 = vector.load %arg2[%c7_372, %c0_373, %c0_374] : memref<9x8x24xf32, #tpu.memory_space<vmem>>, vector<1x8x24xf32>
    %1057 = vector.shape_cast %1056 : vector<1x8x24xf32> to vector<8x24xf32>
    %1058 = tpu.concatenate %1033, %1006, %1055 in 0 : vector<8x16xf32>, vector<8x16xf32>, vector<8x16xf32> -> vector<24x16xf32>
    %cst_375 = arith.constant dense<0.000000e+00> : vector<8x16xf32>
    %1059 = tpu.matmul %1057, %1058, %cst_375 {dimension_numbers = #tpu.dot_dimension_numbers<[1], [0], [0], [1], [0, 0, 1, 1], [], []>} : vector<8x24xf32>, vector<24x16xf32>, vector<8x16xf32> -> vector<8x16xf32>
    %c0_376 = arith.constant 0 : index
    %c30 = arith.constant 30 : index
    %1060 = vector.load %arg5[%c0_376, %c30] : memref<8x42xf32, #tpu.memory_space<vmem>>, vector<8x1xf32>
    %1061 = vector.broadcast %1060 : vector<8x1xf32> to vector<8x16xf32>
    %1062 = arith.mulf %1059, %1061 : vector<8x16xf32>
    %c0_377 = arith.constant 0 : index
    %c31 = arith.constant 31 : index
    %1063 = vector.load %arg5[%c0_377, %c31] : memref<8x42xf32, #tpu.memory_space<vmem>>, vector<8x1xf32>
    %1064 = vector.broadcast %1063 : vector<8x1xf32> to vector<8x16xf32>
    %1065 = arith.addf %1062, %1064 : vector<8x16xf32>
    %cst_378 = arith.constant 0.000000e+00 : f32
    %1066 = vector.broadcast %cst_378 : f32 to vector<8x16xf32>
    %1067 = arith.maximumf %1065, %1066 : vector<8x16xf32>
    %1068 = vector.extract_strided_slice %1067 {offsets = [0, 0], sizes = [8, 15], strides = [1, 1]} : vector<8x16xf32> to vector<8x15xf32>
    %1069 = tpu.concatenate %5, %1068 in 1 : vector<8x1xf32>, vector<8x15xf32> -> vector<8x16xf32>
    %1070 = vector.extract_strided_slice %1067 {offsets = [0, 1], sizes = [8, 15], strides = [1, 1]} : vector<8x16xf32> to vector<8x15xf32>
    %1071 = tpu.concatenate %1070, %5 in 1 : vector<8x15xf32>, vector<8x1xf32> -> vector<8x16xf32>
    %1072 = tpu.iota {dimensions = array<i32: 1>} : vector<1x16xi32>
    %c8_i32_379 = arith.constant 8 : i32
    %c0_i32_380 = arith.constant 0 : i32
    %1073 = arith.cmpi eq, %c8_i32_379, %c0_i32_380 : i32
    %c1_i32_381 = arith.constant 1 : i32
    %1074 = arith.select %1073, %c1_i32_381, %c8_i32_379 : i32
    %1075 = vector.broadcast %1074 : i32 to vector<1x16xi32>
    %1076 = arith.remsi %1072, %1075 : vector<1x16xi32>
    %c0_i32_382 = arith.constant 0 : i32
    %1077 = vector.broadcast %c0_i32_382 : i32 to vector<1x16xi32>
    %1078 = arith.cmpi ne, %1076, %1077 : vector<1x16xi32>
    %c0_i32_383 = arith.constant 0 : i32
    %1079 = vector.broadcast %c0_i32_383 : i32 to vector<1x16xi32>
    %1080 = arith.cmpi slt, %1076, %1079 : vector<1x16xi32>
    %c0_i32_384 = arith.constant 0 : i32
    %1081 = arith.cmpi slt, %1074, %c0_i32_384 : i32
    %1082 = vector.broadcast %1081 : i1 to vector<1x16xi1>
    %1083 = vector.broadcast %1082 : vector<1x16xi1> to vector<1x16xi1>
    %1084 = arith.xori %1080, %1083 : vector<1x16xi1>
    %1085 = arith.andi %1084, %1078 : vector<1x16xi1>
    %1086 = vector.broadcast %1074 : i32 to vector<1x16xi32>
    %1087 = arith.addi %1076, %1086 : vector<1x16xi32>
    %1088 = arith.select %1085, %1087, %1076 : vector<1x16xi1>, vector<1x16xi32>
    %c0_i32_385 = arith.constant 0 : i32
    %1089 = vector.broadcast %c0_i32_385 : i32 to vector<1x16xi32>
    %1090 = arith.cmpi eq, %1088, %1089 : vector<1x16xi32>
    %cst_386 = arith.constant 0.000000e+00 : f32
    %1091 = vector.shape_cast %1090 : vector<1x16xi1> to vector<1x16xi1>
    %1092 = vector.broadcast %1091 : vector<1x16xi1> to vector<8x16xi1>
    %1093 = vector.broadcast %cst_386 : f32 to vector<8x16xf32>
    %1094 = arith.select %1092, %1093, %1069 : vector<8x16xi1>, vector<8x16xf32>
    %c8_i32_387 = arith.constant 8 : i32
    %c0_i32_388 = arith.constant 0 : i32
    %1095 = arith.cmpi eq, %c8_i32_387, %c0_i32_388 : i32
    %c1_i32_389 = arith.constant 1 : i32
    %1096 = arith.select %1095, %c1_i32_389, %c8_i32_387 : i32
    %1097 = vector.broadcast %1096 : i32 to vector<1x16xi32>
    %1098 = arith.remsi %1072, %1097 : vector<1x16xi32>
    %c0_i32_390 = arith.constant 0 : i32
    %1099 = vector.broadcast %c0_i32_390 : i32 to vector<1x16xi32>
    %1100 = arith.cmpi ne, %1098, %1099 : vector<1x16xi32>
    %c0_i32_391 = arith.constant 0 : i32
    %1101 = vector.broadcast %c0_i32_391 : i32 to vector<1x16xi32>
    %1102 = arith.cmpi slt, %1098, %1101 : vector<1x16xi32>
    %c0_i32_392 = arith.constant 0 : i32
    %1103 = arith.cmpi slt, %1096, %c0_i32_392 : i32
    %1104 = vector.broadcast %1103 : i1 to vector<1x16xi1>
    %1105 = vector.broadcast %1104 : vector<1x16xi1> to vector<1x16xi1>
    %1106 = arith.xori %1102, %1105 : vector<1x16xi1>
    %1107 = arith.andi %1106, %1100 : vector<1x16xi1>
    %1108 = vector.broadcast %1096 : i32 to vector<1x16xi32>
    %1109 = arith.addi %1098, %1108 : vector<1x16xi32>
    %1110 = arith.select %1107, %1109, %1098 : vector<1x16xi1>, vector<1x16xi32>
    %c7_i32_393 = arith.constant 7 : i32
    %1111 = vector.broadcast %c7_i32_393 : i32 to vector<1x16xi32>
    %1112 = arith.cmpi eq, %1110, %1111 : vector<1x16xi32>
    %cst_394 = arith.constant 0.000000e+00 : f32
    %1113 = vector.shape_cast %1112 : vector<1x16xi1> to vector<1x16xi1>
    %1114 = vector.broadcast %1113 : vector<1x16xi1> to vector<8x16xi1>
    %1115 = vector.broadcast %cst_394 : f32 to vector<8x16xf32>
    %1116 = arith.select %1114, %1115, %1071 : vector<8x16xi1>, vector<8x16xf32>
    %c7_395 = arith.constant 7 : index
    %c0_396 = arith.constant 0 : index
    %c0_397 = arith.constant 0 : index
    %1117 = vector.load %arg3[%c7_395, %c0_396, %c0_397] : memref<9x8x32xf32, #tpu.memory_space<vmem>>, vector<1x8x32xf32>
    %1118 = vector.shape_cast %1117 : vector<1x8x32xf32> to vector<8x32xf32>
    %1119 = tpu.concatenate %1094, %1067, %1116, %998 in 0 : vector<8x16xf32>, vector<8x16xf32>, vector<8x16xf32>, vector<8x16xf32> -> vector<32x16xf32>
    %cst_398 = arith.constant dense<0.000000e+00> : vector<8x16xf32>
    %1120 = tpu.matmul %1118, %1119, %cst_398 {dimension_numbers = #tpu.dot_dimension_numbers<[1], [0], [0], [1], [0, 0, 1, 1], [], []>} : vector<8x32xf32>, vector<32x16xf32>, vector<8x16xf32> -> vector<8x16xf32>
    %1121 = vector.extract_strided_slice %1120 {offsets = [0, 0], sizes = [8, 1], strides = [1, 1]} : vector<8x16xf32> to vector<8x1xf32>
    %1122 = vector.extract_strided_slice %1120 {offsets = [0, 1], sizes = [8, 1], strides = [1, 1]} : vector<8x16xf32> to vector<8x1xf32>
    %1123 = vector.extract_strided_slice %1120 {offsets = [0, 2], sizes = [8, 1], strides = [1, 1]} : vector<8x16xf32> to vector<8x1xf32>
    %1124 = vector.extract_strided_slice %1120 {offsets = [0, 3], sizes = [8, 1], strides = [1, 1]} : vector<8x16xf32> to vector<8x1xf32>
    %1125 = vector.extract_strided_slice %1120 {offsets = [0, 4], sizes = [8, 1], strides = [1, 1]} : vector<8x16xf32> to vector<8x1xf32>
    %1126 = vector.extract_strided_slice %1120 {offsets = [0, 5], sizes = [8, 1], strides = [1, 1]} : vector<8x16xf32> to vector<8x1xf32>
    %1127 = vector.extract_strided_slice %1120 {offsets = [0, 6], sizes = [8, 1], strides = [1, 1]} : vector<8x16xf32> to vector<8x1xf32>
    %1128 = vector.extract_strided_slice %1120 {offsets = [0, 7], sizes = [8, 1], strides = [1, 1]} : vector<8x16xf32> to vector<8x1xf32>
    %1129 = vector.extract_strided_slice %1120 {offsets = [0, 8], sizes = [8, 1], strides = [1, 1]} : vector<8x16xf32> to vector<8x1xf32>
    %1130 = vector.extract_strided_slice %1120 {offsets = [0, 9], sizes = [8, 1], strides = [1, 1]} : vector<8x16xf32> to vector<8x1xf32>
    %1131 = vector.extract_strided_slice %1120 {offsets = [0, 10], sizes = [8, 1], strides = [1, 1]} : vector<8x16xf32> to vector<8x1xf32>
    %1132 = vector.extract_strided_slice %1120 {offsets = [0, 11], sizes = [8, 1], strides = [1, 1]} : vector<8x16xf32> to vector<8x1xf32>
    %1133 = vector.extract_strided_slice %1120 {offsets = [0, 12], sizes = [8, 1], strides = [1, 1]} : vector<8x16xf32> to vector<8x1xf32>
    %1134 = vector.extract_strided_slice %1120 {offsets = [0, 13], sizes = [8, 1], strides = [1, 1]} : vector<8x16xf32> to vector<8x1xf32>
    %1135 = vector.extract_strided_slice %1120 {offsets = [0, 14], sizes = [8, 1], strides = [1, 1]} : vector<8x16xf32> to vector<8x1xf32>
    %1136 = vector.extract_strided_slice %1120 {offsets = [0, 15], sizes = [8, 1], strides = [1, 1]} : vector<8x16xf32> to vector<8x1xf32>
    %1137 = tpu.concatenate %1121, %1121, %1122, %1122, %1123, %1123, %1124, %1124, %1125, %1125, %1126, %1126, %1127, %1127, %1128, %1128 in 1 : vector<8x1xf32>, vector<8x1xf32>, vector<8x1xf32>, vector<8x1xf32>, vector<8x1xf32>, vector<8x1xf32>, vector<8x1xf32>, vector<8x1xf32>, vector<8x1xf32>, vector<8x1xf32>, vector<8x1xf32>, vector<8x1xf32>, vector<8x1xf32>, vector<8x1xf32>, vector<8x1xf32>, vector<8x1xf32> -> vector<8x16xf32>
    %1138 = tpu.concatenate %1129, %1129, %1130, %1130, %1131, %1131, %1132, %1132, %1133, %1133, %1134, %1134, %1135, %1135, %1136, %1136 in 1 : vector<8x1xf32>, vector<8x1xf32>, vector<8x1xf32>, vector<8x1xf32>, vector<8x1xf32>, vector<8x1xf32>, vector<8x1xf32>, vector<8x1xf32>, vector<8x1xf32>, vector<8x1xf32>, vector<8x1xf32>, vector<8x1xf32>, vector<8x1xf32>, vector<8x1xf32>, vector<8x1xf32>, vector<8x1xf32> -> vector<8x16xf32>
    %1139 = tpu.concatenate %1137, %1138 in 1 : vector<8x16xf32>, vector<8x16xf32> -> vector<8x32xf32>
    %c0_399 = arith.constant 0 : index
    %c36 = arith.constant 36 : index
    %1140 = vector.load %arg5[%c0_399, %c36] : memref<8x42xf32, #tpu.memory_space<vmem>>, vector<8x1xf32>
    %1141 = vector.broadcast %1140 : vector<8x1xf32> to vector<8x32xf32>
    %1142 = arith.mulf %1139, %1141 : vector<8x32xf32>
    %c0_400 = arith.constant 0 : index
    %c37 = arith.constant 37 : index
    %1143 = vector.load %arg5[%c0_400, %c37] : memref<8x42xf32, #tpu.memory_space<vmem>>, vector<8x1xf32>
    %1144 = vector.broadcast %1143 : vector<8x1xf32> to vector<8x32xf32>
    %1145 = arith.addf %1142, %1144 : vector<8x32xf32>
    %cst_401 = arith.constant 0.000000e+00 : f32
    %1146 = vector.broadcast %cst_401 : f32 to vector<8x32xf32>
    %1147 = arith.maximumf %1145, %1146 : vector<8x32xf32>
    %c0_402 = arith.constant 0 : index
    %c0_403 = arith.constant 0 : index
    %c0_404 = arith.constant 0 : index
    %1148 = vector.load %arg4[%c0_402, %c0_403, %c0_404] : memref<2x8x8xf32, #tpu.memory_space<vmem>>, vector<1x8x8xf32>
    %1149 = vector.shape_cast %1148 : vector<1x8x8xf32> to vector<8x8xf32>
    %cst_405 = arith.constant dense<0.000000e+00> : vector<8x32xf32>
    %1150 = tpu.matmul %1149, %1147, %cst_405 {dimension_numbers = #tpu.dot_dimension_numbers<[1], [0], [0], [1], [0, 0, 1, 1], [], []>} : vector<8x8xf32>, vector<8x32xf32>, vector<8x32xf32> -> vector<8x32xf32>
    %c0_406 = arith.constant 0 : index
    %c38 = arith.constant 38 : index
    %1151 = vector.load %arg5[%c0_406, %c38] : memref<8x42xf32, #tpu.memory_space<vmem>>, vector<8x1xf32>
    %1152 = vector.broadcast %1151 : vector<8x1xf32> to vector<8x32xf32>
    %1153 = arith.addf %1150, %1152 : vector<8x32xf32>
    %c0_407 = arith.constant 0 : index
    %c39 = arith.constant 39 : index
    %1154 = vector.load %arg5[%c0_407, %c39] : memref<8x42xf32, #tpu.memory_space<vmem>>, vector<8x1xf32>
    %1155 = vector.broadcast %1154 : vector<8x1xf32> to vector<8x32xf32>
    %1156 = arith.mulf %1153, %1155 : vector<8x32xf32>
    %c0_408 = arith.constant 0 : index
    %c40 = arith.constant 40 : index
    %1157 = vector.load %arg5[%c0_408, %c40] : memref<8x42xf32, #tpu.memory_space<vmem>>, vector<8x1xf32>
    %1158 = vector.broadcast %1157 : vector<8x1xf32> to vector<8x32xf32>
    %1159 = arith.addf %1156, %1158 : vector<8x32xf32>
    %cst_409 = arith.constant 0.000000e+00 : f32
    %1160 = vector.broadcast %cst_409 : f32 to vector<8x32xf32>
    %1161 = arith.maximumf %1159, %1160 : vector<8x32xf32>
    %c1_410 = arith.constant 1 : index
    %c0_411 = arith.constant 0 : index
    %c0_412 = arith.constant 0 : index
    %1162 = vector.load %arg4[%c1_410, %c0_411, %c0_412] : memref<2x8x8xf32, #tpu.memory_space<vmem>>, vector<1x8x8xf32>
    %1163 = vector.shape_cast %1162 : vector<1x8x8xf32> to vector<8x8xf32>
    %cst_413 = arith.constant dense<0.000000e+00> : vector<8x32xf32>
    %1164 = tpu.matmul %1163, %1161, %cst_413 {dimension_numbers = #tpu.dot_dimension_numbers<[1], [0], [0], [1], [0, 0, 1, 1], [], []>} : vector<8x8xf32>, vector<8x32xf32>, vector<8x32xf32> -> vector<8x32xf32>
    %c0_414 = arith.constant 0 : index
    %c41 = arith.constant 41 : index
    %1165 = vector.load %arg5[%c0_414, %c41] : memref<8x42xf32, #tpu.memory_space<vmem>>, vector<8x1xf32>
    %1166 = vector.broadcast %1165 : vector<8x1xf32> to vector<8x32xf32>
    %1167 = arith.addf %1164, %1166 : vector<8x32xf32>
    %1168 = arith.negf %1167 : vector<8x32xf32>
    %1169 = math.exp %1168 : vector<8x32xf32>
    %cst_415 = arith.constant 1.000000e+00 : f32
    %1170 = vector.broadcast %cst_415 : f32 to vector<8x32xf32>
    %1171 = arith.addf %1170, %1169 : vector<8x32xf32>
    %1172 = arith.divf %1170, %1171 : vector<8x32xf32>
    %cst_416 = arith.constant 1.000000e+00 : f32
    %1173 = vector.broadcast %cst_416 : f32 to vector<8x32xf32>
    %1174 = arith.addf %1173, %1172 : vector<8x32xf32>
    %1175 = arith.mulf %1174, %372 : vector<8x32xf32>
    %c0_417 = arith.constant 0 : index
    %c32 = arith.constant 32 : index
    %1176 = vector.load %arg5[%c0_417, %c32] : memref<8x42xf32, #tpu.memory_space<vmem>>, vector<8x1xf32>
    %1177 = vector.broadcast %1176 : vector<8x1xf32> to vector<8x32xf32>
    %1178 = arith.mulf %1175, %1177 : vector<8x32xf32>
    %c0_418 = arith.constant 0 : index
    %c33 = arith.constant 33 : index
    %1179 = vector.load %arg5[%c0_418, %c33] : memref<8x42xf32, #tpu.memory_space<vmem>>, vector<8x1xf32>
    %1180 = vector.broadcast %1179 : vector<8x1xf32> to vector<8x32xf32>
    %1181 = arith.addf %1178, %1180 : vector<8x32xf32>
    %cst_419 = arith.constant 0.000000e+00 : f32
    %1182 = vector.broadcast %cst_419 : f32 to vector<8x32xf32>
    %1183 = arith.maximumf %1181, %1182 : vector<8x32xf32>
    %1184 = vector.extract_strided_slice %1183 {offsets = [0, 0], sizes = [8, 31], strides = [1, 1]} : vector<8x32xf32> to vector<8x31xf32>
    %1185 = tpu.concatenate %5, %1184 in 1 : vector<8x1xf32>, vector<8x31xf32> -> vector<8x32xf32>
    %1186 = vector.extract_strided_slice %1183 {offsets = [0, 1], sizes = [8, 31], strides = [1, 1]} : vector<8x32xf32> to vector<8x31xf32>
    %1187 = tpu.concatenate %1186, %5 in 1 : vector<8x31xf32>, vector<8x1xf32> -> vector<8x32xf32>
    %1188 = tpu.iota {dimensions = array<i32: 1>} : vector<1x32xi32>
    %c16_i32_420 = arith.constant 16 : i32
    %c0_i32_421 = arith.constant 0 : i32
    %1189 = arith.cmpi eq, %c16_i32_420, %c0_i32_421 : i32
    %c1_i32_422 = arith.constant 1 : i32
    %1190 = arith.select %1189, %c1_i32_422, %c16_i32_420 : i32
    %1191 = vector.broadcast %1190 : i32 to vector<1x32xi32>
    %1192 = arith.remsi %1188, %1191 : vector<1x32xi32>
    %c0_i32_423 = arith.constant 0 : i32
    %1193 = vector.broadcast %c0_i32_423 : i32 to vector<1x32xi32>
    %1194 = arith.cmpi ne, %1192, %1193 : vector<1x32xi32>
    %c0_i32_424 = arith.constant 0 : i32
    %1195 = vector.broadcast %c0_i32_424 : i32 to vector<1x32xi32>
    %1196 = arith.cmpi slt, %1192, %1195 : vector<1x32xi32>
    %c0_i32_425 = arith.constant 0 : i32
    %1197 = arith.cmpi slt, %1190, %c0_i32_425 : i32
    %1198 = vector.broadcast %1197 : i1 to vector<1x32xi1>
    %1199 = vector.broadcast %1198 : vector<1x32xi1> to vector<1x32xi1>
    %1200 = arith.xori %1196, %1199 : vector<1x32xi1>
    %1201 = arith.andi %1200, %1194 : vector<1x32xi1>
    %1202 = vector.broadcast %1190 : i32 to vector<1x32xi32>
    %1203 = arith.addi %1192, %1202 : vector<1x32xi32>
    %1204 = arith.select %1201, %1203, %1192 : vector<1x32xi1>, vector<1x32xi32>
    %c0_i32_426 = arith.constant 0 : i32
    %1205 = vector.broadcast %c0_i32_426 : i32 to vector<1x32xi32>
    %1206 = arith.cmpi eq, %1204, %1205 : vector<1x32xi32>
    %cst_427 = arith.constant 0.000000e+00 : f32
    %1207 = vector.shape_cast %1206 : vector<1x32xi1> to vector<1x32xi1>
    %1208 = vector.broadcast %1207 : vector<1x32xi1> to vector<8x32xi1>
    %1209 = vector.broadcast %cst_427 : f32 to vector<8x32xf32>
    %1210 = arith.select %1208, %1209, %1185 : vector<8x32xi1>, vector<8x32xf32>
    %c16_i32_428 = arith.constant 16 : i32
    %c0_i32_429 = arith.constant 0 : i32
    %1211 = arith.cmpi eq, %c16_i32_428, %c0_i32_429 : i32
    %c1_i32_430 = arith.constant 1 : i32
    %1212 = arith.select %1211, %c1_i32_430, %c16_i32_428 : i32
    %1213 = vector.broadcast %1212 : i32 to vector<1x32xi32>
    %1214 = arith.remsi %1188, %1213 : vector<1x32xi32>
    %c0_i32_431 = arith.constant 0 : i32
    %1215 = vector.broadcast %c0_i32_431 : i32 to vector<1x32xi32>
    %1216 = arith.cmpi ne, %1214, %1215 : vector<1x32xi32>
    %c0_i32_432 = arith.constant 0 : i32
    %1217 = vector.broadcast %c0_i32_432 : i32 to vector<1x32xi32>
    %1218 = arith.cmpi slt, %1214, %1217 : vector<1x32xi32>
    %c0_i32_433 = arith.constant 0 : i32
    %1219 = arith.cmpi slt, %1212, %c0_i32_433 : i32
    %1220 = vector.broadcast %1219 : i1 to vector<1x32xi1>
    %1221 = vector.broadcast %1220 : vector<1x32xi1> to vector<1x32xi1>
    %1222 = arith.xori %1218, %1221 : vector<1x32xi1>
    %1223 = arith.andi %1222, %1216 : vector<1x32xi1>
    %1224 = vector.broadcast %1212 : i32 to vector<1x32xi32>
    %1225 = arith.addi %1214, %1224 : vector<1x32xi32>
    %1226 = arith.select %1223, %1225, %1214 : vector<1x32xi1>, vector<1x32xi32>
    %c15_i32_434 = arith.constant 15 : i32
    %1227 = vector.broadcast %c15_i32_434 : i32 to vector<1x32xi32>
    %1228 = arith.cmpi eq, %1226, %1227 : vector<1x32xi32>
    %cst_435 = arith.constant 0.000000e+00 : f32
    %1229 = vector.shape_cast %1228 : vector<1x32xi1> to vector<1x32xi1>
    %1230 = vector.broadcast %1229 : vector<1x32xi1> to vector<8x32xi1>
    %1231 = vector.broadcast %cst_435 : f32 to vector<8x32xf32>
    %1232 = arith.select %1230, %1231, %1187 : vector<8x32xi1>, vector<8x32xf32>
    %c8_436 = arith.constant 8 : index
    %c0_437 = arith.constant 0 : index
    %c0_438 = arith.constant 0 : index
    %1233 = vector.load %arg2[%c8_436, %c0_437, %c0_438] : memref<9x8x24xf32, #tpu.memory_space<vmem>>, vector<1x8x24xf32>
    %1234 = vector.shape_cast %1233 : vector<1x8x24xf32> to vector<8x24xf32>
    %1235 = tpu.concatenate %1210, %1183, %1232 in 0 : vector<8x32xf32>, vector<8x32xf32>, vector<8x32xf32> -> vector<24x32xf32>
    %cst_439 = arith.constant dense<0.000000e+00> : vector<8x32xf32>
    %1236 = tpu.matmul %1234, %1235, %cst_439 {dimension_numbers = #tpu.dot_dimension_numbers<[1], [0], [0], [1], [0, 0, 1, 1], [], []>} : vector<8x24xf32>, vector<24x32xf32>, vector<8x32xf32> -> vector<8x32xf32>
    %c0_440 = arith.constant 0 : index
    %c34 = arith.constant 34 : index
    %1237 = vector.load %arg5[%c0_440, %c34] : memref<8x42xf32, #tpu.memory_space<vmem>>, vector<8x1xf32>
    %1238 = vector.broadcast %1237 : vector<8x1xf32> to vector<8x32xf32>
    %1239 = arith.mulf %1236, %1238 : vector<8x32xf32>
    %c0_441 = arith.constant 0 : index
    %c35 = arith.constant 35 : index
    %1240 = vector.load %arg5[%c0_441, %c35] : memref<8x42xf32, #tpu.memory_space<vmem>>, vector<8x1xf32>
    %1241 = vector.broadcast %1240 : vector<8x1xf32> to vector<8x32xf32>
    %1242 = arith.addf %1239, %1241 : vector<8x32xf32>
    %cst_442 = arith.constant 0.000000e+00 : f32
    %1243 = vector.broadcast %cst_442 : f32 to vector<8x32xf32>
    %1244 = arith.maximumf %1242, %1243 : vector<8x32xf32>
    %1245 = vector.extract_strided_slice %1244 {offsets = [0, 0], sizes = [8, 31], strides = [1, 1]} : vector<8x32xf32> to vector<8x31xf32>
    %1246 = tpu.concatenate %5, %1245 in 1 : vector<8x1xf32>, vector<8x31xf32> -> vector<8x32xf32>
    %1247 = vector.extract_strided_slice %1244 {offsets = [0, 1], sizes = [8, 31], strides = [1, 1]} : vector<8x32xf32> to vector<8x31xf32>
    %1248 = tpu.concatenate %1247, %5 in 1 : vector<8x31xf32>, vector<8x1xf32> -> vector<8x32xf32>
    %1249 = tpu.iota {dimensions = array<i32: 1>} : vector<1x32xi32>
    %c16_i32_443 = arith.constant 16 : i32
    %c0_i32_444 = arith.constant 0 : i32
    %1250 = arith.cmpi eq, %c16_i32_443, %c0_i32_444 : i32
    %c1_i32_445 = arith.constant 1 : i32
    %1251 = arith.select %1250, %c1_i32_445, %c16_i32_443 : i32
    %1252 = vector.broadcast %1251 : i32 to vector<1x32xi32>
    %1253 = arith.remsi %1249, %1252 : vector<1x32xi32>
    %c0_i32_446 = arith.constant 0 : i32
    %1254 = vector.broadcast %c0_i32_446 : i32 to vector<1x32xi32>
    %1255 = arith.cmpi ne, %1253, %1254 : vector<1x32xi32>
    %c0_i32_447 = arith.constant 0 : i32
    %1256 = vector.broadcast %c0_i32_447 : i32 to vector<1x32xi32>
    %1257 = arith.cmpi slt, %1253, %1256 : vector<1x32xi32>
    %c0_i32_448 = arith.constant 0 : i32
    %1258 = arith.cmpi slt, %1251, %c0_i32_448 : i32
    %1259 = vector.broadcast %1258 : i1 to vector<1x32xi1>
    %1260 = vector.broadcast %1259 : vector<1x32xi1> to vector<1x32xi1>
    %1261 = arith.xori %1257, %1260 : vector<1x32xi1>
    %1262 = arith.andi %1261, %1255 : vector<1x32xi1>
    %1263 = vector.broadcast %1251 : i32 to vector<1x32xi32>
    %1264 = arith.addi %1253, %1263 : vector<1x32xi32>
    %1265 = arith.select %1262, %1264, %1253 : vector<1x32xi1>, vector<1x32xi32>
    %c0_i32_449 = arith.constant 0 : i32
    %1266 = vector.broadcast %c0_i32_449 : i32 to vector<1x32xi32>
    %1267 = arith.cmpi eq, %1265, %1266 : vector<1x32xi32>
    %cst_450 = arith.constant 0.000000e+00 : f32
    %1268 = vector.shape_cast %1267 : vector<1x32xi1> to vector<1x32xi1>
    %1269 = vector.broadcast %1268 : vector<1x32xi1> to vector<8x32xi1>
    %1270 = vector.broadcast %cst_450 : f32 to vector<8x32xf32>
    %1271 = arith.select %1269, %1270, %1246 : vector<8x32xi1>, vector<8x32xf32>
    %c16_i32_451 = arith.constant 16 : i32
    %c0_i32_452 = arith.constant 0 : i32
    %1272 = arith.cmpi eq, %c16_i32_451, %c0_i32_452 : i32
    %c1_i32_453 = arith.constant 1 : i32
    %1273 = arith.select %1272, %c1_i32_453, %c16_i32_451 : i32
    %1274 = vector.broadcast %1273 : i32 to vector<1x32xi32>
    %1275 = arith.remsi %1249, %1274 : vector<1x32xi32>
    %c0_i32_454 = arith.constant 0 : i32
    %1276 = vector.broadcast %c0_i32_454 : i32 to vector<1x32xi32>
    %1277 = arith.cmpi ne, %1275, %1276 : vector<1x32xi32>
    %c0_i32_455 = arith.constant 0 : i32
    %1278 = vector.broadcast %c0_i32_455 : i32 to vector<1x32xi32>
    %1279 = arith.cmpi slt, %1275, %1278 : vector<1x32xi32>
    %c0_i32_456 = arith.constant 0 : i32
    %1280 = arith.cmpi slt, %1273, %c0_i32_456 : i32
    %1281 = vector.broadcast %1280 : i1 to vector<1x32xi1>
    %1282 = vector.broadcast %1281 : vector<1x32xi1> to vector<1x32xi1>
    %1283 = arith.xori %1279, %1282 : vector<1x32xi1>
    %1284 = arith.andi %1283, %1277 : vector<1x32xi1>
    %1285 = vector.broadcast %1273 : i32 to vector<1x32xi32>
    %1286 = arith.addi %1275, %1285 : vector<1x32xi32>
    %1287 = arith.select %1284, %1286, %1275 : vector<1x32xi1>, vector<1x32xi32>
    %c15_i32_457 = arith.constant 15 : i32
    %1288 = vector.broadcast %c15_i32_457 : i32 to vector<1x32xi32>
    %1289 = arith.cmpi eq, %1287, %1288 : vector<1x32xi32>
    %cst_458 = arith.constant 0.000000e+00 : f32
    %1290 = vector.shape_cast %1289 : vector<1x32xi1> to vector<1x32xi1>
    %1291 = vector.broadcast %1290 : vector<1x32xi1> to vector<8x32xi1>
    %1292 = vector.broadcast %cst_458 : f32 to vector<8x32xf32>
    %1293 = arith.select %1291, %1292, %1248 : vector<8x32xi1>, vector<8x32xf32>
    %c8_459 = arith.constant 8 : index
    %c0_460 = arith.constant 0 : index
    %c0_461 = arith.constant 0 : index
    %1294 = vector.load %arg3[%c8_459, %c0_460, %c0_461] : memref<9x8x32xf32, #tpu.memory_space<vmem>>, vector<1x8x32xf32>
    %1295 = vector.shape_cast %1294 : vector<1x8x32xf32> to vector<8x32xf32>
    %1296 = tpu.concatenate %1271, %1244, %1293, %1175 in 0 : vector<8x32xf32>, vector<8x32xf32>, vector<8x32xf32>, vector<8x32xf32> -> vector<32x32xf32>
    %cst_462 = arith.constant dense<0.000000e+00> : vector<8x32xf32>
    %1297 = tpu.matmul %1295, %1296, %cst_462 {dimension_numbers = #tpu.dot_dimension_numbers<[1], [0], [0], [1], [0, 0, 1, 1], [], []>} : vector<8x32xf32>, vector<32x32xf32>, vector<8x32xf32> -> vector<8x32xf32>
    %1298 = vector.extract_strided_slice %1297 {offsets = [0, 0], sizes = [8, 16], strides = [1, 1]} : vector<8x32xf32> to vector<8x16xf32>
    %c0_463 = arith.constant 0 : index
    %c0_464 = arith.constant 0 : index
    %c0_465 = arith.constant 0 : index
    %1299 = vector.load %arg6[%c0_463, %c0_464, %c0_465] : memref<2x8x16xf32, #tpu.memory_space<vmem>>, vector<1x8x16xf32>
    %1300 = vector.shape_cast %1299 : vector<1x8x16xf32> to vector<8x16xf32>
    %1301 = vector.shape_cast %1298 : vector<8x16xf32> to vector<1x8x16xf32>
    tpu.vector_store %arg6[%c0_463, %c0_464, %c0_465], %1301 {strides = array<i32>} : memref<2x8x16xf32, #tpu.memory_space<vmem>>, vector<1x8x16xf32>,
    %1302 = vector.extract_strided_slice %1297 {offsets = [0, 16], sizes = [8, 16], strides = [1, 1]} : vector<8x32xf32> to vector<8x16xf32>
    %c1_466 = arith.constant 1 : index
    %c0_467 = arith.constant 0 : index
    %c0_468 = arith.constant 0 : index
    %1303 = vector.load %arg6[%c1_466, %c0_467, %c0_468] : memref<2x8x16xf32, #tpu.memory_space<vmem>>, vector<1x8x16xf32>
    %1304 = vector.shape_cast %1303 : vector<1x8x16xf32> to vector<8x16xf32>
    %1305 = vector.shape_cast %1302 : vector<8x16xf32> to vector<1x8x16xf32>
    tpu.vector_store %arg6[%c1_466, %c0_467, %c0_468], %1305 {strides = array<i32>} : memref<2x8x16xf32, #tpu.memory_space<vmem>>, vector<1x8x16xf32>,
    return
  }
  func.func @transform_0(%arg0: i32) -> (i32, i32, i32) {
    %c0_i32 = arith.constant 0 : i32
    %c0_i32_0 = arith.constant 0 : i32
    %c0_i32_1 = arith.constant 0 : i32
    return %arg0, %c0_i32, %c0_i32_0 : i32, i32, i32
  }
  func.func @transform_1(%arg0: i32) -> (i32, i32, i32) {
    %c0_i32 = arith.constant 0 : i32
    %c0_i32_0 = arith.constant 0 : i32
    %c0_i32_1 = arith.constant 0 : i32
    %c0_i32_2 = arith.constant 0 : i32
    return %c0_i32, %c0_i32_0, %c0_i32_1 : i32, i32, i32
  }
  func.func @transform_2(%arg0: i32) -> (i32, i32, i32) {
    %c0_i32 = arith.constant 0 : i32
    %c0_i32_0 = arith.constant 0 : i32
    %c0_i32_1 = arith.constant 0 : i32
    %c0_i32_2 = arith.constant 0 : i32
    return %c0_i32, %c0_i32_0, %c0_i32_1 : i32, i32, i32
  }
  func.func @transform_3(%arg0: i32) -> (i32, i32, i32) {
    %c0_i32 = arith.constant 0 : i32
    %c0_i32_0 = arith.constant 0 : i32
    %c0_i32_1 = arith.constant 0 : i32
    %c0_i32_2 = arith.constant 0 : i32
    return %c0_i32, %c0_i32_0, %c0_i32_1 : i32, i32, i32
  }
  func.func @transform_4(%arg0: i32) -> (i32, i32) {
    %c0_i32 = arith.constant 0 : i32
    %c0_i32_0 = arith.constant 0 : i32
    %c0_i32_1 = arith.constant 0 : i32
    return %c0_i32, %c0_i32_0 : i32, i32
  }
  func.func @transform_5(%arg0: i32) -> (i32, i32, i32) {
    %c0_i32 = arith.constant 0 : i32
    %c0_i32_0 = arith.constant 0 : i32
    %c0_i32_1 = arith.constant 0 : i32
    return %arg0, %c0_i32, %c0_i32_0 : i32, i32, i32
  }
}

</mosaic_0001>

<llo_original>
// kernel: attention_module2.1
$region0: #{attention_module2.1}
  #allocation0 [shape = 'u32[]', space=smem, size = 0x4, offset = 0x4, fixed_abs, tag = 'smem constant byte address 0x4 - core index']
  #allocation1 [shape = 'u32[144,128]{1,0:T(1,128)}', space=vmem, size = 0x12000, scoped, tag = 'internal scratch']
  %s0 = inlined_call_operand.hbm [shape: f32[2,8,16], index: 0, kind: input, shape index: {}]
  %s1 = inlined_call_operand.hbm [shape: f32[9,8,24], index: 1, kind: input, shape index: {}]
  %s2 = inlined_call_operand.hbm [shape: f32[9,8,32], index: 2, kind: input, shape index: {}]
  %s3 = inlined_call_operand.hbm [shape: f32[2,8,8], index: 3, kind: input, shape index: {}]
  %s4 = inlined_call_operand.hbm [shape: f32[8,42], index: 4, kind: input, shape index: {}]
  %s5 = inlined_call_operand.hbm [shape: f32[2,8,16], index: 5, kind: output, shape index: {}]
  %s6 = sld [smem:[#allocation0]]
  $region50: #{attention_module2.1} parent=0
    _
  %s8 = ssub.s32 1, %s6
  %s9 = scalar_select 0, %s8, %s6
  $region1: #{attention_module2.1} parent=0
    #allocation2 [shape = 'u8[8192]{0}', space=vmem, size = 0x2000, scoped, tag = 'input window, operand 0, single buffered']
    #allocation3 [shape = 's32[1]{0}', space=sflag, size = 0x4, scoped, tag = 'scoped memory for attention_module2.1']
    #allocation4 [shape = 's32[1]{0}', space=sflag, size = 0x4, scoped, tag = 'scoped memory for attention_module2.1']
    #allocation5 [shape = 'u8[36864]{0}', space=vmem, size = 0x9000, scoped, tag = 'input window, operand 1, single buffered']
    #allocation6 [shape = 's32[1]{0}', space=sflag, size = 0x4, scoped, tag = 'scoped memory for attention_module2.1']
    #allocation7 [shape = 'u8[36864]{0}', space=vmem, size = 0x9000, scoped, tag = 'input window, operand 2, single buffered']
    #allocation8 [shape = 'u8[8192]{0}', space=vmem, size = 0x2000, scoped, tag = 'input window, operand 3, single buffered']
    #allocation9 [shape = 's32[1]{0}', space=sflag, size = 0x4, scoped, tag = 'scoped memory for attention_module2.1']
    #allocation10 [shape = 'u8[4096]{0}', space=vmem, size = 0x1000, scoped, tag = 'input window, operand 4, single buffered']
    #allocation11 [shape = 'u8[8192]{0}', space=vmem, size = 0x2000, scoped, tag = 'output window, operand 0, single buffered']
    %10 = vsyncpa [#allocation3], 0
    %11 = vsyncpa [#allocation6], 0
    %12 = vsyncpa [#allocation9], 0
    %13 = vsyncpa [#allocation4], 0
    // Predicated region
    $region2: #{attention_module2.1} parent=1 // pred_check
      _
    $region3: #{attention_module2.1} parent=1 // pred_check_branch
      %15 = sbr.rel (0) target = $region5
    $region4: #{attention_module2.1} parent=1 // pred_region
      %s17 = ssub.s32 256, 256
      %18 = vsyncadd [#allocation3], %s17
      %s19 = sshll.u32 [#allocation2], 4
      %s20 = int_to_ptr.vmem [resolvable:$true] %s19
      %25 = dma.hbm_to_vmem [thread:$0]  %s0, 256, %s20, [#allocation3], 128, 128, 8
    $region5: #{attention_module2.1} parent=1 // pred_fallthru
      _
    // Predicated region
    $region6: #{attention_module2.1} parent=1 // pred_check
      _
    $region7: #{attention_module2.1} parent=1 // pred_check_branch
      %27 = sbr.rel (0) target = $region9
    $region8: #{attention_module2.1} parent=1 // pred_region
      %s29 = ssub.s32 1152, 1152
      %30 = vsyncadd [#allocation6], %s29
      %s31 = sshll.u32 [#allocation5], 4
      %s32 = int_to_ptr.vmem [resolvable:$true] %s31
      %37 = dma.hbm_to_vmem [thread:$0]  %s1, 1152, %s32, [#allocation6], 128, 128, 8
    $region9: #{attention_module2.1} parent=1 // pred_fallthru
      _
    // Predicated region
    $region10: #{attention_module2.1} parent=1 // pred_check
      _
    $region11: #{attention_module2.1} parent=1 // pred_check_branch
      %39 = sbr.rel (0) target = $region13
    $region12: #{attention_module2.1} parent=1 // pred_region
      %s41 = ssub.s32 1152, 1152
      %42 = vsyncadd [#allocation6], %s41
      %s43 = sshll.u32 [#allocation7], 4
      %s44 = int_to_ptr.vmem [resolvable:$true] %s43
      %49 = dma.hbm_to_vmem [thread:$0]  %s2, 1152, %s44, [#allocation6], 128, 128, 8
    $region13: #{attention_module2.1} parent=1 // pred_fallthru
      _
    // Predicated region
    $region14: #{attention_module2.1} parent=1 // pred_check
      _
    $region15: #{attention_module2.1} parent=1 // pred_check_branch
      %51 = sbr.rel (0) target = $region17
    $region16: #{attention_module2.1} parent=1 // pred_region
      %s53 = ssub.s32 256, 256
      %54 = vsyncadd [#allocation9], %s53
      %s55 = sshll.u32 [#allocation8], 4
      %s56 = int_to_ptr.vmem [resolvable:$true] %s55
      %61 = dma.hbm_to_vmem [thread:$0]  %s3, 256, %s56, [#allocation9], 128, 128, 8
    $region17: #{attention_module2.1} parent=1 // pred_fallthru
      _
    // Predicated region
    $region18: #{attention_module2.1} parent=1 // pred_check
      _
    $region19: #{attention_module2.1} parent=1 // pred_check_branch
      %63 = sbr.rel (0) target = $region21
    $region20: #{attention_module2.1} parent=1 // pred_region
      %s65 = ssub.s32 128, 128
      %66 = vsyncadd [#allocation9], %s65
      %s68 = sshll.u32 [#allocation10], 4
      %s69 = int_to_ptr.vmem [resolvable:$true] %s68
      %71 = dma.hbm_to_vmem [thread:$0]  %s4, 128, %s69, [#allocation9]
    $region21: #{attention_module2.1} parent=1 // pred_fallthru
      _
    // Predicated region
    $region22: #{attention_module2.1} parent=1 // pred_check
      _
    $region23: #{attention_module2.1} parent=1 // pred_check_branch
      %73 = sbr.rel (0) target = $region25
    $region24: #{attention_module2.1} parent=1 // pred_region
      %74 = dma.done [#allocation3], 256
    $region25: #{attention_module2.1} parent=1 // pred_fallthru
      _
    // Predicated region
    $region26: #{attention_module2.1} parent=1 // pred_check
      _
    $region27: #{attention_module2.1} parent=1 // pred_check_branch
      %76 = sbr.rel (0) target = $region29
    $region28: #{attention_module2.1} parent=1 // pred_region
      %77 = dma.done [#allocation6], 1152
    $region29: #{attention_module2.1} parent=1 // pred_fallthru
      _
    // Predicated region
    $region30: #{attention_module2.1} parent=1 // pred_check
      _
    $region31: #{attention_module2.1} parent=1 // pred_check_branch
      %79 = sbr.rel (0) target = $region33
    $region32: #{attention_module2.1} parent=1 // pred_region
      %80 = dma.done [#allocation6], 1152
    $region33: #{attention_module2.1} parent=1 // pred_fallthru
      _
    // Predicated region
    $region34: #{attention_module2.1} parent=1 // pred_check
      _
    $region35: #{attention_module2.1} parent=1 // pred_check_branch
      %82 = sbr.rel (0) target = $region37
    $region36: #{attention_module2.1} parent=1 // pred_region
      %83 = dma.done [#allocation9], 256
    $region37: #{attention_module2.1} parent=1 // pred_fallthru
      _
    // Predicated region
    $region38: #{attention_module2.1} parent=1 // pred_check
      _
    $region39: #{attention_module2.1} parent=1 // pred_check_branch
      %85 = sbr.rel (0) target = $region41
    $region40: #{attention_module2.1} parent=1 // pred_region
      %86 = dma.done [#allocation9], 128
    $region41: #{attention_module2.1} parent=1 // pred_fallthru
      _
    %v87 = vld [vmem:[#allocation2] sm:$0xff]
    %s88 = scalar_lea.vmem [#allocation2], 8
    %v89 = vld [vmem:[%s88] sm:$0xff]
    %91 = vrot.lane.b32.xlu0 %v89, 16
    %v92 = vpop.permute.xlu0 %91
    %vm94 = vcmask 130048
    %v95 = vsel %vm94, %v87, %v92
    %v96 = vld [vmem:[#allocation10] sm:$0xff]
    %98 = vset.pattern.permute.xlu0 0
    %99 = vperm.xlu0 %98, %v96
    %v100 = vpop.permute.xlu0 %99
    %v102 = vmul.f32 %v95, %v100
    %103 = vset.pattern.permute.xlu0 1
    %104 = vperm.xlu0 %103, %v96
    %v105 = vpop.permute.xlu0 %104
    %v107 = vadd.f32 %v102, %v105
    %v108 = vmax.f32 %v107, 0.0
    %110 = vrot.lane.b32.xlu0 %v108, 1
    %v111 = vpop.permute.xlu0 %110
    %vm113 = vcmask 7168
    %v114 = vsel %vm113, 0.0, %v111
    %115 = vrot.lane.b32.xlu0 %v108, 127
    %v116 = vpop.permute.xlu0 %115
    %vm118 = vcmask 252928
    %v119 = vsel %vm118, %v116, 0.0
    %v120 = vlaneseq
    %v121 = vand.u32 %v120, 127
    %vm122 = vcmp.lt.s32.totalorder %v121, 0
    %v123 = vsub.s32 0, %v121
    %v124 = vsel %vm122, %v123, %v121
    %v125 = vshrl.u32 %v124, 4
    %v126 = vand.u32 %v124, 15
    %v127 = vsub.s32 0, %v126
    %v128 = vsel %vm122, %v127, %v126
    %vm129 = vcmp.ne.s32.totalorder %v128, 0
    %vm130 = vcmp.lt.s32.totalorder %v128, 0
    %vm131 = vmand %vm130, %vm129
    %v132 = vadd.s32 %v128, 16
    %v133 = vsel %vm131, %v132, %v128
    %vm134 = vcmp.eq.s32.totalorder %v133, 0
    %v135 = vsel %vm134, 1, 0
    %vm136 = vcmp.eq.s32.totalorder %v135, 1
    %v137 = vsel %vm136, 0.0, %v114
    %vm138 = vcmp.eq.s32.totalorder %v133, 15
    %v139 = vsel %vm138, 1, 0
    %vm140 = vcmp.eq.s32.totalorder %v139, 1
    %v141 = vsel %vm140, 0.0, %v119
    %v142 = vld [vmem:[#allocation5] sm:$0xff]
    %vm143 = vcmask 195584
    %v145 = vsel %vm143, %v142, 0
    %147 = vmatprep.subr.mxu0 0.0
    %148 = vmatpush1.msra.mxu0 %v137
    %149 = vmatprep.subr.mxu0 0.0
    %150 = vmatpush1.msra.mxu0 %v108
    %151 = vmatprep.subr.mxu0 0.0
    %152 = vmatpush1.msra.mxu0 %v141
    %153 = vmatprep.subr.mxu0 0.0
    %154 = vmatpush1.msra.mxu0 0.0
    %155 = vmatprep.subr.mxu0 0.0
    %156 = vmatpush1.msra.mxu0 0.0
    %157 = vmatprep.subr.mxu0 0.0
    %158 = vmatpush1.msra.mxu0 0.0
    %159 = vmatprep.subr.mxu0 0.0
    %160 = vmatpush1.msra.mxu0 0.0
    %161 = vmatprep.subr.mxu0 0.0
    %162 = vmatpush1.msra.mxu0 0.0
    %163 = vmatprep.subr.mxu0 0.0
    %164 = vmatpush1.msra.mxu0 0.0
    %165 = vmatprep.subr.mxu0 0.0
    %166 = vmatpush1.msra.mxu0 0.0
    %167 = vmatprep.subr.mxu0 0.0
    %168 = vmatpush1.msra.mxu0 0.0
    %169 = vmatprep.subr.mxu0 0.0
    %170 = vmatpush1.msra.mxu0 0.0
    %171 = vmatprep.subr.mxu0 0.0
    %172 = vmatpush1.msra.mxu0 0.0
    %173 = vmatprep.subr.mxu0 0.0
    %174 = vmatpush1.msra.mxu0 0.0
    %175 = vmatprep.subr.mxu0 0.0
    %176 = vmatpush1.msra.mxu0 0.0
    %177 = vmatprep.subr.mxu0 0.0
    %178 = vmatpush1.msra.mxu0 0.0
    %179 = vmatprep.subr.mxu0 0.0
    %180 = vmatpush1.msra.mxu0 0.0
    %181 = vmatprep.subr.mxu0 0.0
    %182 = vmatpush1.msra.mxu0 0.0
    %183 = vmatprep.subr.mxu0 0.0
    %184 = vmatpush1.msra.mxu0 0.0
    %185 = vmatprep.subr.mxu0 0.0
    %186 = vmatpush1.msra.mxu0 0.0
    %187 = vmatprep.subr.mxu0 0.0
    %188 = vmatpush1.msra.mxu0 0.0
    %189 = vmatprep.subr.mxu0 0.0
    %190 = vmatpush1.msra.mxu0 0.0
    %191 = vmatprep.subr.mxu0 0.0
    %192 = vmatpush1.msra.mxu0 0.0
    %193 = vmatprep.subr.mxu0 0.0
    %194 = vmatpush1.msra.mxu0 0.0
    %195 = vmatprep.subr.mxu0 0.0
    %196 = vmatpush1.msra.mxu0 0.0
    %197 = vmatprep.subr.mxu0 0.0
    %198 = vmatpush1.msra.mxu0 0.0
    %199 = vmatprep.subr.mxu0 0.0
    %200 = vmatpush1.msra.mxu0 0.0
    %201 = vmatprep.subr.mxu0 0.0
    %202 = vmatpush1.msra.mxu0 0.0
    %203 = vmatprep.subr.mxu0 0.0
    %204 = vmatpush1.msra.mxu0 0.0
    %205 = vmatprep.subr.mxu0 0.0
    %206 = vmatpush1.msra.mxu0 0.0
    %207 = vmatprep.subr.mxu0 0.0
    %208 = vmatpush1.msra.mxu0 0.0
    %209 = vmatprep.subr.mxu0 0.0
    %210 = vmatpush1.msra.mxu0 0.0
    %211 = vmatprep.mubr.f32.mxu0 0.0
    %212 = vmatmul.mubr.f32.gmra.mrb[0].mxu0 %v145
    %v213 = vpop.f32.mrb[0].mxu0
    %v214 = vadd.f32 0.0, %v213
    %v215 = vpop.f32.mrb[0].mxu0
    %216 = vdwg.mxu0
    %217 = vset.pattern.permute.xlu0 2
    %218 = vperm.xlu0 %217, %v96
    %v219 = vpop.permute.xlu0 %218
    %v221 = vmul.f32 %v214, %v219
    %222 = vset.pattern.permute.xlu0 3
    %223 = vperm.xlu0 %222, %v96
    %v224 = vpop.permute.xlu0 %223
    %v226 = vadd.f32 %v221, %v224
    %v227 = vmax.f32 %v226, 0.0
    %229 = vrot.lane.b32.xlu0 %v227, 1
    %v230 = vpop.permute.xlu0 %229
    %v232 = vsel %vm113, 0.0, %v230
    %233 = vrot.lane.b32.xlu0 %v227, 127
    %v234 = vpop.permute.xlu0 %233
    %v236 = vsel %vm118, %v234, 0.0
    %v237 = vsel %vm136, 0.0, %v232
    %v238 = vsel %vm140, 0.0, %v236
    %v239 = vld [vmem:[#allocation7] sm:$0xff]
    %vm240 = vcmask 261120
    %v242 = vsel %vm240, %v239, 0
    %244 = vmatprep.subr.mxu0 0.0
    %245 = vmatpush1.msra.mxu0 %v237
    %246 = vmatprep.subr.mxu0 0.0
    %247 = vmatpush1.msra.mxu0 %v227
    %248 = vmatprep.subr.mxu0 0.0
    %249 = vmatpush1.msra.mxu0 %v238
    %250 = vmatprep.subr.mxu0 0.0
    %251 = vmatpush1.msra.mxu0 %v95
    %252 = vmatprep.subr.mxu0 0.0
    %253 = vmatpush1.msra.mxu0 0.0
    %254 = vmatprep.subr.mxu0 0.0
    %255 = vmatpush1.msra.mxu0 0.0
    %256 = vmatprep.subr.mxu0 0.0
    %257 = vmatpush1.msra.mxu0 0.0
    %258 = vmatprep.subr.mxu0 0.0
    %259 = vmatpush1.msra.mxu0 0.0
    %260 = vmatprep.subr.mxu0 0.0
    %261 = vmatpush1.msra.mxu0 0.0
    %262 = vmatprep.subr.mxu0 0.0
    %263 = vmatpush1.msra.mxu0 0.0
    %264 = vmatprep.subr.mxu0 0.0
    %265 = vmatpush1.msra.mxu0 0.0
    %266 = vmatprep.subr.mxu0 0.0
    %267 = vmatpush1.msra.mxu0 0.0
    %268 = vmatprep.subr.mxu0 0.0
    %269 = vmatpush1.msra.mxu0 0.0
    %270 = vmatprep.subr.mxu0 0.0
    %271 = vmatpush1.msra.mxu0 0.0
    %272 = vmatprep.subr.mxu0 0.0
    %273 = vmatpush1.msra.mxu0 0.0
    %274 = vmatprep.subr.mxu0 0.0
    %275 = vmatpush1.msra.mxu0 0.0
    %276 = vmatprep.subr.mxu0 0.0
    %277 = vmatpush1.msra.mxu0 0.0
    %278 = vmatprep.subr.mxu0 0.0
    %279 = vmatpush1.msra.mxu0 0.0
    %280 = vmatprep.subr.mxu0 0.0
    %281 = vmatpush1.msra.mxu0 0.0
    %282 = vmatprep.subr.mxu0 0.0
    %283 = vmatpush1.msra.mxu0 0.0
    %284 = vmatprep.subr.mxu0 0.0
    %285 = vmatpush1.msra.mxu0 0.0
    %286 = vmatprep.subr.mxu0 0.0
    %287 = vmatpush1.msra.mxu0 0.0
    %288 = vmatprep.subr.mxu0 0.0
    %289 = vmatpush1.msra.mxu0 0.0
    %290 = vmatprep.subr.mxu0 0.0
    %291 = vmatpush1.msra.mxu0 0.0
    %292 = vmatprep.subr.mxu0 0.0
    %293 = vmatpush1.msra.mxu0 0.0
    %294 = vmatprep.subr.mxu0 0.0
    %295 = vmatpush1.msra.mxu0 0.0
    %296 = vmatprep.subr.mxu0 0.0
    %297 = vmatpush1.msra.mxu0 0.0
    %298 = vmatprep.subr.mxu0 0.0
    %299 = vmatpush1.msra.mxu0 0.0
    %300 = vmatprep.subr.mxu0 0.0
    %301 = vmatpush1.msra.mxu0 0.0
    %302 = vmatprep.subr.mxu0 0.0
    %303 = vmatpush1.msra.mxu0 0.0
    %304 = vmatprep.subr.mxu0 0.0
    %305 = vmatpush1.msra.mxu0 0.0
    %306 = vmatprep.subr.mxu0 0.0
    %307 = vmatpush1.msra.mxu0 0.0
    %308 = vmatprep.mubr.f32.mxu0 0.0
    %309 = vmatmul.mubr.f32.gmra.mrb[0].mxu0 %v242
    %v310 = vpop.f32.mrb[0].mxu0
    %v311 = vadd.f32 0.0, %v310
    %v312 = vpop.f32.mrb[0].mxu0
    %313 = vdwg.mxu0
    %314 = vset.pattern.permute.xlu0 4
    %315 = vperm.xlu0 %314, %v96
    %v316 = vpop.permute.xlu0 %315
    %v318 = vmul.f32 %v311, %v316
    %319 = vset.pattern.permute.xlu0 5
    %320 = vperm.xlu0 %319, %v96
    %v321 = vpop.permute.xlu0 %320
    %v323 = vadd.f32 %v318, %v321
    %v324 = vmax.f32 %v323, 0.0
    %326 = vrot.lane.b32.xlu0 %v324, 1
    %v327 = vpop.permute.xlu0 %326
    %v329 = vsel %vm113, 0.0, %v327
    %330 = vrot.lane.b32.xlu0 %v324, 127
    %v331 = vpop.permute.xlu0 %330
    %v333 = vsel %vm118, %v331, 0.0
    %v334 = vsel %vm136, 0.0, %v329
    %v335 = vsel %vm140, 0.0, %v333
    %s336 = scalar_lea.vmem [#allocation5], 8
    %v337 = vld [vmem:[%s336] sm:$0xff]
    %v339 = vsel %vm143, %v337, 0
    %341 = vmatprep.subr.mxu0 0.0
    %342 = vmatpush1.msra.mxu0 %v334
    %343 = vmatprep.subr.mxu0 0.0
    %344 = vmatpush1.msra.mxu0 %v324
    %345 = vmatprep.subr.mxu0 0.0
    %346 = vmatpush1.msra.mxu0 %v335
    %347 = vmatprep.subr.mxu0 0.0
    %348 = vmatpush1.msra.mxu0 0.0
    %349 = vmatprep.subr.mxu0 0.0
    %350 = vmatpush1.msra.mxu0 0.0
    %351 = vmatprep.subr.mxu0 0.0
    %352 = vmatpush1.msra.mxu0 0.0
    %353 = vmatprep.subr.mxu0 0.0
    %354 = vmatpush1.msra.mxu0 0.0
    %355 = vmatprep.subr.mxu0 0.0
    %356 = vmatpush1.msra.mxu0 0.0
    %357 = vmatprep.subr.mxu0 0.0
    %358 = vmatpush1.msra.mxu0 0.0
    %359 = vmatprep.subr.mxu0 0.0
    %360 = vmatpush1.msra.mxu0 0.0
    %361 = vmatprep.subr.mxu0 0.0
    %362 = vmatpush1.msra.mxu0 0.0
    %363 = vmatprep.subr.mxu0 0.0
    %364 = vmatpush1.msra.mxu0 0.0
    %365 = vmatprep.subr.mxu0 0.0
    %366 = vmatpush1.msra.mxu0 0.0
    %367 = vmatprep.subr.mxu0 0.0
    %368 = vmatpush1.msra.mxu0 0.0
    %369 = vmatprep.subr.mxu0 0.0
    %370 = vmatpush1.msra.mxu0 0.0
    %371 = vmatprep.subr.mxu0 0.0
    %372 = vmatpush1.msra.mxu0 0.0
    %373 = vmatprep.subr.mxu0 0.0
    %374 = vmatpush1.msra.mxu0 0.0
    %375 = vmatprep.subr.mxu0 0.0
    %376 = vmatpush1.msra.mxu0 0.0
    %377 = vmatprep.subr.mxu0 0.0
    %378 = vmatpush1.msra.mxu0 0.0
    %379 = vmatprep.subr.mxu0 0.0
    %380 = vmatpush1.msra.mxu0 0.0
    %381 = vmatprep.subr.mxu0 0.0
    %382 = vmatpush1.msra.mxu0 0.0
    %383 = vmatprep.subr.mxu0 0.0
    %384 = vmatpush1.msra.mxu0 0.0
    %385 = vmatprep.subr.mxu0 0.0
    %386 = vmatpush1.msra.mxu0 0.0
    %387 = vmatprep.subr.mxu0 0.0
    %388 = vmatpush1.msra.mxu0 0.0
    %389 = vmatprep.subr.mxu0 0.0
    %390 = vmatpush1.msra.mxu0 0.0
    %391 = vmatprep.subr.mxu0 0.0
    %392 = vmatpush1.msra.mxu0 0.0
    %393 = vmatprep.subr.mxu0 0.0
    %394 = vmatpush1.msra.mxu0 0.0
    %395 = vmatprep.subr.mxu0 0.0
    %396 = vmatpush1.msra.mxu0 0.0
    %397 = vmatprep.subr.mxu0 0.0
    %398 = vmatpush1.msra.mxu0 0.0
    %399 = vmatprep.subr.mxu0 0.0
    %400 = vmatpush1.msra.mxu0 0.0
    %401 = vmatprep.subr.mxu0 0.0
    %402 = vmatpush1.msra.mxu0 0.0
    %403 = vmatprep.subr.mxu0 0.0
    %404 = vmatpush1.msra.mxu0 0.0
    %405 = vmatprep.mubr.f32.mxu0 0.0
    %406 = vmatmul.mubr.f32.gmra.mrb[0].mxu0 %v339
    %v407 = vpop.f32.mrb[0].mxu0
    %v408 = vadd.f32 0.0, %v407
    %v409 = vpop.f32.mrb[0].mxu0
    %410 = vdwg.mxu0
    %411 = vset.pattern.permute.xlu0 6
    %412 = vperm.xlu0 %411, %v96
    %v413 = vpop.permute.xlu0 %412
    %v415 = vmul.f32 %v408, %v413
    %416 = vset.pattern.permute.xlu0 7
    %417 = vperm.xlu0 %416, %v96
    %v418 = vpop.permute.xlu0 %417
    %v420 = vadd.f32 %v415, %v418
    %v421 = vmax.f32 %v420, 0.0
    %423 = vrot.lane.b32.xlu0 %v421, 1
    %v424 = vpop.permute.xlu0 %423
    %v426 = vsel %vm113, 0.0, %v424
    %427 = vrot.lane.b32.xlu0 %v421, 127
    %v428 = vpop.permute.xlu0 %427
    %v430 = vsel %vm118, %v428, 0.0
    %v431 = vsel %vm136, 0.0, %v426
    %v432 = vsel %vm140, 0.0, %v430
    %s433 = scalar_lea.vmem [#allocation7], 8
    %v434 = vld [vmem:[%s433] sm:$0xff]
    %v436 = vsel %vm240, %v434, 0
    %438 = vmatprep.subr.mxu0 0.0
    %439 = vmatpush1.msra.mxu0 %v431
    %440 = vmatprep.subr.mxu0 0.0
    %441 = vmatpush1.msra.mxu0 %v421
    %442 = vmatprep.subr.mxu0 0.0
    %443 = vmatpush1.msra.mxu0 %v432
    %444 = vmatprep.subr.mxu0 0.0
    %445 = vmatpush1.msra.mxu0 %v311
    %446 = vmatprep.subr.mxu0 0.0
    %447 = vmatpush1.msra.mxu0 0.0
    %448 = vmatprep.subr.mxu0 0.0
    %449 = vmatpush1.msra.mxu0 0.0
    %450 = vmatprep.subr.mxu0 0.0
    %451 = vmatpush1.msra.mxu0 0.0
    %452 = vmatprep.subr.mxu0 0.0
    %453 = vmatpush1.msra.mxu0 0.0
    %454 = vmatprep.subr.mxu0 0.0
    %455 = vmatpush1.msra.mxu0 0.0
    %456 = vmatprep.subr.mxu0 0.0
    %457 = vmatpush1.msra.mxu0 0.0
    %458 = vmatprep.subr.mxu0 0.0
    %459 = vmatpush1.msra.mxu0 0.0
    %460 = vmatprep.subr.mxu0 0.0
    %461 = vmatpush1.msra.mxu0 0.0
    %462 = vmatprep.subr.mxu0 0.0
    %463 = vmatpush1.msra.mxu0 0.0
    %464 = vmatprep.subr.mxu0 0.0
    %465 = vmatpush1.msra.mxu0 0.0
    %466 = vmatprep.subr.mxu0 0.0
    %467 = vmatpush1.msra.mxu0 0.0
    %468 = vmatprep.subr.mxu0 0.0
    %469 = vmatpush1.msra.mxu0 0.0
    %470 = vmatprep.subr.mxu0 0.0
    %471 = vmatpush1.msra.mxu0 0.0
    %472 = vmatprep.subr.mxu0 0.0
    %473 = vmatpush1.msra.mxu0 0.0
    %474 = vmatprep.subr.mxu0 0.0
    %475 = vmatpush1.msra.mxu0 0.0
    %476 = vmatprep.subr.mxu0 0.0
    %477 = vmatpush1.msra.mxu0 0.0
    %478 = vmatprep.subr.mxu0 0.0
    %479 = vmatpush1.msra.mxu0 0.0
    %480 = vmatprep.subr.mxu0 0.0
    %481 = vmatpush1.msra.mxu0 0.0
    %482 = vmatprep.subr.mxu0 0.0
    %483 = vmatpush1.msra.mxu0 0.0
    %484 = vmatprep.subr.mxu0 0.0
    %485 = vmatpush1.msra.mxu0 0.0
    %486 = vmatprep.subr.mxu0 0.0
    %487 = vmatpush1.msra.mxu0 0.0
    %488 = vmatprep.subr.mxu0 0.0
    %489 = vmatpush1.msra.mxu0 0.0
    %490 = vmatprep.subr.mxu0 0.0
    %491 = vmatpush1.msra.mxu0 0.0
    %492 = vmatprep.subr.mxu0 0.0
    %493 = vmatpush1.msra.mxu0 0.0
    %494 = vmatprep.subr.mxu0 0.0
    %495 = vmatpush1.msra.mxu0 0.0
    %496 = vmatprep.subr.mxu0 0.0
    %497 = vmatpush1.msra.mxu0 0.0
    %498 = vmatprep.subr.mxu0 0.0
    %499 = vmatpush1.msra.mxu0 0.0
    %500 = vmatprep.subr.mxu0 0.0
    %501 = vmatpush1.msra.mxu0 0.0
    %502 = vmatprep.mubr.f32.mxu0 0.0
    %503 = vmatmul.mubr.f32.gmra.mrb[0].mxu0 %v436
    %v504 = vpop.f32.mrb[0].mxu0
    %v505 = vadd.f32 0.0, %v504
    %v506 = vpop.f32.mrb[0].mxu0
    %507 = vdwg.mxu0
    %508 = vset.pattern.permute.xlu0 8
    %509 = vperm.xlu0 %508, %v96
    %v510 = vpop.permute.xlu0 %509
    %v512 = vmul.f32 %v505, %v510
    %513 = vset.pattern.permute.xlu0 9
    %514 = vperm.xlu0 %513, %v96
    %v515 = vpop.permute.xlu0 %514
    %v517 = vadd.f32 %v512, %v515
    %v518 = vmax.f32 %v517, 0.0
    %520 = vrot.lane.b32.xlu0 %v518, 1
    %v521 = vpop.permute.xlu0 %520
    %v523 = vsel %vm113, 0.0, %v521
    %524 = vrot.lane.b32.xlu0 %v518, 127
    %v525 = vpop.permute.xlu0 %524
    %v527 = vsel %vm118, %v525, 0.0
    %v528 = vsel %vm136, 0.0, %v523
    %v529 = vsel %vm140, 0.0, %v527
    %s530 = scalar_lea.vmem [#allocation5], 16
    %v531 = vld [vmem:[%s530] sm:$0xff]
    %v533 = vsel %vm143, %v531, 0
    %535 = vmatprep.subr.mxu0 0.0
    %536 = vmatpush1.msra.mxu0 %v528
    %537 = vmatprep.subr.mxu0 0.0
    %538 = vmatpush1.msra.mxu0 %v518
    %539 = vmatprep.subr.mxu0 0.0
    %540 = vmatpush1.msra.mxu0 %v529
    %541 = vmatprep.subr.mxu0 0.0
    %542 = vmatpush1.msra.mxu0 0.0
    %543 = vmatprep.subr.mxu0 0.0
    %544 = vmatpush1.msra.mxu0 0.0
    %545 = vmatprep.subr.mxu0 0.0
    %546 = vmatpush1.msra.mxu0 0.0
    %547 = vmatprep.subr.mxu0 0.0
    %548 = vmatpush1.msra.mxu0 0.0
    %549 = vmatprep.subr.mxu0 0.0
    %550 = vmatpush1.msra.mxu0 0.0
    %551 = vmatprep.subr.mxu0 0.0
    %552 = vmatpush1.msra.mxu0 0.0
    %553 = vmatprep.subr.mxu0 0.0
    %554 = vmatpush1.msra.mxu0 0.0
    %555 = vmatprep.subr.mxu0 0.0
    %556 = vmatpush1.msra.mxu0 0.0
    %557 = vmatprep.subr.mxu0 0.0
    %558 = vmatpush1.msra.mxu0 0.0
    %559 = vmatprep.subr.mxu0 0.0
    %560 = vmatpush1.msra.mxu0 0.0
    %561 = vmatprep.subr.mxu0 0.0
    %562 = vmatpush1.msra.mxu0 0.0
    %563 = vmatprep.subr.mxu0 0.0
    %564 = vmatpush1.msra.mxu0 0.0
    %565 = vmatprep.subr.mxu0 0.0
    %566 = vmatpush1.msra.mxu0 0.0
    %567 = vmatprep.subr.mxu0 0.0
    %568 = vmatpush1.msra.mxu0 0.0
    %569 = vmatprep.subr.mxu0 0.0
    %570 = vmatpush1.msra.mxu0 0.0
    %571 = vmatprep.subr.mxu0 0.0
    %572 = vmatpush1.msra.mxu0 0.0
    %573 = vmatprep.subr.mxu0 0.0
    %574 = vmatpush1.msra.mxu0 0.0
    %575 = vmatprep.subr.mxu0 0.0
    %576 = vmatpush1.msra.mxu0 0.0
    %577 = vmatprep.subr.mxu0 0.0
    %578 = vmatpush1.msra.mxu0 0.0
    %579 = vmatprep.subr.mxu0 0.0
    %580 = vmatpush1.msra.mxu0 0.0
    %581 = vmatprep.subr.mxu0 0.0
    %582 = vmatpush1.msra.mxu0 0.0
    %583 = vmatprep.subr.mxu0 0.0
    %584 = vmatpush1.msra.mxu0 0.0
    %585 = vmatprep.subr.mxu0 0.0
    %586 = vmatpush1.msra.mxu0 0.0
    %587 = vmatprep.subr.mxu0 0.0
    %588 = vmatpush1.msra.mxu0 0.0
    %589 = vmatprep.subr.mxu0 0.0
    %590 = vmatpush1.msra.mxu0 0.0
    %591 = vmatprep.subr.mxu0 0.0
    %592 = vmatpush1.msra.mxu0 0.0
    %593 = vmatprep.subr.mxu0 0.0
    %594 = vmatpush1.msra.mxu0 0.0
    %595 = vmatprep.subr.mxu0 0.0
    %596 = vmatpush1.msra.mxu0 0.0
    %597 = vmatprep.subr.mxu0 0.0
    %598 = vmatpush1.msra.mxu0 0.0
    %599 = vmatprep.mubr.f32.mxu0 0.0
    %600 = vmatmul.mubr.f32.gmra.mrb[0].mxu0 %v533
    %v601 = vpop.f32.mrb[0].mxu0
    %v602 = vadd.f32 0.0, %v601
    %v603 = vpop.f32.mrb[0].mxu0
    %604 = vdwg.mxu0
    %605 = vset.pattern.permute.xlu0 10
    %606 = vperm.xlu0 %605, %v96
    %v607 = vpop.permute.xlu0 %606
    %v609 = vmul.f32 %v602, %v607
    %610 = vset.pattern.permute.xlu0 11
    %611 = vperm.xlu0 %610, %v96
    %v612 = vpop.permute.xlu0 %611
    %v614 = vadd.f32 %v609, %v612
    %v615 = vmax.f32 %v614, 0.0
    %617 = vrot.lane.b32.xlu0 %v615, 1
    %v618 = vpop.permute.xlu0 %617
    %v620 = vsel %vm113, 0.0, %v618
    %621 = vrot.lane.b32.xlu0 %v615, 127
    %v622 = vpop.permute.xlu0 %621
    %v624 = vsel %vm118, %v622, 0.0
    %v625 = vsel %vm136, 0.0, %v620
    %v626 = vsel %vm140, 0.0, %v624
    %s627 = scalar_lea.vmem [#allocation7], 16
    %v628 = vld [vmem:[%s627] sm:$0xff]
    %v630 = vsel %vm240, %v628, 0
    %632 = vmatprep.subr.mxu0 0.0
    %633 = vmatpush1.msra.mxu0 %v625
    %634 = vmatprep.subr.mxu0 0.0
    %635 = vmatpush1.msra.mxu0 %v615
    %636 = vmatprep.subr.mxu0 0.0
    %637 = vmatpush1.msra.mxu0 %v626
    %638 = vmatprep.subr.mxu0 0.0
    %639 = vmatpush1.msra.mxu0 %v505
    %640 = vmatprep.subr.mxu0 0.0
    %641 = vmatpush1.msra.mxu0 0.0
    %642 = vmatprep.subr.mxu0 0.0
    %643 = vmatpush1.msra.mxu0 0.0
    %644 = vmatprep.subr.mxu0 0.0
    %645 = vmatpush1.msra.mxu0 0.0
    %646 = vmatprep.subr.mxu0 0.0
    %647 = vmatpush1.msra.mxu0 0.0
    %648 = vmatprep.subr.mxu0 0.0
    %649 = vmatpush1.msra.mxu0 0.0
    %650 = vmatprep.subr.mxu0 0.0
    %651 = vmatpush1.msra.mxu0 0.0
    %652 = vmatprep.subr.mxu0 0.0
    %653 = vmatpush1.msra.mxu0 0.0
    %654 = vmatprep.subr.mxu0 0.0
    %655 = vmatpush1.msra.mxu0 0.0
    %656 = vmatprep.subr.mxu0 0.0
    %657 = vmatpush1.msra.mxu0 0.0
    %658 = vmatprep.subr.mxu0 0.0
    %659 = vmatpush1.msra.mxu0 0.0
    %660 = vmatprep.subr.mxu0 0.0
    %661 = vmatpush1.msra.mxu0 0.0
    %662 = vmatprep.subr.mxu0 0.0
    %663 = vmatpush1.msra.mxu0 0.0
    %664 = vmatprep.subr.mxu0 0.0
    %665 = vmatpush1.msra.mxu0 0.0
    %666 = vmatprep.subr.mxu0 0.0
    %667 = vmatpush1.msra.mxu0 0.0
    %668 = vmatprep.subr.mxu0 0.0
    %669 = vmatpush1.msra.mxu0 0.0
    %670 = vmatprep.subr.mxu0 0.0
    %671 = vmatpush1.msra.mxu0 0.0
    %672 = vmatprep.subr.mxu0 0.0
    %673 = vmatpush1.msra.mxu0 0.0
    %674 = vmatprep.subr.mxu0 0.0
    %675 = vmatpush1.msra.mxu0 0.0
    %676 = vmatprep.subr.mxu0 0.0
    %677 = vmatpush1.msra.mxu0 0.0
    %678 = vmatprep.subr.mxu0 0.0
    %679 = vmatpush1.msra.mxu0 0.0
    %680 = vmatprep.subr.mxu0 0.0
    %681 = vmatpush1.msra.mxu0 0.0
    %682 = vmatprep.subr.mxu0 0.0
    %683 = vmatpush1.msra.mxu0 0.0
    %684 = vmatprep.subr.mxu0 0.0
    %685 = vmatpush1.msra.mxu0 0.0
    %686 = vmatprep.subr.mxu0 0.0
    %687 = vmatpush1.msra.mxu0 0.0
    %688 = vmatprep.subr.mxu0 0.0
    %689 = vmatpush1.msra.mxu0 0.0
    %690 = vmatprep.subr.mxu0 0.0
    %691 = vmatpush1.msra.mxu0 0.0
    %692 = vmatprep.subr.mxu0 0.0
    %693 = vmatpush1.msra.mxu0 0.0
    %694 = vmatprep.subr.mxu0 0.0
    %695 = vmatpush1.msra.mxu0 0.0
    %696 = vmatprep.mubr.f32.mxu0 0.0
    %697 = vmatmul.mubr.f32.gmra.mrb[0].mxu0 %v630
    %v698 = vpop.f32.mrb[0].mxu0
    %v699 = vadd.f32 0.0, %v698
    %v700 = vpop.f32.mrb[0].mxu0
    %701 = vdwg.mxu0
    %703 = vrot.lane.b32.xlu0 %v311, 1
    %v704 = vpop.permute.xlu0 %703
    %v706 = vsel %vm113, -1e+30, %v704
    %707 = vrot.lane.b32.xlu0 %v311, 127
    %v708 = vpop.permute.xlu0 %707
    %v710 = vsel %vm118, %v708, -1e+30
    %v711 = vsel %vm136, -1e+30, %v706
    %v712 = vsel %vm140, -1e+30, %v710
    %v713 = vmax.f32 %v711, %v311
    %v714 = vmax.f32 %v713, %v712
    %716 = vrot.lane.b32.xlu0 %v714, 127
    %v717 = vpop.permute.xlu0 %716
    %719 = vrot.lane.b32.xlu0 %v714, 126
    %v720 = vpop.permute.xlu0 %719
    %722 = vrot.lane.b32.xlu0 %v714, 125
    %v723 = vpop.permute.xlu0 %722
    %725 = vrot.lane.b32.xlu0 %v714, 124
    %v726 = vpop.permute.xlu0 %725
    %728 = vrot.lane.b32.xlu0 %v714, 123
    %v729 = vpop.permute.xlu0 %728
    %731 = vrot.lane.b32.xlu0 %v714, 122
    %v732 = vpop.permute.xlu0 %731
    %734 = vrot.lane.b32.xlu0 %v714, 121
    %v735 = vpop.permute.xlu0 %734
    %737 = vrot.lane.b32.xlu0 %v714, 120
    %v738 = vpop.permute.xlu0 %737
    %740 = vrot.lane.b32.xlu0 %v714, 119
    %v741 = vpop.permute.xlu0 %740
    %743 = vrot.lane.b32.xlu0 %v714, 118
    %v744 = vpop.permute.xlu0 %743
    %746 = vrot.lane.b32.xlu0 %v714, 117
    %v747 = vpop.permute.xlu0 %746
    %749 = vrot.lane.b32.xlu0 %v714, 116
    %v750 = vpop.permute.xlu0 %749
    %752 = vrot.lane.b32.xlu0 %v714, 115
    %v753 = vpop.permute.xlu0 %752
    %755 = vrot.lane.b32.xlu0 %v714, 114
    %v756 = vpop.permute.xlu0 %755
    %758 = vrot.lane.b32.xlu0 %v714, 113
    %v759 = vpop.permute.xlu0 %758
    %v761 = vsel %vm113, %v714, %v717
    %vm762 = vcmask 15360
    %v763 = vsel %vm762, %v761, %v720
    %vm764 = vcmask 23552
    %v765 = vsel %vm764, %v763, %v723
    %vm766 = vcmask 31744
    %v767 = vsel %vm766, %v765, %v726
    %vm768 = vcmask 39936
    %v769 = vsel %vm768, %v767, %v729
    %vm770 = vcmask 48128
    %v771 = vsel %vm770, %v769, %v732
    %vm772 = vcmask 56320
    %v773 = vsel %vm772, %v771, %v735
    %vm774 = vcmask 64512
    %v775 = vsel %vm774, %v773, %v738
    %vm776 = vcmask 72704
    %v777 = vsel %vm776, %v775, %v741
    %vm778 = vcmask 80896
    %v779 = vsel %vm778, %v777, %v744
    %vm780 = vcmask 89088
    %v781 = vsel %vm780, %v779, %v747
    %vm782 = vcmask 97280
    %v783 = vsel %vm782, %v781, %v750
    %vm784 = vcmask 105472
    %v785 = vsel %vm784, %v783, %v753
    %vm786 = vcmask 113664
    %v787 = vsel %vm786, %v785, %v756
    %vm788 = vcmask 121856
    %v789 = vsel %vm788, %v787, %v759
    %790 = vset.pattern.permute.xlu0 12
    %791 = vperm.xlu0 %790, %v96
    %v792 = vpop.permute.xlu0 %791
    %v794 = vmul.f32 %v789, %v792
    %795 = vset.pattern.permute.xlu0 13
    %796 = vperm.xlu0 %795, %v96
    %v797 = vpop.permute.xlu0 %796
    %v799 = vadd.f32 %v794, %v797
    %v800 = vmax.f32 %v799, 0.0
    %802 = vrot.lane.b32.xlu0 %v800, 1
    %v803 = vpop.permute.xlu0 %802
    %v805 = vsel %vm113, 0.0, %v803
    %806 = vrot.lane.b32.xlu0 %v800, 127
    %v807 = vpop.permute.xlu0 %806
    %v809 = vsel %vm788, %v807, 0.0
    %vm810 = vcmp.lt.s32.totalorder %v121, 0
    %v811 = vsub.s32 0, %v121
    %v812 = vsel %vm810, %v811, %v121
    %v813 = vshrl.u32 %v812, 3
    %v814 = vand.u32 %v812, 7
    %v815 = vsub.s32 0, %v814
    %v816 = vsel %vm810, %v815, %v814
    %vm817 = vcmp.ne.s32.totalorder %v816, 0
    %vm818 = vcmp.lt.s32.totalorder %v816, 0
    %vm819 = vmand %vm818, %vm817
    %v820 = vadd.s32 %v816, 8
    %v821 = vsel %vm819, %v820, %v816
    %vm822 = vcmp.eq.s32.totalorder %v821, 0
    %v823 = vsel %vm822, 1, 0
    %vm824 = vcmp.eq.s32.totalorder %v823, 1
    %v825 = vsel %vm824, 0.0, %v805
    %vm826 = vcmp.eq.s32.totalorder %v821, 7
    %v827 = vsel %vm826, 1, 0
    %vm828 = vcmp.eq.s32.totalorder %v827, 1
    %v829 = vsel %vm828, 0.0, %v809
    %s830 = scalar_lea.vmem [#allocation5], 24
    %v831 = vld [vmem:[%s830] sm:$0xff]
    %v833 = vsel %vm143, %v831, 0
    %835 = vmatprep.subr.mxu0 0.0
    %836 = vmatpush1.msra.mxu0 %v825
    %837 = vmatprep.subr.mxu0 0.0
    %838 = vmatpush1.msra.mxu0 %v800
    %839 = vmatprep.subr.mxu0 0.0
    %840 = vmatpush1.msra.mxu0 %v829
    %841 = vmatprep.subr.mxu0 0.0
    %842 = vmatpush1.msra.mxu0 0.0
    %843 = vmatprep.subr.mxu0 0.0
    %844 = vmatpush1.msra.mxu0 0.0
    %845 = vmatprep.subr.mxu0 0.0
    %846 = vmatpush1.msra.mxu0 0.0
    %847 = vmatprep.subr.mxu0 0.0
    %848 = vmatpush1.msra.mxu0 0.0
    %849 = vmatprep.subr.mxu0 0.0
    %850 = vmatpush1.msra.mxu0 0.0
    %851 = vmatprep.subr.mxu0 0.0
    %852 = vmatpush1.msra.mxu0 0.0
    %853 = vmatprep.subr.mxu0 0.0
    %854 = vmatpush1.msra.mxu0 0.0
    %855 = vmatprep.subr.mxu0 0.0
    %856 = vmatpush1.msra.mxu0 0.0
    %857 = vmatprep.subr.mxu0 0.0
    %858 = vmatpush1.msra.mxu0 0.0
    %859 = vmatprep.subr.mxu0 0.0
    %860 = vmatpush1.msra.mxu0 0.0
    %861 = vmatprep.subr.mxu0 0.0
    %862 = vmatpush1.msra.mxu0 0.0
    %863 = vmatprep.subr.mxu0 0.0
    %864 = vmatpush1.msra.mxu0 0.0
    %865 = vmatprep.subr.mxu0 0.0
    %866 = vmatpush1.msra.mxu0 0.0
    %867 = vmatprep.subr.mxu0 0.0
    %868 = vmatpush1.msra.mxu0 0.0
    %869 = vmatprep.subr.mxu0 0.0
    %870 = vmatpush1.msra.mxu0 0.0
    %871 = vmatprep.subr.mxu0 0.0
    %872 = vmatpush1.msra.mxu0 0.0
    %873 = vmatprep.subr.mxu0 0.0
    %874 = vmatpush1.msra.mxu0 0.0
    %875 = vmatprep.subr.mxu0 0.0
    %876 = vmatpush1.msra.mxu0 0.0
    %877 = vmatprep.subr.mxu0 0.0
    %878 = vmatpush1.msra.mxu0 0.0
    %879 = vmatprep.subr.mxu0 0.0
    %880 = vmatpush1.msra.mxu0 0.0
    %881 = vmatprep.subr.mxu0 0.0
    %882 = vmatpush1.msra.mxu0 0.0
    %883 = vmatprep.subr.mxu0 0.0
    %884 = vmatpush1.msra.mxu0 0.0
    %885 = vmatprep.subr.mxu0 0.0
    %886 = vmatpush1.msra.mxu0 0.0
    %887 = vmatprep.subr.mxu0 0.0
    %888 = vmatpush1.msra.mxu0 0.0
    %889 = vmatprep.subr.mxu0 0.0
    %890 = vmatpush1.msra.mxu0 0.0
    %891 = vmatprep.subr.mxu0 0.0
    %892 = vmatpush1.msra.mxu0 0.0
    %893 = vmatprep.subr.mxu0 0.0
    %894 = vmatpush1.msra.mxu0 0.0
    %895 = vmatprep.subr.mxu0 0.0
    %896 = vmatpush1.msra.mxu0 0.0
    %897 = vmatprep.subr.mxu0 0.0
    %898 = vmatpush1.msra.mxu0 0.0
    %899 = vmatprep.mubr.f32.mxu0 0.0
    %900 = vmatmul.mubr.f32.gmra.mrb[0].mxu0 %v833
    %v901 = vpop.f32.mrb[0].mxu0
    %v902 = vadd.f32 0.0, %v901
    %v903 = vpop.f32.mrb[0].mxu0
    %904 = vdwg.mxu0
    %905 = vset.pattern.permute.xlu0 14
    %906 = vperm.xlu0 %905, %v96
    %v907 = vpop.permute.xlu0 %906
    %v909 = vmul.f32 %v902, %v907
    %910 = vset.pattern.permute.xlu0 15
    %911 = vperm.xlu0 %910, %v96
    %v912 = vpop.permute.xlu0 %911
    %v914 = vadd.f32 %v909, %v912
    %v915 = vmax.f32 %v914, 0.0
    %917 = vrot.lane.b32.xlu0 %v915, 1
    %v918 = vpop.permute.xlu0 %917
    %v920 = vsel %vm113, 0.0, %v918
    %921 = vrot.lane.b32.xlu0 %v915, 127
    %v922 = vpop.permute.xlu0 %921
    %v924 = vsel %vm788, %v922, 0.0
    %v925 = vsel %vm824, 0.0, %v920
    %v926 = vsel %vm828, 0.0, %v924
    %s927 = scalar_lea.vmem [#allocation7], 24
    %v928 = vld [vmem:[%s927] sm:$0xff]
    %v930 = vsel %vm240, %v928, 0
    %932 = vmatprep.subr.mxu0 0.0
    %933 = vmatpush1.msra.mxu0 %v925
    %934 = vmatprep.subr.mxu0 0.0
    %935 = vmatpush1.msra.mxu0 %v915
    %936 = vmatprep.subr.mxu0 0.0
    %937 = vmatpush1.msra.mxu0 %v926
    %938 = vmatprep.subr.mxu0 0.0
    %939 = vmatpush1.msra.mxu0 %v789
    %940 = vmatprep.subr.mxu0 0.0
    %941 = vmatpush1.msra.mxu0 0.0
    %942 = vmatprep.subr.mxu0 0.0
    %943 = vmatpush1.msra.mxu0 0.0
    %944 = vmatprep.subr.mxu0 0.0
    %945 = vmatpush1.msra.mxu0 0.0
    %946 = vmatprep.subr.mxu0 0.0
    %947 = vmatpush1.msra.mxu0 0.0
    %948 = vmatprep.subr.mxu0 0.0
    %949 = vmatpush1.msra.mxu0 0.0
    %950 = vmatprep.subr.mxu0 0.0
    %951 = vmatpush1.msra.mxu0 0.0
    %952 = vmatprep.subr.mxu0 0.0
    %953 = vmatpush1.msra.mxu0 0.0
    %954 = vmatprep.subr.mxu0 0.0
    %955 = vmatpush1.msra.mxu0 0.0
    %956 = vmatprep.subr.mxu0 0.0
    %957 = vmatpush1.msra.mxu0 0.0
    %958 = vmatprep.subr.mxu0 0.0
    %959 = vmatpush1.msra.mxu0 0.0
    %960 = vmatprep.subr.mxu0 0.0
    %961 = vmatpush1.msra.mxu0 0.0
    %962 = vmatprep.subr.mxu0 0.0
    %963 = vmatpush1.msra.mxu0 0.0
    %964 = vmatprep.subr.mxu0 0.0
    %965 = vmatpush1.msra.mxu0 0.0
    %966 = vmatprep.subr.mxu0 0.0
    %967 = vmatpush1.msra.mxu0 0.0
    %968 = vmatprep.subr.mxu0 0.0
    %969 = vmatpush1.msra.mxu0 0.0
    %970 = vmatprep.subr.mxu0 0.0
    %971 = vmatpush1.msra.mxu0 0.0
    %972 = vmatprep.subr.mxu0 0.0
    %973 = vmatpush1.msra.mxu0 0.0
    %974 = vmatprep.subr.mxu0 0.0
    %975 = vmatpush1.msra.mxu0 0.0
    %976 = vmatprep.subr.mxu0 0.0
    %977 = vmatpush1.msra.mxu0 0.0
    %978 = vmatprep.subr.mxu0 0.0
    %979 = vmatpush1.msra.mxu0 0.0
    %980 = vmatprep.subr.mxu0 0.0
    %981 = vmatpush1.msra.mxu0 0.0
    %982 = vmatprep.subr.mxu0 0.0
    %983 = vmatpush1.msra.mxu0 0.0
    %984 = vmatprep.subr.mxu0 0.0
    %985 = vmatpush1.msra.mxu0 0.0
    %986 = vmatprep.subr.mxu0 0.0
    %987 = vmatpush1.msra.mxu0 0.0
    %988 = vmatprep.subr.mxu0 0.0
    %989 = vmatpush1.msra.mxu0 0.0
    %990 = vmatprep.subr.mxu0 0.0
    %991 = vmatpush1.msra.mxu0 0.0
    %992 = vmatprep.subr.mxu0 0.0
    %993 = vmatpush1.msra.mxu0 0.0
    %994 = vmatprep.subr.mxu0 0.0
    %995 = vmatpush1.msra.mxu0 0.0
    %996 = vmatprep.mubr.f32.mxu0 0.0
    %997 = vmatmul.mubr.f32.gmra.mrb[0].mxu0 %v930
    %v998 = vpop.f32.mrb[0].mxu0
    %v999 = vadd.f32 0.0, %v998
    %v1000 = vpop.f32.mrb[0].mxu0
    %1001 = vdwg.mxu0
    %1002 = vset.pattern.permute.xlu0 16
    %1003 = vperm.xlu0 %1002, %v96
    %v1004 = vpop.permute.xlu0 %1003
    %v1006 = vmul.f32 %v999, %v1004
    %1007 = vset.pattern.permute.xlu0 17
    %1008 = vperm.xlu0 %1007, %v96
    %v1009 = vpop.permute.xlu0 %1008
    %v1011 = vadd.f32 %v1006, %v1009
    %v1012 = vmax.f32 %v1011, 0.0
    %1014 = vrot.lane.b32.xlu0 %v1012, 1
    %v1015 = vpop.permute.xlu0 %1014
    %v1017 = vsel %vm113, 0.0, %v1015
    %1018 = vrot.lane.b32.xlu0 %v1012, 127
    %v1019 = vpop.permute.xlu0 %1018
    %v1021 = vsel %vm788, %v1019, 0.0
    %v1022 = vsel %vm824, 0.0, %v1017
    %v1023 = vsel %vm828, 0.0, %v1021
    %s1024 = scalar_lea.vmem [#allocation5], 32
    %v1025 = vld [vmem:[%s1024] sm:$0xff]
    %v1027 = vsel %vm143, %v1025, 0
    %1029 = vmatprep.subr.mxu0 0.0
    %1030 = vmatpush1.msra.mxu0 %v1022
    %1031 = vmatprep.subr.mxu0 0.0
    %1032 = vmatpush1.msra.mxu0 %v1012
    %1033 = vmatprep.subr.mxu0 0.0
    %1034 = vmatpush1.msra.mxu0 %v1023
    %1035 = vmatprep.subr.mxu0 0.0
    %1036 = vmatpush1.msra.mxu0 0.0
    %1037 = vmatprep.subr.mxu0 0.0
    %1038 = vmatpush1.msra.mxu0 0.0
    %1039 = vmatprep.subr.mxu0 0.0
    %1040 = vmatpush1.msra.mxu0 0.0
    %1041 = vmatprep.subr.mxu0 0.0
    %1042 = vmatpush1.msra.mxu0 0.0
    %1043 = vmatprep.subr.mxu0 0.0
    %1044 = vmatpush1.msra.mxu0 0.0
    %1045 = vmatprep.subr.mxu0 0.0
    %1046 = vmatpush1.msra.mxu0 0.0
    %1047 = vmatprep.subr.mxu0 0.0
    %1048 = vmatpush1.msra.mxu0 0.0
    %1049 = vmatprep.subr.mxu0 0.0
    %1050 = vmatpush1.msra.mxu0 0.0
    %1051 = vmatprep.subr.mxu0 0.0
    %1052 = vmatpush1.msra.mxu0 0.0
    %1053 = vmatprep.subr.mxu0 0.0
    %1054 = vmatpush1.msra.mxu0 0.0
    %1055 = vmatprep.subr.mxu0 0.0
    %1056 = vmatpush1.msra.mxu0 0.0
    %1057 = vmatprep.subr.mxu0 0.0
    %1058 = vmatpush1.msra.mxu0 0.0
    %1059 = vmatprep.subr.mxu0 0.0
    %1060 = vmatpush1.msra.mxu0 0.0
    %1061 = vmatprep.subr.mxu0 0.0
    %1062 = vmatpush1.msra.mxu0 0.0
    %1063 = vmatprep.subr.mxu0 0.0
    %1064 = vmatpush1.msra.mxu0 0.0
    %1065 = vmatprep.subr.mxu0 0.0
    %1066 = vmatpush1.msra.mxu0 0.0
    %1067 = vmatprep.subr.mxu0 0.0
    %1068 = vmatpush1.msra.mxu0 0.0
    %1069 = vmatprep.subr.mxu0 0.0
    %1070 = vmatpush1.msra.mxu0 0.0
    %1071 = vmatprep.subr.mxu0 0.0
    %1072 = vmatpush1.msra.mxu0 0.0
    %1073 = vmatprep.subr.mxu0 0.0
    %1074 = vmatpush1.msra.mxu0 0.0
    %1075 = vmatprep.subr.mxu0 0.0
    %1076 = vmatpush1.msra.mxu0 0.0
    %1077 = vmatprep.subr.mxu0 0.0
    %1078 = vmatpush1.msra.mxu0 0.0
    %1079 = vmatprep.subr.mxu0 0.0
    %1080 = vmatpush1.msra.mxu0 0.0
    %1081 = vmatprep.subr.mxu0 0.0
    %1082 = vmatpush1.msra.mxu0 0.0
    %1083 = vmatprep.subr.mxu0 0.0
    %1084 = vmatpush1.msra.mxu0 0.0
    %1085 = vmatprep.subr.mxu0 0.0
    %1086 = vmatpush1.msra.mxu0 0.0
    %1087 = vmatprep.subr.mxu0 0.0
    %1088 = vmatpush1.msra.mxu0 0.0
    %1089 = vmatprep.subr.mxu0 0.0
    %1090 = vmatpush1.msra.mxu0 0.0
    %1091 = vmatprep.subr.mxu0 0.0
    %1092 = vmatpush1.msra.mxu0 0.0
    %1093 = vmatprep.mubr.f32.mxu0 0.0
    %1094 = vmatmul.mubr.f32.gmra.mrb[0].mxu0 %v1027
    %v1095 = vpop.f32.mrb[0].mxu0
    %v1096 = vadd.f32 0.0, %v1095
    %v1097 = vpop.f32.mrb[0].mxu0
    %1098 = vdwg.mxu0
    %1099 = vset.pattern.permute.xlu0 18
    %1100 = vperm.xlu0 %1099, %v96
    %v1101 = vpop.permute.xlu0 %1100
    %v1103 = vmul.f32 %v1096, %v1101
    %1104 = vset.pattern.permute.xlu0 19
    %1105 = vperm.xlu0 %1104, %v96
    %v1106 = vpop.permute.xlu0 %1105
    %v1108 = vadd.f32 %v1103, %v1106
    %v1109 = vmax.f32 %v1108, 0.0
    %1111 = vrot.lane.b32.xlu0 %v1109, 1
    %v1112 = vpop.permute.xlu0 %1111
    %v1114 = vsel %vm113, 0.0, %v1112
    %1115 = vrot.lane.b32.xlu0 %v1109, 127
    %v1116 = vpop.permute.xlu0 %1115
    %v1118 = vsel %vm788, %v1116, 0.0
    %v1119 = vsel %vm824, 0.0, %v1114
    %v1120 = vsel %vm828, 0.0, %v1118
    %s1121 = scalar_lea.vmem [#allocation7], 32
    %v1122 = vld [vmem:[%s1121] sm:$0xff]
    %v1124 = vsel %vm240, %v1122, 0
    %1126 = vmatprep.subr.mxu0 0.0
    %1127 = vmatpush1.msra.mxu0 %v1119
    %1128 = vmatprep.subr.mxu0 0.0
    %1129 = vmatpush1.msra.mxu0 %v1109
    %1130 = vmatprep.subr.mxu0 0.0
    %1131 = vmatpush1.msra.mxu0 %v1120
    %1132 = vmatprep.subr.mxu0 0.0
    %1133 = vmatpush1.msra.mxu0 %v999
    %1134 = vmatprep.subr.mxu0 0.0
    %1135 = vmatpush1.msra.mxu0 0.0
    %1136 = vmatprep.subr.mxu0 0.0
    %1137 = vmatpush1.msra.mxu0 0.0
    %1138 = vmatprep.subr.mxu0 0.0
    %1139 = vmatpush1.msra.mxu0 0.0
    %1140 = vmatprep.subr.mxu0 0.0
    %1141 = vmatpush1.msra.mxu0 0.0
    %1142 = vmatprep.subr.mxu0 0.0
    %1143 = vmatpush1.msra.mxu0 0.0
    %1144 = vmatprep.subr.mxu0 0.0
    %1145 = vmatpush1.msra.mxu0 0.0
    %1146 = vmatprep.subr.mxu0 0.0
    %1147 = vmatpush1.msra.mxu0 0.0
    %1148 = vmatprep.subr.mxu0 0.0
    %1149 = vmatpush1.msra.mxu0 0.0
    %1150 = vmatprep.subr.mxu0 0.0
    %1151 = vmatpush1.msra.mxu0 0.0
    %1152 = vmatprep.subr.mxu0 0.0
    %1153 = vmatpush1.msra.mxu0 0.0
    %1154 = vmatprep.subr.mxu0 0.0
    %1155 = vmatpush1.msra.mxu0 0.0
    %1156 = vmatprep.subr.mxu0 0.0
    %1157 = vmatpush1.msra.mxu0 0.0
    %1158 = vmatprep.subr.mxu0 0.0
    %1159 = vmatpush1.msra.mxu0 0.0
    %1160 = vmatprep.subr.mxu0 0.0
    %1161 = vmatpush1.msra.mxu0 0.0
    %1162 = vmatprep.subr.mxu0 0.0
    %1163 = vmatpush1.msra.mxu0 0.0
    %1164 = vmatprep.subr.mxu0 0.0
    %1165 = vmatpush1.msra.mxu0 0.0
    %1166 = vmatprep.subr.mxu0 0.0
    %1167 = vmatpush1.msra.mxu0 0.0
    %1168 = vmatprep.subr.mxu0 0.0
    %1169 = vmatpush1.msra.mxu0 0.0
    %1170 = vmatprep.subr.mxu0 0.0
    %1171 = vmatpush1.msra.mxu0 0.0
    %1172 = vmatprep.subr.mxu0 0.0
    %1173 = vmatpush1.msra.mxu0 0.0
    %1174 = vmatprep.subr.mxu0 0.0
    %1175 = vmatpush1.msra.mxu0 0.0
    %1176 = vmatprep.subr.mxu0 0.0
    %1177 = vmatpush1.msra.mxu0 0.0
    %1178 = vmatprep.subr.mxu0 0.0
    %1179 = vmatpush1.msra.mxu0 0.0
    %1180 = vmatprep.subr.mxu0 0.0
    %1181 = vmatpush1.msra.mxu0 0.0
    %1182 = vmatprep.subr.mxu0 0.0
    %1183 = vmatpush1.msra.mxu0 0.0
    %1184 = vmatprep.subr.mxu0 0.0
    %1185 = vmatpush1.msra.mxu0 0.0
    %1186 = vmatprep.subr.mxu0 0.0
    %1187 = vmatpush1.msra.mxu0 0.0
    %1188 = vmatprep.subr.mxu0 0.0
    %1189 = vmatpush1.msra.mxu0 0.0
    %1190 = vmatprep.mubr.f32.mxu0 0.0
    %1191 = vmatmul.mubr.f32.gmra.mrb[0].mxu0 %v1124
    %v1192 = vpop.f32.mrb[0].mxu0
    %v1193 = vadd.f32 0.0, %v1192
    %v1194 = vpop.f32.mrb[0].mxu0
    %1195 = vdwg.mxu0
    %1197 = vrot.lane.b32.xlu0 %v999, 1
    %v1198 = vpop.permute.xlu0 %1197
    %v1200 = vsel %vm113, -1e+30, %v1198
    %1201 = vrot.lane.b32.xlu0 %v999, 127
    %v1202 = vpop.permute.xlu0 %1201
    %v1204 = vsel %vm788, %v1202, -1e+30
    %v1205 = vsel %vm824, -1e+30, %v1200
    %v1206 = vsel %vm828, -1e+30, %v1204
    %v1207 = vmax.f32 %v1205, %v999
    %v1208 = vmax.f32 %v1207, %v1206
    %1210 = vrot.lane.b32.xlu0 %v1208, 127
    %v1211 = vpop.permute.xlu0 %1210
    %1213 = vrot.lane.b32.xlu0 %v1208, 126
    %v1214 = vpop.permute.xlu0 %1213
    %1216 = vrot.lane.b32.xlu0 %v1208, 125
    %v1217 = vpop.permute.xlu0 %1216
    %1219 = vrot.lane.b32.xlu0 %v1208, 124
    %v1220 = vpop.permute.xlu0 %1219
    %1222 = vrot.lane.b32.xlu0 %v1208, 123
    %v1223 = vpop.permute.xlu0 %1222
    %1225 = vrot.lane.b32.xlu0 %v1208, 122
    %v1226 = vpop.permute.xlu0 %1225
    %1228 = vrot.lane.b32.xlu0 %v1208, 121
    %v1229 = vpop.permute.xlu0 %1228
    %v1231 = vsel %vm113, %v1208, %v1211
    %v1232 = vsel %vm762, %v1231, %v1214
    %v1233 = vsel %vm764, %v1232, %v1217
    %v1234 = vsel %vm766, %v1233, %v1220
    %v1235 = vsel %vm768, %v1234, %v1223
    %v1236 = vsel %vm770, %v1235, %v1226
    %v1237 = vsel %vm772, %v1236, %v1229
    %1238 = vset.pattern.permute.xlu0 20
    %1239 = vperm.xlu0 %1238, %v96
    %v1240 = vpop.permute.xlu0 %1239
    %v1242 = vmul.f32 %v1237, %v1240
    %1243 = vset.pattern.permute.xlu0 21
    %1244 = vperm.xlu0 %1243, %v96
    %v1245 = vpop.permute.xlu0 %1244
    %v1247 = vadd.f32 %v1242, %v1245
    %v1248 = vmax.f32 %v1247, 0.0
    %1250 = vrot.lane.b32.xlu0 %v1248, 1
    %v1251 = vpop.permute.xlu0 %1250
    %v1253 = vsel %vm113, 0.0, %v1251
    %1254 = vrot.lane.b32.xlu0 %v1248, 127
    %v1255 = vpop.permute.xlu0 %1254
    %v1257 = vsel %vm772, %v1255, 0.0
    %vm1258 = vcmp.lt.s32.totalorder %v121, 0
    %v1259 = vsub.s32 0, %v121
    %v1260 = vsel %vm1258, %v1259, %v121
    %v1261 = vshrl.u32 %v1260, 2
    %v1262 = vand.u32 %v1260, 3
    %v1263 = vsub.s32 0, %v1262
    %v1264 = vsel %vm1258, %v1263, %v1262
    %vm1265 = vcmp.ne.s32.totalorder %v1264, 0
    %vm1266 = vcmp.lt.s32.totalorder %v1264, 0
    %vm1267 = vmand %vm1266, %vm1265
    %v1268 = vadd.s32 %v1264, 4
    %v1269 = vsel %vm1267, %v1268, %v1264
    %vm1270 = vcmp.eq.s32.totalorder %v1269, 0
    %v1271 = vsel %vm1270, 1, 0
    %vm1272 = vcmp.eq.s32.totalorder %v1271, 1
    %v1273 = vsel %vm1272, 0.0, %v1253
    %vm1274 = vcmp.eq.s32.totalorder %v1269, 3
    %v1275 = vsel %vm1274, 1, 0
    %vm1276 = vcmp.eq.s32.totalorder %v1275, 1
    %v1277 = vsel %vm1276, 0.0, %v1257
    %s1278 = scalar_lea.vmem [#allocation5], 40
    %v1279 = vld [vmem:[%s1278] sm:$0xff]
    %v1281 = vsel %vm143, %v1279, 0
    %1283 = vmatprep.subr.mxu0 0.0
    %1284 = vmatpush1.msra.mxu0 %v1273
    %1285 = vmatprep.subr.mxu0 0.0
    %1286 = vmatpush1.msra.mxu0 %v1248
    %1287 = vmatprep.subr.mxu0 0.0
    %1288 = vmatpush1.msra.mxu0 %v1277
    %1289 = vmatprep.subr.mxu0 0.0
    %1290 = vmatpush1.msra.mxu0 0.0
    %1291 = vmatprep.subr.mxu0 0.0
    %1292 = vmatpush1.msra.mxu0 0.0
    %1293 = vmatprep.subr.mxu0 0.0
    %1294 = vmatpush1.msra.mxu0 0.0
    %1295 = vmatprep.subr.mxu0 0.0
    %1296 = vmatpush1.msra.mxu0 0.0
    %1297 = vmatprep.subr.mxu0 0.0
    %1298 = vmatpush1.msra.mxu0 0.0
    %1299 = vmatprep.subr.mxu0 0.0
    %1300 = vmatpush1.msra.mxu0 0.0
    %1301 = vmatprep.subr.mxu0 0.0
    %1302 = vmatpush1.msra.mxu0 0.0
    %1303 = vmatprep.subr.mxu0 0.0
    %1304 = vmatpush1.msra.mxu0 0.0
    %1305 = vmatprep.subr.mxu0 0.0
    %1306 = vmatpush1.msra.mxu0 0.0
    %1307 = vmatprep.subr.mxu0 0.0
    %1308 = vmatpush1.msra.mxu0 0.0
    %1309 = vmatprep.subr.mxu0 0.0
    %1310 = vmatpush1.msra.mxu0 0.0
    %1311 = vmatprep.subr.mxu0 0.0
    %1312 = vmatpush1.msra.mxu0 0.0
    %1313 = vmatprep.subr.mxu0 0.0
    %1314 = vmatpush1.msra.mxu0 0.0
    %1315 = vmatprep.subr.mxu0 0.0
    %1316 = vmatpush1.msra.mxu0 0.0
    %1317 = vmatprep.subr.mxu0 0.0
    %1318 = vmatpush1.msra.mxu0 0.0
    %1319 = vmatprep.subr.mxu0 0.0
    %1320 = vmatpush1.msra.mxu0 0.0
    %1321 = vmatprep.subr.mxu0 0.0
    %1322 = vmatpush1.msra.mxu0 0.0
    %1323 = vmatprep.subr.mxu0 0.0
    %1324 = vmatpush1.msra.mxu0 0.0
    %1325 = vmatprep.subr.mxu0 0.0
    %1326 = vmatpush1.msra.mxu0 0.0
    %1327 = vmatprep.subr.mxu0 0.0
    %1328 = vmatpush1.msra.mxu0 0.0
    %1329 = vmatprep.subr.mxu0 0.0
    %1330 = vmatpush1.msra.mxu0 0.0
    %1331 = vmatprep.subr.mxu0 0.0
    %1332 = vmatpush1.msra.mxu0 0.0
    %1333 = vmatprep.subr.mxu0 0.0
    %1334 = vmatpush1.msra.mxu0 0.0
    %1335 = vmatprep.subr.mxu0 0.0
    %1336 = vmatpush1.msra.mxu0 0.0
    %1337 = vmatprep.subr.mxu0 0.0
    %1338 = vmatpush1.msra.mxu0 0.0
    %1339 = vmatprep.subr.mxu0 0.0
    %1340 = vmatpush1.msra.mxu0 0.0
    %1341 = vmatprep.subr.mxu0 0.0
    %1342 = vmatpush1.msra.mxu0 0.0
    %1343 = vmatprep.subr.mxu0 0.0
    %1344 = vmatpush1.msra.mxu0 0.0
    %1345 = vmatprep.subr.mxu0 0.0
    %1346 = vmatpush1.msra.mxu0 0.0
    %1347 = vmatprep.mubr.f32.mxu0 0.0
    %1348 = vmatmul.mubr.f32.gmra.mrb[0].mxu0 %v1281
    %v1349 = vpop.f32.mrb[0].mxu0
    %v1350 = vadd.f32 0.0, %v1349
    %v1351 = vpop.f32.mrb[0].mxu0
    %1352 = vdwg.mxu0
    %1353 = vset.pattern.permute.xlu0 22
    %1354 = vperm.xlu0 %1353, %v96
    %v1355 = vpop.permute.xlu0 %1354
    %v1357 = vmul.f32 %v1350, %v1355
    %1358 = vset.pattern.permute.xlu0 23
    %1359 = vperm.xlu0 %1358, %v96
    %v1360 = vpop.permute.xlu0 %1359
    %v1362 = vadd.f32 %v1357, %v1360
    %v1363 = vmax.f32 %v1362, 0.0
    %1365 = vrot.lane.b32.xlu0 %v1363, 1
    %v1366 = vpop.permute.xlu0 %1365
    %v1368 = vsel %vm113, 0.0, %v1366
    %1369 = vrot.lane.b32.xlu0 %v1363, 127
    %v1370 = vpop.permute.xlu0 %1369
    %v1372 = vsel %vm772, %v1370, 0.0
    %v1373 = vsel %vm1272, 0.0, %v1368
    %v1374 = vsel %vm1276, 0.0, %v1372
    %s1375 = scalar_lea.vmem [#allocation7], 40
    %v1376 = vld [vmem:[%s1375] sm:$0xff]
    %v1378 = vsel %vm240, %v1376, 0
    %1380 = vmatprep.subr.mxu0 0.0
    %1381 = vmatpush1.msra.mxu0 %v1373
    %1382 = vmatprep.subr.mxu0 0.0
    %1383 = vmatpush1.msra.mxu0 %v1363
    %1384 = vmatprep.subr.mxu0 0.0
    %1385 = vmatpush1.msra.mxu0 %v1374
    %1386 = vmatprep.subr.mxu0 0.0
    %1387 = vmatpush1.msra.mxu0 %v1237
    %1388 = vmatprep.subr.mxu0 0.0
    %1389 = vmatpush1.msra.mxu0 0.0
    %1390 = vmatprep.subr.mxu0 0.0
    %1391 = vmatpush1.msra.mxu0 0.0
    %1392 = vmatprep.subr.mxu0 0.0
    %1393 = vmatpush1.msra.mxu0 0.0
    %1394 = vmatprep.subr.mxu0 0.0
    %1395 = vmatpush1.msra.mxu0 0.0
    %1396 = vmatprep.subr.mxu0 0.0
    %1397 = vmatpush1.msra.mxu0 0.0
    %1398 = vmatprep.subr.mxu0 0.0
    %1399 = vmatpush1.msra.mxu0 0.0
    %1400 = vmatprep.subr.mxu0 0.0
    %1401 = vmatpush1.msra.mxu0 0.0
    %1402 = vmatprep.subr.mxu0 0.0
    %1403 = vmatpush1.msra.mxu0 0.0
    %1404 = vmatprep.subr.mxu0 0.0
    %1405 = vmatpush1.msra.mxu0 0.0
    %1406 = vmatprep.subr.mxu0 0.0
    %1407 = vmatpush1.msra.mxu0 0.0
    %1408 = vmatprep.subr.mxu0 0.0
    %1409 = vmatpush1.msra.mxu0 0.0
    %1410 = vmatprep.subr.mxu0 0.0
    %1411 = vmatpush1.msra.mxu0 0.0
    %1412 = vmatprep.subr.mxu0 0.0
    %1413 = vmatpush1.msra.mxu0 0.0
    %1414 = vmatprep.subr.mxu0 0.0
    %1415 = vmatpush1.msra.mxu0 0.0
    %1416 = vmatprep.subr.mxu0 0.0
    %1417 = vmatpush1.msra.mxu0 0.0
    %1418 = vmatprep.subr.mxu0 0.0
    %1419 = vmatpush1.msra.mxu0 0.0
    %1420 = vmatprep.subr.mxu0 0.0
    %1421 = vmatpush1.msra.mxu0 0.0
    %1422 = vmatprep.subr.mxu0 0.0
    %1423 = vmatpush1.msra.mxu0 0.0
    %1424 = vmatprep.subr.mxu0 0.0
    %1425 = vmatpush1.msra.mxu0 0.0
    %1426 = vmatprep.subr.mxu0 0.0
    %1427 = vmatpush1.msra.mxu0 0.0
    %1428 = vmatprep.subr.mxu0 0.0
    %1429 = vmatpush1.msra.mxu0 0.0
    %1430 = vmatprep.subr.mxu0 0.0
    %1431 = vmatpush1.msra.mxu0 0.0
    %1432 = vmatprep.subr.mxu0 0.0
    %1433 = vmatpush1.msra.mxu0 0.0
    %1434 = vmatprep.subr.mxu0 0.0
    %1435 = vmatpush1.msra.mxu0 0.0
    %1436 = vmatprep.subr.mxu0 0.0
    %1437 = vmatpush1.msra.mxu0 0.0
    %1438 = vmatprep.subr.mxu0 0.0
    %1439 = vmatpush1.msra.mxu0 0.0
    %1440 = vmatprep.subr.mxu0 0.0
    %1441 = vmatpush1.msra.mxu0 0.0
    %1442 = vmatprep.subr.mxu0 0.0
    %1443 = vmatpush1.msra.mxu0 0.0
    %1444 = vmatprep.mubr.f32.mxu0 0.0
    %1445 = vmatmul.mubr.f32.gmra.mrb[0].mxu0 %v1378
    %v1446 = vpop.f32.mrb[0].mxu0
    %v1447 = vadd.f32 0.0, %v1446
    %v1448 = vpop.f32.mrb[0].mxu0
    %1449 = vdwg.mxu0
    %1450 = vset.pattern.permute.xlu0 24
    %1451 = vperm.xlu0 %1450, %v96
    %v1452 = vpop.permute.xlu0 %1451
    %v1454 = vmul.f32 %v1447, %v1452
    %1455 = vset.pattern.permute.xlu0 25
    %1456 = vperm.xlu0 %1455, %v96
    %v1457 = vpop.permute.xlu0 %1456
    %v1459 = vadd.f32 %v1454, %v1457
    %v1460 = vmax.f32 %v1459, 0.0
    %1462 = vrot.lane.b32.xlu0 %v1460, 1
    %v1463 = vpop.permute.xlu0 %1462
    %v1465 = vsel %vm113, 0.0, %v1463
    %1466 = vrot.lane.b32.xlu0 %v1460, 127
    %v1467 = vpop.permute.xlu0 %1466
    %v1469 = vsel %vm772, %v1467, 0.0
    %v1470 = vsel %vm1272, 0.0, %v1465
    %v1471 = vsel %vm1276, 0.0, %v1469
    %s1472 = scalar_lea.vmem [#allocation5], 48
    %v1473 = vld [vmem:[%s1472] sm:$0xff]
    %v1475 = vsel %vm143, %v1473, 0
    %1477 = vmatprep.subr.mxu0 0.0
    %1478 = vmatpush1.msra.mxu0 %v1470
    %1479 = vmatprep.subr.mxu0 0.0
    %1480 = vmatpush1.msra.mxu0 %v1460
    %1481 = vmatprep.subr.mxu0 0.0
    %1482 = vmatpush1.msra.mxu0 %v1471
    %1483 = vmatprep.subr.mxu0 0.0
    %1484 = vmatpush1.msra.mxu0 0.0
    %1485 = vmatprep.subr.mxu0 0.0
    %1486 = vmatpush1.msra.mxu0 0.0
    %1487 = vmatprep.subr.mxu0 0.0
    %1488 = vmatpush1.msra.mxu0 0.0
    %1489 = vmatprep.subr.mxu0 0.0
    %1490 = vmatpush1.msra.mxu0 0.0
    %1491 = vmatprep.subr.mxu0 0.0
    %1492 = vmatpush1.msra.mxu0 0.0
    %1493 = vmatprep.subr.mxu0 0.0
    %1494 = vmatpush1.msra.mxu0 0.0
    %1495 = vmatprep.subr.mxu0 0.0
    %1496 = vmatpush1.msra.mxu0 0.0
    %1497 = vmatprep.subr.mxu0 0.0
    %1498 = vmatpush1.msra.mxu0 0.0
    %1499 = vmatprep.subr.mxu0 0.0
    %1500 = vmatpush1.msra.mxu0 0.0
    %1501 = vmatprep.subr.mxu0 0.0
    %1502 = vmatpush1.msra.mxu0 0.0
    %1503 = vmatprep.subr.mxu0 0.0
    %1504 = vmatpush1.msra.mxu0 0.0
    %1505 = vmatprep.subr.mxu0 0.0
    %1506 = vmatpush1.msra.mxu0 0.0
    %1507 = vmatprep.subr.mxu0 0.0
    %1508 = vmatpush1.msra.mxu0 0.0
    %1509 = vmatprep.subr.mxu0 0.0
    %1510 = vmatpush1.msra.mxu0 0.0
    %1511 = vmatprep.subr.mxu0 0.0
    %1512 = vmatpush1.msra.mxu0 0.0
    %1513 = vmatprep.subr.mxu0 0.0
    %1514 = vmatpush1.msra.mxu0 0.0
    %1515 = vmatprep.subr.mxu0 0.0
    %1516 = vmatpush1.msra.mxu0 0.0
    %1517 = vmatprep.subr.mxu0 0.0
    %1518 = vmatpush1.msra.mxu0 0.0
    %1519 = vmatprep.subr.mxu0 0.0
    %1520 = vmatpush1.msra.mxu0 0.0
    %1521 = vmatprep.subr.mxu0 0.0
    %1522 = vmatpush1.msra.mxu0 0.0
    %1523 = vmatprep.subr.mxu0 0.0
    %1524 = vmatpush1.msra.mxu0 0.0
    %1525 = vmatprep.subr.mxu0 0.0
    %1526 = vmatpush1.msra.mxu0 0.0
    %1527 = vmatprep.subr.mxu0 0.0
    %1528 = vmatpush1.msra.mxu0 0.0
    %1529 = vmatprep.subr.mxu0 0.0
    %1530 = vmatpush1.msra.mxu0 0.0
    %1531 = vmatprep.subr.mxu0 0.0
    %1532 = vmatpush1.msra.mxu0 0.0
    %1533 = vmatprep.subr.mxu0 0.0
    %1534 = vmatpush1.msra.mxu0 0.0
    %1535 = vmatprep.subr.mxu0 0.0
    %1536 = vmatpush1.msra.mxu0 0.0
    %1537 = vmatprep.subr.mxu0 0.0
    %1538 = vmatpush1.msra.mxu0 0.0
    %1539 = vmatprep.subr.mxu0 0.0
    %1540 = vmatpush1.msra.mxu0 0.0
    %1541 = vmatprep.mubr.f32.mxu0 0.0
    %1542 = vmatmul.mubr.f32.gmra.mrb[0].mxu0 %v1475
    %v1543 = vpop.f32.mrb[0].mxu0
    %v1544 = vadd.f32 0.0, %v1543
    %v1545 = vpop.f32.mrb[0].mxu0
    %1546 = vdwg.mxu0
    %1547 = vset.pattern.permute.xlu0 26
    %1548 = vperm.xlu0 %1547, %v96
    %v1549 = vpop.permute.xlu0 %1548
    %v1551 = vmul.f32 %v1544, %v1549
    %1552 = vset.pattern.permute.xlu0 27
    %1553 = vperm.xlu0 %1552, %v96
    %v1554 = vpop.permute.xlu0 %1553
    %v1556 = vadd.f32 %v1551, %v1554
    %v1557 = vmax.f32 %v1556, 0.0
    %1559 = vrot.lane.b32.xlu0 %v1557, 1
    %v1560 = vpop.permute.xlu0 %1559
    %v1562 = vsel %vm113, 0.0, %v1560
    %1563 = vrot.lane.b32.xlu0 %v1557, 127
    %v1564 = vpop.permute.xlu0 %1563
    %v1566 = vsel %vm772, %v1564, 0.0
    %v1567 = vsel %vm1272, 0.0, %v1562
    %v1568 = vsel %vm1276, 0.0, %v1566
    %s1569 = scalar_lea.vmem [#allocation7], 48
    %v1570 = vld [vmem:[%s1569] sm:$0xff]
    %v1572 = vsel %vm240, %v1570, 0
    %1574 = vmatprep.subr.mxu0 0.0
    %1575 = vmatpush1.msra.mxu0 %v1567
    %1576 = vmatprep.subr.mxu0 0.0
    %1577 = vmatpush1.msra.mxu0 %v1557
    %1578 = vmatprep.subr.mxu0 0.0
    %1579 = vmatpush1.msra.mxu0 %v1568
    %1580 = vmatprep.subr.mxu0 0.0
    %1581 = vmatpush1.msra.mxu0 %v1447
    %1582 = vmatprep.subr.mxu0 0.0
    %1583 = vmatpush1.msra.mxu0 0.0
    %1584 = vmatprep.subr.mxu0 0.0
    %1585 = vmatpush1.msra.mxu0 0.0
    %1586 = vmatprep.subr.mxu0 0.0
    %1587 = vmatpush1.msra.mxu0 0.0
    %1588 = vmatprep.subr.mxu0 0.0
    %1589 = vmatpush1.msra.mxu0 0.0
    %1590 = vmatprep.subr.mxu0 0.0
    %1591 = vmatpush1.msra.mxu0 0.0
    %1592 = vmatprep.subr.mxu0 0.0
    %1593 = vmatpush1.msra.mxu0 0.0
    %1594 = vmatprep.subr.mxu0 0.0
    %1595 = vmatpush1.msra.mxu0 0.0
    %1596 = vmatprep.subr.mxu0 0.0
    %1597 = vmatpush1.msra.mxu0 0.0
    %1598 = vmatprep.subr.mxu0 0.0
    %1599 = vmatpush1.msra.mxu0 0.0
    %1600 = vmatprep.subr.mxu0 0.0
    %1601 = vmatpush1.msra.mxu0 0.0
    %1602 = vmatprep.subr.mxu0 0.0
    %1603 = vmatpush1.msra.mxu0 0.0
    %1604 = vmatprep.subr.mxu0 0.0
    %1605 = vmatpush1.msra.mxu0 0.0
    %1606 = vmatprep.subr.mxu0 0.0
    %1607 = vmatpush1.msra.mxu0 0.0
    %1608 = vmatprep.subr.mxu0 0.0
    %1609 = vmatpush1.msra.mxu0 0.0
    %1610 = vmatprep.subr.mxu0 0.0
    %1611 = vmatpush1.msra.mxu0 0.0
    %1612 = vmatprep.subr.mxu0 0.0
    %1613 = vmatpush1.msra.mxu0 0.0
    %1614 = vmatprep.subr.mxu0 0.0
    %1615 = vmatpush1.msra.mxu0 0.0
    %1616 = vmatprep.subr.mxu0 0.0
    %1617 = vmatpush1.msra.mxu0 0.0
    %1618 = vmatprep.subr.mxu0 0.0
    %1619 = vmatpush1.msra.mxu0 0.0
    %1620 = vmatprep.subr.mxu0 0.0
    %1621 = vmatpush1.msra.mxu0 0.0
    %1622 = vmatprep.subr.mxu0 0.0
    %1623 = vmatpush1.msra.mxu0 0.0
    %1624 = vmatprep.subr.mxu0 0.0
    %1625 = vmatpush1.msra.mxu0 0.0
    %1626 = vmatprep.subr.mxu0 0.0
    %1627 = vmatpush1.msra.mxu0 0.0
    %1628 = vmatprep.subr.mxu0 0.0
    %1629 = vmatpush1.msra.mxu0 0.0
    %1630 = vmatprep.subr.mxu0 0.0
    %1631 = vmatpush1.msra.mxu0 0.0
    %1632 = vmatprep.subr.mxu0 0.0
    %1633 = vmatpush1.msra.mxu0 0.0
    %1634 = vmatprep.subr.mxu0 0.0
    %1635 = vmatpush1.msra.mxu0 0.0
    %1636 = vmatprep.subr.mxu0 0.0
    %1637 = vmatpush1.msra.mxu0 0.0
    %1638 = vmatprep.mubr.f32.mxu0 0.0
    %1639 = vmatmul.mubr.f32.gmra.mrb[0].mxu0 %v1572
    %v1640 = vpop.f32.mrb[0].mxu0
    %v1641 = vadd.f32 0.0, %v1640
    %v1642 = vpop.f32.mrb[0].mxu0
    %1643 = vdwg.mxu0
    %1645 = vrot.lane.b32.xlu0 %v1641, 1
    %v1646 = vpop.permute.xlu0 %1645
    %1648 = vrot.lane.b32.xlu0 %v1641, 2
    %v1649 = vpop.permute.xlu0 %1648
    %1651 = vrot.lane.b32.xlu0 %v1641, 3
    %v1652 = vpop.permute.xlu0 %1651
    %1654 = vrot.lane.b32.xlu0 %v1641, 4
    %v1655 = vpop.permute.xlu0 %1654
    %1657 = vrot.lane.b32.xlu0 %v1641, 5
    %v1658 = vpop.permute.xlu0 %1657
    %1660 = vrot.lane.b32.xlu0 %v1641, 6
    %v1661 = vpop.permute.xlu0 %1660
    %1663 = vrot.lane.b32.xlu0 %v1641, 7
    %v1664 = vpop.permute.xlu0 %1663
    %1666 = vrot.lane.b32.xlu0 %v1641, 8
    %v1667 = vpop.permute.xlu0 %1666
    %v1669 = vsel %vm113, %v1641, %v1646
    %v1670 = vsel %vm762, %v1669, %v1646
    %v1671 = vsel %vm764, %v1670, %v1649
    %v1672 = vsel %vm766, %v1671, %v1649
    %v1673 = vsel %vm768, %v1672, %v1652
    %v1674 = vsel %vm770, %v1673, %v1652
    %v1675 = vsel %vm772, %v1674, %v1655
    %v1676 = vsel %vm774, %v1675, %v1655
    %v1677 = vsel %vm776, %v1676, %v1658
    %v1678 = vsel %vm778, %v1677, %v1658
    %v1679 = vsel %vm780, %v1678, %v1661
    %v1680 = vsel %vm782, %v1679, %v1661
    %v1681 = vsel %vm784, %v1680, %v1664
    %v1682 = vsel %vm786, %v1681, %v1664
    %v1683 = vsel %vm788, %v1682, %v1667
    %v1684 = vadd.f32 %v1683, %v1193
    %1685 = vset.pattern.permute.xlu0 28
    %1686 = vperm.xlu0 %1685, %v96
    %v1687 = vpop.permute.xlu0 %1686
    %v1689 = vmul.f32 %v1684, %v1687
    %1690 = vset.pattern.permute.xlu0 29
    %1691 = vperm.xlu0 %1690, %v96
    %v1692 = vpop.permute.xlu0 %1691
    %v1694 = vadd.f32 %v1689, %v1692
    %v1695 = vmax.f32 %v1694, 0.0
    %1697 = vrot.lane.b32.xlu0 %v1695, 1
    %v1698 = vpop.permute.xlu0 %1697
    %v1700 = vsel %vm113, 0.0, %v1698
    %1701 = vrot.lane.b32.xlu0 %v1695, 127
    %v1702 = vpop.permute.xlu0 %1701
    %v1704 = vsel %vm788, %v1702, 0.0
    %v1705 = vsel %vm824, 0.0, %v1700
    %v1706 = vsel %vm828, 0.0, %v1704
    %s1707 = scalar_lea.vmem [#allocation5], 56
    %v1708 = vld [vmem:[%s1707] sm:$0xff]
    %v1710 = vsel %vm143, %v1708, 0
    %1712 = vmatprep.subr.mxu0 0.0
    %1713 = vmatpush1.msra.mxu0 %v1705
    %1714 = vmatprep.subr.mxu0 0.0
    %1715 = vmatpush1.msra.mxu0 %v1695
    %1716 = vmatprep.subr.mxu0 0.0
    %1717 = vmatpush1.msra.mxu0 %v1706
    %1718 = vmatprep.subr.mxu0 0.0
    %1719 = vmatpush1.msra.mxu0 0.0
    %1720 = vmatprep.subr.mxu0 0.0
    %1721 = vmatpush1.msra.mxu0 0.0
    %1722 = vmatprep.subr.mxu0 0.0
    %1723 = vmatpush1.msra.mxu0 0.0
    %1724 = vmatprep.subr.mxu0 0.0
    %1725 = vmatpush1.msra.mxu0 0.0
    %1726 = vmatprep.subr.mxu0 0.0
    %1727 = vmatpush1.msra.mxu0 0.0
    %1728 = vmatprep.subr.mxu0 0.0
    %1729 = vmatpush1.msra.mxu0 0.0
    %1730 = vmatprep.subr.mxu0 0.0
    %1731 = vmatpush1.msra.mxu0 0.0
    %1732 = vmatprep.subr.mxu0 0.0
    %1733 = vmatpush1.msra.mxu0 0.0
    %1734 = vmatprep.subr.mxu0 0.0
    %1735 = vmatpush1.msra.mxu0 0.0
    %1736 = vmatprep.subr.mxu0 0.0
    %1737 = vmatpush1.msra.mxu0 0.0
    %1738 = vmatprep.subr.mxu0 0.0
    %1739 = vmatpush1.msra.mxu0 0.0
    %1740 = vmatprep.subr.mxu0 0.0
    %1741 = vmatpush1.msra.mxu0 0.0
    %1742 = vmatprep.subr.mxu0 0.0
    %1743 = vmatpush1.msra.mxu0 0.0
    %1744 = vmatprep.subr.mxu0 0.0
    %1745 = vmatpush1.msra.mxu0 0.0
    %1746 = vmatprep.subr.mxu0 0.0
    %1747 = vmatpush1.msra.mxu0 0.0
    %1748 = vmatprep.subr.mxu0 0.0
    %1749 = vmatpush1.msra.mxu0 0.0
    %1750 = vmatprep.subr.mxu0 0.0
    %1751 = vmatpush1.msra.mxu0 0.0
    %1752 = vmatprep.subr.mxu0 0.0
    %1753 = vmatpush1.msra.mxu0 0.0
    %1754 = vmatprep.subr.mxu0 0.0
    %1755 = vmatpush1.msra.mxu0 0.0
    %1756 = vmatprep.subr.mxu0 0.0
    %1757 = vmatpush1.msra.mxu0 0.0
    %1758 = vmatprep.subr.mxu0 0.0
    %1759 = vmatpush1.msra.mxu0 0.0
    %1760 = vmatprep.subr.mxu0 0.0
    %1761 = vmatpush1.msra.mxu0 0.0
    %1762 = vmatprep.subr.mxu0 0.0
    %1763 = vmatpush1.msra.mxu0 0.0
    %1764 = vmatprep.subr.mxu0 0.0
    %1765 = vmatpush1.msra.mxu0 0.0
    %1766 = vmatprep.subr.mxu0 0.0
    %1767 = vmatpush1.msra.mxu0 0.0
    %1768 = vmatprep.subr.mxu0 0.0
    %1769 = vmatpush1.msra.mxu0 0.0
    %1770 = vmatprep.subr.mxu0 0.0
    %1771 = vmatpush1.msra.mxu0 0.0
    %1772 = vmatprep.subr.mxu0 0.0
    %1773 = vmatpush1.msra.mxu0 0.0
    %1774 = vmatprep.subr.mxu0 0.0
    %1775 = vmatpush1.msra.mxu0 0.0
    %1776 = vmatprep.mubr.f32.mxu0 0.0
    %1777 = vmatmul.mubr.f32.gmra.mrb[0].mxu0 %v1710
    %v1778 = vpop.f32.mrb[0].mxu0
    %v1779 = vadd.f32 0.0, %v1778
    %v1780 = vpop.f32.mrb[0].mxu0
    %1781 = vdwg.mxu0
    %1782 = vset.pattern.permute.xlu0 30
    %1783 = vperm.xlu0 %1782, %v96
    %v1784 = vpop.permute.xlu0 %1783
    %v1786 = vmul.f32 %v1779, %v1784
    %1787 = vset.pattern.permute.xlu0 31
    %1788 = vperm.xlu0 %1787, %v96
    %v1789 = vpop.permute.xlu0 %1788
    %v1791 = vadd.f32 %v1786, %v1789
    %v1792 = vmax.f32 %v1791, 0.0
    %1794 = vrot.lane.b32.xlu0 %v1792, 1
    %v1795 = vpop.permute.xlu0 %1794
    %v1797 = vsel %vm113, 0.0, %v1795
    %1798 = vrot.lane.b32.xlu0 %v1792, 127
    %v1799 = vpop.permute.xlu0 %1798
    %v1801 = vsel %vm788, %v1799, 0.0
    %v1802 = vsel %vm824, 0.0, %v1797
    %v1803 = vsel %vm828, 0.0, %v1801
    %s1804 = scalar_lea.vmem [#allocation7], 56
    %v1805 = vld [vmem:[%s1804] sm:$0xff]
    %v1807 = vsel %vm240, %v1805, 0
    %1809 = vmatprep.subr.mxu0 0.0
    %1810 = vmatpush1.msra.mxu0 %v1802
    %1811 = vmatprep.subr.mxu0 0.0
    %1812 = vmatpush1.msra.mxu0 %v1792
    %1813 = vmatprep.subr.mxu0 0.0
    %1814 = vmatpush1.msra.mxu0 %v1803
    %1815 = vmatprep.subr.mxu0 0.0
    %1816 = vmatpush1.msra.mxu0 %v1684
    %1817 = vmatprep.subr.mxu0 0.0
    %1818 = vmatpush1.msra.mxu0 0.0
    %1819 = vmatprep.subr.mxu0 0.0
    %1820 = vmatpush1.msra.mxu0 0.0
    %1821 = vmatprep.subr.mxu0 0.0
    %1822 = vmatpush1.msra.mxu0 0.0
    %1823 = vmatprep.subr.mxu0 0.0
    %1824 = vmatpush1.msra.mxu0 0.0
    %1825 = vmatprep.subr.mxu0 0.0
    %1826 = vmatpush1.msra.mxu0 0.0
    %1827 = vmatprep.subr.mxu0 0.0
    %1828 = vmatpush1.msra.mxu0 0.0
    %1829 = vmatprep.subr.mxu0 0.0
    %1830 = vmatpush1.msra.mxu0 0.0
    %1831 = vmatprep.subr.mxu0 0.0
    %1832 = vmatpush1.msra.mxu0 0.0
    %1833 = vmatprep.subr.mxu0 0.0
    %1834 = vmatpush1.msra.mxu0 0.0
    %1835 = vmatprep.subr.mxu0 0.0
    %1836 = vmatpush1.msra.mxu0 0.0
    %1837 = vmatprep.subr.mxu0 0.0
    %1838 = vmatpush1.msra.mxu0 0.0
    %1839 = vmatprep.subr.mxu0 0.0
    %1840 = vmatpush1.msra.mxu0 0.0
    %1841 = vmatprep.subr.mxu0 0.0
    %1842 = vmatpush1.msra.mxu0 0.0
    %1843 = vmatprep.subr.mxu0 0.0
    %1844 = vmatpush1.msra.mxu0 0.0
    %1845 = vmatprep.subr.mxu0 0.0
    %1846 = vmatpush1.msra.mxu0 0.0
    %1847 = vmatprep.subr.mxu0 0.0
    %1848 = vmatpush1.msra.mxu0 0.0
    %1849 = vmatprep.subr.mxu0 0.0
    %1850 = vmatpush1.msra.mxu0 0.0
    %1851 = vmatprep.subr.mxu0 0.0
    %1852 = vmatpush1.msra.mxu0 0.0
    %1853 = vmatprep.subr.mxu0 0.0
    %1854 = vmatpush1.msra.mxu0 0.0
    %1855 = vmatprep.subr.mxu0 0.0
    %1856 = vmatpush1.msra.mxu0 0.0
    %1857 = vmatprep.subr.mxu0 0.0
    %1858 = vmatpush1.msra.mxu0 0.0
    %1859 = vmatprep.subr.mxu0 0.0
    %1860 = vmatpush1.msra.mxu0 0.0
    %1861 = vmatprep.subr.mxu0 0.0
    %1862 = vmatpush1.msra.mxu0 0.0
    %1863 = vmatprep.subr.mxu0 0.0
    %1864 = vmatpush1.msra.mxu0 0.0
    %1865 = vmatprep.subr.mxu0 0.0
    %1866 = vmatpush1.msra.mxu0 0.0
    %1867 = vmatprep.subr.mxu0 0.0
    %1868 = vmatpush1.msra.mxu0 0.0
    %1869 = vmatprep.subr.mxu0 0.0
    %1870 = vmatpush1.msra.mxu0 0.0
    %1871 = vmatprep.subr.mxu0 0.0
    %1872 = vmatpush1.msra.mxu0 0.0
    %1873 = vmatprep.mubr.f32.mxu0 0.0
    %1874 = vmatmul.mubr.f32.gmra.mrb[0].mxu0 %v1807
    %v1875 = vpop.f32.mrb[0].mxu0
    %v1876 = vadd.f32 0.0, %v1875
    %v1877 = vpop.f32.mrb[0].mxu0
    %1878 = vdwg.mxu0
    %1880 = vrot.lane.b32.xlu0 %v1876, 1
    %v1881 = vpop.permute.xlu0 %1880
    %1883 = vrot.lane.b32.xlu0 %v1876, 2
    %v1884 = vpop.permute.xlu0 %1883
    %1886 = vrot.lane.b32.xlu0 %v1876, 3
    %v1887 = vpop.permute.xlu0 %1886
    %1889 = vrot.lane.b32.xlu0 %v1876, 4
    %v1890 = vpop.permute.xlu0 %1889
    %1892 = vrot.lane.b32.xlu0 %v1876, 5
    %v1893 = vpop.permute.xlu0 %1892
    %1895 = vrot.lane.b32.xlu0 %v1876, 6
    %v1896 = vpop.permute.xlu0 %1895
    %1898 = vrot.lane.b32.xlu0 %v1876, 7
    %v1899 = vpop.permute.xlu0 %1898
    %1901 = vrot.lane.b32.xlu0 %v1876, 8
    %v1902 = vpop.permute.xlu0 %1901
    %v1904 = vsel %vm113, %v1876, %v1881
    %v1905 = vsel %vm762, %v1904, %v1881
    %v1906 = vsel %vm764, %v1905, %v1884
    %v1907 = vsel %vm766, %v1906, %v1884
    %v1908 = vsel %vm768, %v1907, %v1887
    %v1909 = vsel %vm770, %v1908, %v1887
    %v1910 = vsel %vm772, %v1909, %v1890
    %v1911 = vsel %vm774, %v1910, %v1890
    %v1912 = vsel %vm776, %v1911, %v1893
    %v1913 = vsel %vm778, %v1912, %v1893
    %v1914 = vsel %vm780, %v1913, %v1896
    %v1915 = vsel %vm782, %v1914, %v1896
    %v1916 = vsel %vm784, %v1915, %v1899
    %v1917 = vsel %vm786, %v1916, %v1899
    %v1918 = vsel %vm788, %v1917, %v1902
    %1919 = vrot.lane.b32.xlu0 %v1876, 120
    %v1920 = vpop.permute.xlu0 %1919
    %1922 = vrot.lane.b32.xlu0 %v1876, 121
    %v1923 = vpop.permute.xlu0 %1922
    %1925 = vrot.lane.b32.xlu0 %v1876, 122
    %v1926 = vpop.permute.xlu0 %1925
    %1928 = vrot.lane.b32.xlu0 %v1876, 123
    %v1929 = vpop.permute.xlu0 %1928
    %1931 = vrot.lane.b32.xlu0 %v1876, 124
    %v1932 = vpop.permute.xlu0 %1931
    %1934 = vrot.lane.b32.xlu0 %v1876, 125
    %v1935 = vpop.permute.xlu0 %1934
    %1937 = vrot.lane.b32.xlu0 %v1876, 126
    %v1938 = vpop.permute.xlu0 %1937
    %1940 = vrot.lane.b32.xlu0 %v1876, 127
    %v1941 = vpop.permute.xlu0 %1940
    %v1943 = vsel %vm113, %v1920, %v1923
    %v1944 = vsel %vm762, %v1943, %v1923
    %v1945 = vsel %vm764, %v1944, %v1926
    %v1946 = vsel %vm766, %v1945, %v1926
    %v1947 = vsel %vm768, %v1946, %v1929
    %v1948 = vsel %vm770, %v1947, %v1929
    %v1949 = vsel %vm772, %v1948, %v1932
    %v1950 = vsel %vm774, %v1949, %v1932
    %v1951 = vsel %vm776, %v1950, %v1935
    %v1952 = vsel %vm778, %v1951, %v1935
    %v1953 = vsel %vm780, %v1952, %v1938
    %v1954 = vsel %vm782, %v1953, %v1938
    %v1955 = vsel %vm784, %v1954, %v1941
    %v1956 = vsel %vm786, %v1955, %v1941
    %v1957 = vsel %vm788, %v1956, %v1876
    %1959 = vrot.lane.b32.xlu0 %v1957, 16
    %v1960 = vpop.permute.xlu0 %1959
    %v1962 = vsel %vm94, %v1918, %v1960
    %1963 = vset.pattern.permute.xlu0 36
    %1964 = vperm.xlu0 %1963, %v96
    %v1965 = vpop.permute.xlu0 %1964
    %v1967 = vmul.f32 %v1962, %v1965
    %1968 = vset.pattern.permute.xlu0 37
    %1969 = vperm.xlu0 %1968, %v96
    %v1970 = vpop.permute.xlu0 %1969
    %v1972 = vadd.f32 %v1967, %v1970
    %v1973 = vmax.f32 %v1972, 0.0
    %v1974 = vld [vmem:[#allocation8] sm:$0xff]
    %1975 = vset.pattern.permute.xlu0 38
    %1976 = vperm.xlu0 %1975, %v96
    %v1977 = vpop.permute.xlu0 %1976
    %v1980 = vsel %vm774, %v1974, 0
    %1982 = vmatprep.subr.mxu0 0.0
    %1983 = vmatpush1.msra.mxu0 %v1973
    %1984 = vmatprep.subr.mxu0 0.0
    %1985 = vmatpush1.msra.mxu0 0.0
    %1986 = vmatprep.subr.mxu0 0.0
    %1987 = vmatpush1.msra.mxu0 0.0
    %1988 = vmatprep.subr.mxu0 0.0
    %1989 = vmatpush1.msra.mxu0 0.0
    %1990 = vmatprep.subr.mxu0 0.0
    %1991 = vmatpush1.msra.mxu0 0.0
    %1992 = vmatprep.subr.mxu0 0.0
    %1993 = vmatpush1.msra.mxu0 0.0
    %1994 = vmatprep.subr.mxu0 0.0
    %1995 = vmatpush1.msra.mxu0 0.0
    %1996 = vmatprep.subr.mxu0 0.0
    %1997 = vmatpush1.msra.mxu0 0.0
    %1998 = vmatprep.subr.mxu0 0.0
    %1999 = vmatpush1.msra.mxu0 0.0
    %2000 = vmatprep.subr.mxu0 0.0
    %2001 = vmatpush1.msra.mxu0 0.0
    %2002 = vmatprep.subr.mxu0 0.0
    %2003 = vmatpush1.msra.mxu0 0.0
    %2004 = vmatprep.subr.mxu0 0.0
    %2005 = vmatpush1.msra.mxu0 0.0
    %2006 = vmatprep.subr.mxu0 0.0
    %2007 = vmatpush1.msra.mxu0 0.0
    %2008 = vmatprep.subr.mxu0 0.0
    %2009 = vmatpush1.msra.mxu0 0.0
    %2010 = vmatprep.subr.mxu0 0.0
    %2011 = vmatpush1.msra.mxu0 0.0
    %2012 = vmatprep.subr.mxu0 0.0
    %2013 = vmatpush1.msra.mxu0 0.0
    %2014 = vmatprep.subr.mxu0 0.0
    %2015 = vmatpush1.msra.mxu0 0.0
    %2016 = vmatprep.subr.mxu0 0.0
    %2017 = vmatpush1.msra.mxu0 0.0
    %2018 = vmatprep.subr.mxu0 0.0
    %2019 = vmatpush1.msra.mxu0 0.0
    %2020 = vmatprep.subr.mxu0 0.0
    %2021 = vmatpush1.msra.mxu0 0.0
    %2022 = vmatprep.subr.mxu0 0.0
    %2023 = vmatpush1.msra.mxu0 0.0
    %2024 = vmatprep.subr.mxu0 0.0
    %2025 = vmatpush1.msra.mxu0 0.0
    %2026 = vmatprep.subr.mxu0 0.0
    %2027 = vmatpush1.msra.mxu0 0.0
    %2028 = vmatprep.subr.mxu0 0.0
    %2029 = vmatpush1.msra.mxu0 0.0
    %2030 = vmatprep.subr.mxu0 0.0
    %2031 = vmatpush1.msra.mxu0 0.0
    %2032 = vmatprep.subr.mxu0 0.0
    %2033 = vmatpush1.msra.mxu0 0.0
    %2034 = vmatprep.subr.mxu0 0.0
    %2035 = vmatpush1.msra.mxu0 0.0
    %2036 = vmatprep.subr.mxu0 0.0
    %2037 = vmatpush1.msra.mxu0 0.0
    %2038 = vmatprep.subr.mxu0 0.0
    %2039 = vmatpush1.msra.mxu0 0.0
    %2040 = vmatprep.subr.mxu0 0.0
    %2041 = vmatpush1.msra.mxu0 0.0
    %2042 = vmatprep.subr.mxu0 0.0
    %2043 = vmatpush1.msra.mxu0 0.0
    %2044 = vmatprep.subr.mxu0 0.0
    %2045 = vmatpush1.msra.mxu0 0.0
    %2046 = vmatprep.mubr.f32.mxu0 0.0
    %2047 = vmatmul.mubr.f32.gmra.mrb[0].mxu0 %v1980
    %v2048 = vpop.f32.mrb[0].mxu0
    %v2049 = vadd.f32 %v1977, %v2048
    %v2050 = vpop.f32.mrb[0].mxu0
    %2051 = vdwg.mxu0
    %2052 = vset.pattern.permute.xlu0 39
    %2053 = vperm.xlu0 %2052, %v96
    %v2054 = vpop.permute.xlu0 %2053
    %v2056 = vmul.f32 %v2049, %v2054
    %2057 = vset.pattern.permute.xlu0 40
    %2058 = vperm.xlu0 %2057, %v96
    %v2059 = vpop.permute.xlu0 %2058
    %v2061 = vadd.f32 %v2056, %v2059
    %v2062 = vmax.f32 %v2061, 0.0
    %s2063 = scalar_lea.vmem [#allocation8], 8
    %v2064 = vld [vmem:[%s2063] sm:$0xff]
    %2065 = vset.pattern.permute.xlu0 41
    %2066 = vperm.xlu0 %2065, %v96
    %v2067 = vpop.permute.xlu0 %2066
    %v2070 = vsel %vm774, %v2064, 0
    %2072 = vmatprep.subr.mxu0 0.0
    %2073 = vmatpush1.msra.mxu0 %v2062
    %2074 = vmatprep.subr.mxu0 0.0
    %2075 = vmatpush1.msra.mxu0 0.0
    %2076 = vmatprep.subr.mxu0 0.0
    %2077 = vmatpush1.msra.mxu0 0.0
    %2078 = vmatprep.subr.mxu0 0.0
    %2079 = vmatpush1.msra.mxu0 0.0
    %2080 = vmatprep.subr.mxu0 0.0
    %2081 = vmatpush1.msra.mxu0 0.0
    %2082 = vmatprep.subr.mxu0 0.0
    %2083 = vmatpush1.msra.mxu0 0.0
    %2084 = vmatprep.subr.mxu0 0.0
    %2085 = vmatpush1.msra.mxu0 0.0
    %2086 = vmatprep.subr.mxu0 0.0
    %2087 = vmatpush1.msra.mxu0 0.0
    %2088 = vmatprep.subr.mxu0 0.0
    %2089 = vmatpush1.msra.mxu0 0.0
    %2090 = vmatprep.subr.mxu0 0.0
    %2091 = vmatpush1.msra.mxu0 0.0
    %2092 = vmatprep.subr.mxu0 0.0
    %2093 = vmatpush1.msra.mxu0 0.0
    %2094 = vmatprep.subr.mxu0 0.0
    %2095 = vmatpush1.msra.mxu0 0.0
    %2096 = vmatprep.subr.mxu0 0.0
    %2097 = vmatpush1.msra.mxu0 0.0
    %2098 = vmatprep.subr.mxu0 0.0
    %2099 = vmatpush1.msra.mxu0 0.0
    %2100 = vmatprep.subr.mxu0 0.0
    %2101 = vmatpush1.msra.mxu0 0.0
    %2102 = vmatprep.subr.mxu0 0.0
    %2103 = vmatpush1.msra.mxu0 0.0
    %2104 = vmatprep.subr.mxu0 0.0
    %2105 = vmatpush1.msra.mxu0 0.0
    %2106 = vmatprep.subr.mxu0 0.0
    %2107 = vmatpush1.msra.mxu0 0.0
    %2108 = vmatprep.subr.mxu0 0.0
    %2109 = vmatpush1.msra.mxu0 0.0
    %2110 = vmatprep.subr.mxu0 0.0
    %2111 = vmatpush1.msra.mxu0 0.0
    %2112 = vmatprep.subr.mxu0 0.0
    %2113 = vmatpush1.msra.mxu0 0.0
    %2114 = vmatprep.subr.mxu0 0.0
    %2115 = vmatpush1.msra.mxu0 0.0
    %2116 = vmatprep.subr.mxu0 0.0
    %2117 = vmatpush1.msra.mxu0 0.0
    %2118 = vmatprep.subr.mxu0 0.0
    %2119 = vmatpush1.msra.mxu0 0.0
    %2120 = vmatprep.subr.mxu0 0.0
    %2121 = vmatpush1.msra.mxu0 0.0
    %2122 = vmatprep.subr.mxu0 0.0
    %2123 = vmatpush1.msra.mxu0 0.0
    %2124 = vmatprep.subr.mxu0 0.0
    %2125 = vmatpush1.msra.mxu0 0.0
    %2126 = vmatprep.subr.mxu0 0.0
    %2127 = vmatpush1.msra.mxu0 0.0
    %2128 = vmatprep.subr.mxu0 0.0
    %2129 = vmatpush1.msra.mxu0 0.0
    %2130 = vmatprep.subr.mxu0 0.0
    %2131 = vmatpush1.msra.mxu0 0.0
    %2132 = vmatprep.subr.mxu0 0.0
    %2133 = vmatpush1.msra.mxu0 0.0
    %2134 = vmatprep.subr.mxu0 0.0
    %2135 = vmatpush1.msra.mxu0 0.0
    %2136 = vmatprep.mubr.f32.mxu0 0.0
    %2137 = vmatmul.mubr.f32.gmra.mrb[0].mxu0 %v2070
    %v2138 = vpop.f32.mrb[0].mxu0
    %v2139 = vadd.f32 %v2067, %v2138
    %v2140 = vpop.f32.mrb[0].mxu0
    %2141 = vdwg.mxu0
    %v2142 = vxor.u32 %v2139, 2147483648
    %v2143 = vmul.f32 %v2142, 1.442695
    %v2144 = vpow.pop %v2143
    %v2145 = vadd.f32 %v2144, 1.0
    %v2146 = vrcp.pop %v2145
    %v2147 = vmul.f32 1.0, %v2146
    %v2148 = vadd.f32 %v2147, 1.0
    %v2149 = vmul.f32 %v2148, %v699
    %2150 = vset.pattern.permute.xlu0 32
    %2151 = vperm.xlu0 %2150, %v96
    %v2152 = vpop.permute.xlu0 %2151
    %v2154 = vmul.f32 %v2149, %v2152
    %2155 = vset.pattern.permute.xlu0 33
    %2156 = vperm.xlu0 %2155, %v96
    %v2157 = vpop.permute.xlu0 %2156
    %v2159 = vadd.f32 %v2154, %v2157
    %v2160 = vmax.f32 %v2159, 0.0
    %2162 = vrot.lane.b32.xlu0 %v2160, 1
    %v2163 = vpop.permute.xlu0 %2162
    %v2165 = vsel %vm113, 0.0, %v2163
    %2166 = vrot.lane.b32.xlu0 %v2160, 127
    %v2167 = vpop.permute.xlu0 %2166
    %v2169 = vsel %vm118, %v2167, 0.0
    %v2170 = vsel %vm136, 0.0, %v2165
    %v2171 = vsel %vm140, 0.0, %v2169
    %s2172 = scalar_lea.vmem [#allocation5], 64
    %v2173 = vld [vmem:[%s2172] sm:$0xff]
    %v2175 = vsel %vm143, %v2173, 0
    %2177 = vmatprep.subr.mxu0 0.0
    %2178 = vmatpush1.msra.mxu0 %v2170
    %2179 = vmatprep.subr.mxu0 0.0
    %2180 = vmatpush1.msra.mxu0 %v2160
    %2181 = vmatprep.subr.mxu0 0.0
    %2182 = vmatpush1.msra.mxu0 %v2171
    %2183 = vmatprep.subr.mxu0 0.0
    %2184 = vmatpush1.msra.mxu0 0.0
    %2185 = vmatprep.subr.mxu0 0.0
    %2186 = vmatpush1.msra.mxu0 0.0
    %2187 = vmatprep.subr.mxu0 0.0
    %2188 = vmatpush1.msra.mxu0 0.0
    %2189 = vmatprep.subr.mxu0 0.0
    %2190 = vmatpush1.msra.mxu0 0.0
    %2191 = vmatprep.subr.mxu0 0.0
    %2192 = vmatpush1.msra.mxu0 0.0
    %2193 = vmatprep.subr.mxu0 0.0
    %2194 = vmatpush1.msra.mxu0 0.0
    %2195 = vmatprep.subr.mxu0 0.0
    %2196 = vmatpush1.msra.mxu0 0.0
    %2197 = vmatprep.subr.mxu0 0.0
    %2198 = vmatpush1.msra.mxu0 0.0
    %2199 = vmatprep.subr.mxu0 0.0
    %2200 = vmatpush1.msra.mxu0 0.0
    %2201 = vmatprep.subr.mxu0 0.0
    %2202 = vmatpush1.msra.mxu0 0.0
    %2203 = vmatprep.subr.mxu0 0.0
    %2204 = vmatpush1.msra.mxu0 0.0
    %2205 = vmatprep.subr.mxu0 0.0
    %2206 = vmatpush1.msra.mxu0 0.0
    %2207 = vmatprep.subr.mxu0 0.0
    %2208 = vmatpush1.msra.mxu0 0.0
    %2209 = vmatprep.subr.mxu0 0.0
    %2210 = vmatpush1.msra.mxu0 0.0
    %2211 = vmatprep.subr.mxu0 0.0
    %2212 = vmatpush1.msra.mxu0 0.0
    %2213 = vmatprep.subr.mxu0 0.0
    %2214 = vmatpush1.msra.mxu0 0.0
    %2215 = vmatprep.subr.mxu0 0.0
    %2216 = vmatpush1.msra.mxu0 0.0
    %2217 = vmatprep.subr.mxu0 0.0
    %2218 = vmatpush1.msra.mxu0 0.0
    %2219 = vmatprep.subr.mxu0 0.0
    %2220 = vmatpush1.msra.mxu0 0.0
    %2221 = vmatprep.subr.mxu0 0.0
    %2222 = vmatpush1.msra.mxu0 0.0
    %2223 = vmatprep.subr.mxu0 0.0
    %2224 = vmatpush1.msra.mxu0 0.0
    %2225 = vmatprep.subr.mxu0 0.0
    %2226 = vmatpush1.msra.mxu0 0.0
    %2227 = vmatprep.subr.mxu0 0.0
    %2228 = vmatpush1.msra.mxu0 0.0
    %2229 = vmatprep.subr.mxu0 0.0
    %2230 = vmatpush1.msra.mxu0 0.0
    %2231 = vmatprep.subr.mxu0 0.0
    %2232 = vmatpush1.msra.mxu0 0.0
    %2233 = vmatprep.subr.mxu0 0.0
    %2234 = vmatpush1.msra.mxu0 0.0
    %2235 = vmatprep.subr.mxu0 0.0
    %2236 = vmatpush1.msra.mxu0 0.0
    %2237 = vmatprep.subr.mxu0 0.0
    %2238 = vmatpush1.msra.mxu0 0.0
    %2239 = vmatprep.subr.mxu0 0.0
    %2240 = vmatpush1.msra.mxu0 0.0
    %2241 = vmatprep.mubr.f32.mxu0 0.0
    %2242 = vmatmul.mubr.f32.gmra.mrb[0].mxu0 %v2175
    %v2243 = vpop.f32.mrb[0].mxu0
    %v2244 = vadd.f32 0.0, %v2243
    %v2245 = vpop.f32.mrb[0].mxu0
    %2246 = vdwg.mxu0
    %2247 = vset.pattern.permute.xlu0 34
    %2248 = vperm.xlu0 %2247, %v96
    %v2249 = vpop.permute.xlu0 %2248
    %v2251 = vmul.f32 %v2244, %v2249
    %2252 = vset.pattern.permute.xlu0 35
    %2253 = vperm.xlu0 %2252, %v96
    %v2254 = vpop.permute.xlu0 %2253
    %v2256 = vadd.f32 %v2251, %v2254
    %v2257 = vmax.f32 %v2256, 0.0
    %2259 = vrot.lane.b32.xlu0 %v2257, 1
    %v2260 = vpop.permute.xlu0 %2259
    %v2262 = vsel %vm113, 0.0, %v2260
    %2263 = vrot.lane.b32.xlu0 %v2257, 127
    %v2264 = vpop.permute.xlu0 %2263
    %v2266 = vsel %vm118, %v2264, 0.0
    %v2267 = vsel %vm136, 0.0, %v2262
    %v2268 = vsel %vm140, 0.0, %v2266
    %s2269 = scalar_lea.vmem [#allocation7], 64
    %v2270 = vld [vmem:[%s2269] sm:$0xff]
    %v2272 = vsel %vm240, %v2270, 0
    %2274 = vmatprep.subr.mxu0 0.0
    %2275 = vmatpush1.msra.mxu0 %v2267
    %2276 = vmatprep.subr.mxu0 0.0
    %2277 = vmatpush1.msra.mxu0 %v2257
    %2278 = vmatprep.subr.mxu0 0.0
    %2279 = vmatpush1.msra.mxu0 %v2268
    %2280 = vmatprep.subr.mxu0 0.0
    %2281 = vmatpush1.msra.mxu0 %v2149
    %2282 = vmatprep.subr.mxu0 0.0
    %2283 = vmatpush1.msra.mxu0 0.0
    %2284 = vmatprep.subr.mxu0 0.0
    %2285 = vmatpush1.msra.mxu0 0.0
    %2286 = vmatprep.subr.mxu0 0.0
    %2287 = vmatpush1.msra.mxu0 0.0
    %2288 = vmatprep.subr.mxu0 0.0
    %2289 = vmatpush1.msra.mxu0 0.0
    %2290 = vmatprep.subr.mxu0 0.0
    %2291 = vmatpush1.msra.mxu0 0.0
    %2292 = vmatprep.subr.mxu0 0.0
    %2293 = vmatpush1.msra.mxu0 0.0
    %2294 = vmatprep.subr.mxu0 0.0
    %2295 = vmatpush1.msra.mxu0 0.0
    %2296 = vmatprep.subr.mxu0 0.0
    %2297 = vmatpush1.msra.mxu0 0.0
    %2298 = vmatprep.subr.mxu0 0.0
    %2299 = vmatpush1.msra.mxu0 0.0
    %2300 = vmatprep.subr.mxu0 0.0
    %2301 = vmatpush1.msra.mxu0 0.0
    %2302 = vmatprep.subr.mxu0 0.0
    %2303 = vmatpush1.msra.mxu0 0.0
    %2304 = vmatprep.subr.mxu0 0.0
    %2305 = vmatpush1.msra.mxu0 0.0
    %2306 = vmatprep.subr.mxu0 0.0
    %2307 = vmatpush1.msra.mxu0 0.0
    %2308 = vmatprep.subr.mxu0 0.0
    %2309 = vmatpush1.msra.mxu0 0.0
    %2310 = vmatprep.subr.mxu0 0.0
    %2311 = vmatpush1.msra.mxu0 0.0
    %2312 = vmatprep.subr.mxu0 0.0
    %2313 = vmatpush1.msra.mxu0 0.0
    %2314 = vmatprep.subr.mxu0 0.0
    %2315 = vmatpush1.msra.mxu0 0.0
    %2316 = vmatprep.subr.mxu0 0.0
    %2317 = vmatpush1.msra.mxu0 0.0
    %2318 = vmatprep.subr.mxu0 0.0
    %2319 = vmatpush1.msra.mxu0 0.0
    %2320 = vmatprep.subr.mxu0 0.0
    %2321 = vmatpush1.msra.mxu0 0.0
    %2322 = vmatprep.subr.mxu0 0.0
    %2323 = vmatpush1.msra.mxu0 0.0
    %2324 = vmatprep.subr.mxu0 0.0
    %2325 = vmatpush1.msra.mxu0 0.0
    %2326 = vmatprep.subr.mxu0 0.0
    %2327 = vmatpush1.msra.mxu0 0.0
    %2328 = vmatprep.subr.mxu0 0.0
    %2329 = vmatpush1.msra.mxu0 0.0
    %2330 = vmatprep.subr.mxu0 0.0
    %2331 = vmatpush1.msra.mxu0 0.0
    %2332 = vmatprep.subr.mxu0 0.0
    %2333 = vmatpush1.msra.mxu0 0.0
    %2334 = vmatprep.subr.mxu0 0.0
    %2335 = vmatpush1.msra.mxu0 0.0
    %2336 = vmatprep.subr.mxu0 0.0
    %2337 = vmatpush1.msra.mxu0 0.0
    %2338 = vmatprep.mubr.f32.mxu0 0.0
    %2339 = vmatmul.mubr.f32.gmra.mrb[0].mxu0 %v2272
    %v2340 = vpop.f32.mrb[0].mxu0
    %v2341 = vadd.f32 0.0, %v2340
    %v2342 = vpop.f32.mrb[0].mxu0
    %2343 = vdwg.mxu0
    %2344 = vst.msk [vmem:[#allocation11] sm:$0xff] %vm94, %v2341
    %2346 = vrot.lane.b32.xlu0 %v2341, 112
    %v2347 = vpop.permute.xlu0 %2346
    %s2349 = scalar_lea.vmem [#allocation11], 8
    %2350 = vst.msk [vmem:[%s2349] sm:$0xff] %vm94, %v2347
    // Predicated region
    $region42: #{attention_module2.1} parent=1 // pred_check
      _
    $region43: #{attention_module2.1} parent=1 // pred_check_branch
      %2352 = sbr.rel (0) target = $region45
    $region44: #{attention_module2.1} parent=1 // pred_region
      %s2354 = ssub.s32 256, 256
      %2355 = vsyncadd [#allocation4], %s2354
      %s2356 = sshll.u32 [#allocation11], 4
      %s2357 = int_to_ptr.vmem [resolvable:$true] %s2356
      %2362 = dma.vmem_to_hbm [thread:$0]  %s2357, 256, %s5, [#allocation4], 128, 128, 8
    $region45: #{attention_module2.1} parent=1 // pred_fallthru
      _
    // Predicated region
    $region46: #{attention_module2.1} parent=1 // pred_check
      _
    $region47: #{attention_module2.1} parent=1 // pred_check_branch
      %2364 = sbr.rel (0) target = $region49
    $region48: #{attention_module2.1} parent=1 // pred_region
      %2365 = dma.done [#allocation4], 256
    $region49: #{attention_module2.1} parent=1 // pred_fallthru
      _
    %2366 = vsyncpa [#allocation3], 1
    %2367 = vsyncpa [#allocation6], 1
    %2368 = vsyncpa [#allocation9], 1
    %2369 = vsyncpa [#allocation4], 1

</llo_original>
